<compile_context>
chip_gen: v6e
topology: v6e:2x2x1
jax: 0.10.0
libtpu: 0.0.40
codegen_flags: <defaults>
</compile_context>

<pallas_src>
import functools

import numpy as np
import jax
import jax.numpy as jnp
from jax import lax
from jax.experimental import pallas as pl
from jax.experimental.pallas import tpu as pltpu

EPS = 1e-5
# 3x3 taps in weight-storage order: k = (dy+1)*3 + (dx+1)
TAPS = tuple((dy, dx) for dy in (-1, 0, 1) for dx in (-1, 0, 1))


# ----------------------------- Pallas kernel --------------------------------
def _decoder_block_kernel(x_ref, w1_ref, g1_ref, b1_ref,
                          w2_ref, g2_ref, b2_ref, out_ref, *,
                          n_img, h, w, c_out):
    p = n_img * h * w
    inv_p = 1.0 / float(p)
    fw, fh = float(w), float(h)

    # ---- boundary masks synthesized in-kernel from a lane iota (no HBM in) --
    lane = lax.broadcasted_iota(jnp.int32, (1, p), 1).astype(jnp.float32)
    row_all = jnp.floor(lane / fw)                       # global row id (exact)
    col = lane - row_all * fw                            # column within image
    row = row_all - jnp.floor(lane / (fw * fh)) * fh     # row within image
    m_l = col >= 1.0            # dx = -1 neighbour is inside the image
    m_r = col <= fw - 2.0       # dx = +1
    m_u = row >= 1.0            # dy = -1
    m_d = row <= fh - 2.0       # dy = +1

    row_mask = {-1: m_u.astype(jnp.float32), 0: None, 1: m_d.astype(jnp.float32)}
    col_mask = {-1: m_l.astype(jnp.float32), 0: None, 1: m_r.astype(jnp.float32)}
    tap_masks = []
    for dy, dx in TAPS:
        rm, cm = row_mask[dy], col_mask[dx]
        if rm is None and cm is None:
            tap_masks.append(None)          # center tap: never masked
        elif rm is None:
            tap_masks.append(cm)
        elif cm is None:
            tap_masks.append(rm)
        else:
            tap_masks.append(rm * cm)       # corner taps (built once, reused)

    def conv3x3(act, w_ref):
        # 9 per-tap matmuls accumulated in f32 (no im2col materialization).
        # Masking the (C_dst, P) partial commutes with the channel contraction
        # because the mask is a per-lane scalar; rolled-in wrap lanes are
        # finite activations, so 0*finite stays 0.
        acc = jnp.dot(w_ref[4], act.astype(jnp.bfloat16),
                      preferred_element_type=jnp.float32)
        for k, (dy, dx) in enumerate(TAPS):
            if dy == 0 and dx == 0:
                continue
            shift = (-(dy * w + dx)) % p      # out[p] = act[p + dy*w + dx]
            win = pltpu.roll(act, shift, axis=1).astype(jnp.bfloat16)
            part = jnp.dot(w_ref[k], win, preferred_element_type=jnp.float32)
            acc = acc + part * tap_masks[k]
        return acc

    def bn_relu(v, g_ref, b_ref):
        # single-pass batch stats (biased var); gamma*rsqrt folded into scale
        s = jnp.sum(v, axis=1, keepdims=True)
        ss = jnp.sum(v * v, axis=1, keepdims=True)
        mean = s * inv_p
        var = ss * inv_p - mean * mean
        scale = g_ref[...] * lax.rsqrt(var + EPS)
        shift = b_ref[...] - mean * scale
        return jnp.maximum(v * scale + shift, 0.0)

    # conv1 + BN + ReLU   (conv bias omitted: exact no-op under batch-stat BN)
    h1 = bn_relu(conv3x3(x_ref[...], w1_ref), g1_ref, b1_ref)
    # conv2 + BN + ReLU
    y = bn_relu(conv3x3(h1, w2_ref), g2_ref, b2_ref)

    # ---- bilinear x2 upsample (align_corners=False), separable shift-lerps --
    # Edge clamp via the same masks; the circular-wrap lanes of each roll are
    # exactly the masked-off lanes, so the result equals an edge clamp.
    nb_u = jnp.where(m_u, pltpu.roll(y, w, axis=1), y)            # row above
    nb_d = jnp.where(m_d, pltpu.roll(y, (-w) % p, axis=1), y)     # row below
    for a, uy in enumerate((0.75 * y + 0.25 * nb_u,               # a=0 -> 2h
                            0.75 * y + 0.25 * nb_d)):             # a=1 -> 2h+1
        nb_l = jnp.where(m_l, pltpu.roll(uy, 1, axis=1), uy)          # col-1
        nb_r = jnp.where(m_r, pltpu.roll(uy, (-1) % p, axis=1), uy)   # col+1
        out_ref[(2 * a + 0) * c_out:(2 * a + 1) * c_out, :] = (
            0.75 * uy + 0.25 * nb_l)
        out_ref[(2 * a + 1) * c_out:(2 * a + 2) * c_out, :] = (
            0.75 * uy + 0.25 * nb_r)


# ------------------------------ host-side glue -------------------------------
def make_bilinear_matrix_1d(n):
    """1-D x2 bilinear interpolation matrix, PyTorch align_corners=False
    (reference path only)."""
    m = np.zeros((2 * n, n), np.float32)
    for i in range(2 * n):
        src = max((i + 0.5) / 2.0 - 0.5, 0.0)
        lo = min(int(np.floor(src)), n - 1)
        hi = min(lo + 1, n - 1)
        frac = src - lo
        m[i, lo] += 1.0 - frac
        m[i, hi] += frac
    return m


def init_params(key, c_in, c_out, h, w):
    c_mid = c_in // 4
    k1, k2, k3, k4, k5, k6, k7, k8 = jax.random.split(key, 8)
    fan1, fan2 = c_in * 9, c_mid * 9
    return dict(
        # conv weights stored as (ky*3+kx, C_in, C_out)
        w1=jax.random.uniform(k1, (9, c_in, c_mid), jnp.float32, -1, 1) / np.sqrt(fan1),
        bc1=jax.random.uniform(k2, (1, c_mid), jnp.float32, -1, 1) / np.sqrt(fan1),
        w2=jax.random.uniform(k3, (9, c_mid, c_out), jnp.float32, -1, 1) / np.sqrt(fan2),
        bc2=jax.random.uniform(k4, (1, c_out), jnp.float32, -1, 1) / np.sqrt(fan2),
        g1=1.0 + 0.1 * jax.random.normal(k5, (1, c_mid), jnp.float32),
        be1=0.1 * jax.random.normal(k6, (1, c_mid), jnp.float32),
        g2=1.0 + 0.1 * jax.random.normal(k7, (1, c_out), jnp.float32),
        be2=0.1 * jax.random.normal(k8, (1, c_out), jnp.float32),
        mh=jnp.asarray(make_bilinear_matrix_1d(h)),   # reference only
        mw=jnp.asarray(make_bilinear_matrix_1d(w)),   # reference only
    )


# ------------------------------ wrapper ---------------------------------------
def decoder_block_forward(x_nchw, params):
    n, c_in, h, w = x_nchw.shape
    p = n * h * w
    c_mid = params["w1"].shape[-1]
    c_out = params["w2"].shape[-1]

    # NCHW -> (C, N*H*W): channels on sublanes, flat spatial on lanes (glue)
    x_flat = jnp.transpose(x_nchw, (1, 0, 2, 3)).reshape(c_in, p)

    # conv weights -> per-tap (9, C_dst, C_src) bf16 MXU form (glue)
    w1m = jnp.transpose(params["w1"], (0, 2, 1)).astype(jnp.bfloat16)
    w2m = jnp.transpose(params["w2"], (0, 2, 1)).astype(jnp.bfloat16)
    g1 = params["g1"].reshape(c_mid, 1)
    b1 = params["be1"].reshape(c_mid, 1)
    g2 = params["g2"].reshape(c_out, 1)
    b2 = params["be2"].reshape(c_out, 1)

    kernel = functools.partial(_decoder_block_kernel,
                               n_img=n, h=h, w=w, c_out=c_out)
    vmem = pl.BlockSpec(memory_space=pltpu.MemorySpace.VMEM)
    out_flat = pl.pallas_call(
        kernel,
        out_shape=jax.ShapeDtypeStruct((4 * c_out, p), jnp.float32),
        in_specs=[vmem] * 7,
        out_specs=vmem,
        compiler_params=pltpu.CompilerParams(
            vmem_limit_bytes=32 * 1024 * 1024),
    )(x_flat, w1m, g1, b1, w2m, g2, b2)

    # 4 phase planes (a, b, c, n*h*w) -> NCHW at 2x resolution (glue)
    out6 = out_flat.reshape(2, 2, c_out, n, h, w)
    return jnp.transpose(out6, (3, 2, 4, 0, 5, 1)).reshape(n, c_out, 2 * h, 2 * w)


# ------------------------------ pure-JAX reference -----------------------------
def reference_forward(x_nchw, params):
    def conv_bn_relu(x, wk, bk, g, be):
        w_hwio = wk.reshape(3, 3, wk.shape[1], wk.shape[2])
        y = lax.conv_general_dilated(
            x, w_hwio, window_strides=(1, 1), padding=((1, 1), (1, 1)),
            dimension_numbers=("NHWC", "HWIO", "NHWC"),
            precision=lax.Precision.HIGHEST)
        y = y + bk.reshape(1, 1, 1, -1)
        mean = jnp.mean(y, axis=(0, 1, 2), keepdims=True)
        var = jnp.mean(jnp.square(y - mean), axis=(0, 1, 2), keepdims=True)
        y = (y - mean) * lax.rsqrt(var + EPS) * g.reshape(1, 1, 1, -1) \
            + be.reshape(1, 1, 1, -1)
        return jnp.maximum(y, 0.0)

    x = jnp.transpose(x_nchw, (0, 2, 3, 1))
    x = conv_bn_relu(x, params["w1"], params["bc1"], params["g1"], params["be1"])
    x = conv_bn_relu(x, params["w2"], params["bc2"], params["g2"], params["be2"])
    x = jnp.einsum("ih,nhwc->niwc", params["mh"], x, precision=lax.Precision.HIGHEST)
    x = jnp.einsum("jw,niwc->nijc", params["mw"], x, precision=lax.Precision.HIGHEST)
    return jnp.transpose(x, (0, 3, 1, 2))


if __name__ == "__main__":
    N, C_IN, C_OUT, H, W = 2, 16, 8, 16, 16     # DecoderBlock(16, 8), NCHW input
    key = jax.random.PRNGKey(0)
    kx, kp = jax.random.split(key)
    x = jax.random.normal(kx, (N, C_IN, H, W), jnp.float32)
    params = init_params(kp, C_IN, C_OUT, H, W)

    out = jax.block_until_ready(decoder_block_forward(x, params))
    assert out.shape == (N, C_OUT, 2 * H, 2 * W), out.shape

    ref = jax.block_until_ready(reference_forward(x, params))
    # kernel feeds the MXU bf16 operands (f32 accumulate); BN / upsample stay f32
    np.testing.assert_allclose(np.asarray(out), np.asarray(ref),
                               rtol=2e-2, atol=2e-2)
    print("KERNEL_OK")
</pallas_src>

<mosaic_0001>
module attributes {stable_mosaic.version = 11 : i64} {
  func.func @_decoder_block_kernel(%arg0: memref<16x512xf32, #tpu.memory_space<vmem>>, %arg1: memref<9x4x16xbf16, #tpu.memory_space<vmem>>, %arg2: memref<4x1xf32, #tpu.memory_space<vmem>>, %arg3: memref<4x1xf32, #tpu.memory_space<vmem>>, %arg4: memref<9x8x4xbf16, #tpu.memory_space<vmem>>, %arg5: memref<8x1xf32, #tpu.memory_space<vmem>>, %arg6: memref<8x1xf32, #tpu.memory_space<vmem>>, %arg7: memref<32x512xf32, #tpu.memory_space<vmem>>) attributes {dimension_semantics = [], scalar_prefetch = 0 : i64, scratch_operands = 0 : i64, tpu.core_type = #tpu.core_type<tc>} {
    %0 = tpu.iota {dimensions = array<i32: 1>} : vector<1x512xi32>
    %1 = arith.sitofp %0 : vector<1x512xi32> to vector<1x512xf32>
    %cst = arith.constant 1.600000e+01 : f32
    %2 = vector.broadcast %cst : f32 to vector<1x512xf32>
    %3 = arith.divf %1, %2 : vector<1x512xf32>
    %4 = math.floor %3 : vector<1x512xf32>
    %cst_0 = arith.constant 1.600000e+01 : f32
    %5 = vector.broadcast %cst_0 : f32 to vector<1x512xf32>
    %6 = arith.mulf %4, %5 : vector<1x512xf32>
    %7 = arith.subf %1, %6 : vector<1x512xf32>
    %cst_1 = arith.constant 2.560000e+02 : f32
    %8 = vector.broadcast %cst_1 : f32 to vector<1x512xf32>
    %9 = arith.divf %1, %8 : vector<1x512xf32>
    %10 = math.floor %9 : vector<1x512xf32>
    %cst_2 = arith.constant 1.600000e+01 : f32
    %11 = vector.broadcast %cst_2 : f32 to vector<1x512xf32>
    %12 = arith.mulf %10, %11 : vector<1x512xf32>
    %13 = arith.subf %4, %12 : vector<1x512xf32>
    %cst_3 = arith.constant 1.000000e+00 : f32
    %14 = vector.broadcast %cst_3 : f32 to vector<1x512xf32>
    %15 = arith.cmpf oge, %7, %14 : vector<1x512xf32>
    %cst_4 = arith.constant 1.400000e+01 : f32
    %16 = vector.broadcast %cst_4 : f32 to vector<1x512xf32>
    %17 = arith.cmpf ole, %7, %16 : vector<1x512xf32>
    %cst_5 = arith.constant 1.000000e+00 : f32
    %18 = vector.broadcast %cst_5 : f32 to vector<1x512xf32>
    %19 = arith.cmpf oge, %13, %18 : vector<1x512xf32>
    %cst_6 = arith.constant 1.400000e+01 : f32
    %20 = vector.broadcast %cst_6 : f32 to vector<1x512xf32>
    %21 = arith.cmpf ole, %13, %20 : vector<1x512xf32>
    %22 = arith.extui %19 : vector<1x512xi1> to vector<1x512xi32>
    %23 = arith.sitofp %22 : vector<1x512xi32> to vector<1x512xf32>
    %24 = arith.extui %21 : vector<1x512xi1> to vector<1x512xi32>
    %25 = arith.sitofp %24 : vector<1x512xi32> to vector<1x512xf32>
    %26 = arith.extui %15 : vector<1x512xi1> to vector<1x512xi32>
    %27 = arith.sitofp %26 : vector<1x512xi32> to vector<1x512xf32>
    %28 = arith.extui %17 : vector<1x512xi1> to vector<1x512xi32>
    %29 = arith.sitofp %28 : vector<1x512xi32> to vector<1x512xf32>
    %30 = arith.mulf %23, %27 : vector<1x512xf32>
    %31 = arith.mulf %23, %29 : vector<1x512xf32>
    %32 = arith.mulf %25, %27 : vector<1x512xf32>
    %33 = arith.mulf %25, %29 : vector<1x512xf32>
    %c0 = arith.constant 0 : index
    %c0_7 = arith.constant 0 : index
    %34 = vector.load %arg0[%c0, %c0_7] : memref<16x512xf32, #tpu.memory_space<vmem>>, vector<16x512xf32>
    %c4 = arith.constant 4 : index
    %c0_8 = arith.constant 0 : index
    %c0_9 = arith.constant 0 : index
    %35 = vector.load %arg1[%c4, %c0_8, %c0_9] : memref<9x4x16xbf16, #tpu.memory_space<vmem>>, vector<1x4x16xbf16>
    %36 = vector.shape_cast %35 : vector<1x4x16xbf16> to vector<4x16xbf16>
    %37 = arith.truncf %34 : vector<16x512xf32> to vector<16x512xbf16>
    %cst_10 = arith.constant dense<0.000000e+00> : vector<4x512xf32>
    %38 = tpu.matmul %36, %37, %cst_10 {dimension_numbers = #tpu.dot_dimension_numbers<[1], [0], [0], [1], [0, 0, 1, 1], [], []>} : vector<4x16xbf16>, vector<16x512xbf16>, vector<4x512xf32> -> vector<4x512xf32>
    %c17_i32 = arith.constant 17 : i32
    %39 = tpu.dynamic_rotate %34 by %c17_i32 dim 1 : vector<16x512xf32>, i32 -> vector<16x512xf32>
    %40 = arith.truncf %39 : vector<16x512xf32> to vector<16x512xbf16>
    %c0_11 = arith.constant 0 : index
    %c0_12 = arith.constant 0 : index
    %c0_13 = arith.constant 0 : index
    %41 = vector.load %arg1[%c0_11, %c0_12, %c0_13] : memref<9x4x16xbf16, #tpu.memory_space<vmem>>, vector<1x4x16xbf16>
    %42 = vector.shape_cast %41 : vector<1x4x16xbf16> to vector<4x16xbf16>
    %cst_14 = arith.constant dense<0.000000e+00> : vector<4x512xf32>
    %43 = tpu.matmul %42, %40, %cst_14 {dimension_numbers = #tpu.dot_dimension_numbers<[1], [0], [0], [1], [0, 0, 1, 1], [], []>} : vector<4x16xbf16>, vector<16x512xbf16>, vector<4x512xf32> -> vector<4x512xf32>
    %44 = vector.broadcast %30 : vector<1x512xf32> to vector<4x512xf32>
    %45 = arith.mulf %43, %44 : vector<4x512xf32>
    %46 = arith.addf %38, %45 : vector<4x512xf32>
    %c16_i32 = arith.constant 16 : i32
    %47 = tpu.dynamic_rotate %34 by %c16_i32 dim 1 : vector<16x512xf32>, i32 -> vector<16x512xf32>
    %48 = arith.truncf %47 : vector<16x512xf32> to vector<16x512xbf16>
    %c1 = arith.constant 1 : index
    %c0_15 = arith.constant 0 : index
    %c0_16 = arith.constant 0 : index
    %49 = vector.load %arg1[%c1, %c0_15, %c0_16] : memref<9x4x16xbf16, #tpu.memory_space<vmem>>, vector<1x4x16xbf16>
    %50 = vector.shape_cast %49 : vector<1x4x16xbf16> to vector<4x16xbf16>
    %cst_17 = arith.constant dense<0.000000e+00> : vector<4x512xf32>
    %51 = tpu.matmul %50, %48, %cst_17 {dimension_numbers = #tpu.dot_dimension_numbers<[1], [0], [0], [1], [0, 0, 1, 1], [], []>} : vector<4x16xbf16>, vector<16x512xbf16>, vector<4x512xf32> -> vector<4x512xf32>
    %52 = vector.broadcast %23 : vector<1x512xf32> to vector<4x512xf32>
    %53 = arith.mulf %51, %52 : vector<4x512xf32>
    %54 = arith.addf %46, %53 : vector<4x512xf32>
    %c15_i32 = arith.constant 15 : i32
    %55 = tpu.dynamic_rotate %34 by %c15_i32 dim 1 : vector<16x512xf32>, i32 -> vector<16x512xf32>
    %56 = arith.truncf %55 : vector<16x512xf32> to vector<16x512xbf16>
    %c2 = arith.constant 2 : index
    %c0_18 = arith.constant 0 : index
    %c0_19 = arith.constant 0 : index
    %57 = vector.load %arg1[%c2, %c0_18, %c0_19] : memref<9x4x16xbf16, #tpu.memory_space<vmem>>, vector<1x4x16xbf16>
    %58 = vector.shape_cast %57 : vector<1x4x16xbf16> to vector<4x16xbf16>
    %cst_20 = arith.constant dense<0.000000e+00> : vector<4x512xf32>
    %59 = tpu.matmul %58, %56, %cst_20 {dimension_numbers = #tpu.dot_dimension_numbers<[1], [0], [0], [1], [0, 0, 1, 1], [], []>} : vector<4x16xbf16>, vector<16x512xbf16>, vector<4x512xf32> -> vector<4x512xf32>
    %60 = vector.broadcast %31 : vector<1x512xf32> to vector<4x512xf32>
    %61 = arith.mulf %59, %60 : vector<4x512xf32>
    %62 = arith.addf %54, %61 : vector<4x512xf32>
    %c1_i32 = arith.constant 1 : i32
    %63 = tpu.dynamic_rotate %34 by %c1_i32 dim 1 : vector<16x512xf32>, i32 -> vector<16x512xf32>
    %64 = arith.truncf %63 : vector<16x512xf32> to vector<16x512xbf16>
    %c3 = arith.constant 3 : index
    %c0_21 = arith.constant 0 : index
    %c0_22 = arith.constant 0 : index
    %65 = vector.load %arg1[%c3, %c0_21, %c0_22] : memref<9x4x16xbf16, #tpu.memory_space<vmem>>, vector<1x4x16xbf16>
    %66 = vector.shape_cast %65 : vector<1x4x16xbf16> to vector<4x16xbf16>
    %cst_23 = arith.constant dense<0.000000e+00> : vector<4x512xf32>
    %67 = tpu.matmul %66, %64, %cst_23 {dimension_numbers = #tpu.dot_dimension_numbers<[1], [0], [0], [1], [0, 0, 1, 1], [], []>} : vector<4x16xbf16>, vector<16x512xbf16>, vector<4x512xf32> -> vector<4x512xf32>
    %68 = vector.broadcast %27 : vector<1x512xf32> to vector<4x512xf32>
    %69 = arith.mulf %67, %68 : vector<4x512xf32>
    %70 = arith.addf %62, %69 : vector<4x512xf32>
    %c511_i32 = arith.constant 511 : i32
    %71 = tpu.dynamic_rotate %34 by %c511_i32 dim 1 : vector<16x512xf32>, i32 -> vector<16x512xf32>
    %72 = arith.truncf %71 : vector<16x512xf32> to vector<16x512xbf16>
    %c5 = arith.constant 5 : index
    %c0_24 = arith.constant 0 : index
    %c0_25 = arith.constant 0 : index
    %73 = vector.load %arg1[%c5, %c0_24, %c0_25] : memref<9x4x16xbf16, #tpu.memory_space<vmem>>, vector<1x4x16xbf16>
    %74 = vector.shape_cast %73 : vector<1x4x16xbf16> to vector<4x16xbf16>
    %cst_26 = arith.constant dense<0.000000e+00> : vector<4x512xf32>
    %75 = tpu.matmul %74, %72, %cst_26 {dimension_numbers = #tpu.dot_dimension_numbers<[1], [0], [0], [1], [0, 0, 1, 1], [], []>} : vector<4x16xbf16>, vector<16x512xbf16>, vector<4x512xf32> -> vector<4x512xf32>
    %76 = vector.broadcast %29 : vector<1x512xf32> to vector<4x512xf32>
    %77 = arith.mulf %75, %76 : vector<4x512xf32>
    %78 = arith.addf %70, %77 : vector<4x512xf32>
    %c497_i32 = arith.constant 497 : i32
    %79 = tpu.dynamic_rotate %34 by %c497_i32 dim 1 : vector<16x512xf32>, i32 -> vector<16x512xf32>
    %80 = arith.truncf %79 : vector<16x512xf32> to vector<16x512xbf16>
    %c6 = arith.constant 6 : index
    %c0_27 = arith.constant 0 : index
    %c0_28 = arith.constant 0 : index
    %81 = vector.load %arg1[%c6, %c0_27, %c0_28] : memref<9x4x16xbf16, #tpu.memory_space<vmem>>, vector<1x4x16xbf16>
    %82 = vector.shape_cast %81 : vector<1x4x16xbf16> to vector<4x16xbf16>
    %cst_29 = arith.constant dense<0.000000e+00> : vector<4x512xf32>
    %83 = tpu.matmul %82, %80, %cst_29 {dimension_numbers = #tpu.dot_dimension_numbers<[1], [0], [0], [1], [0, 0, 1, 1], [], []>} : vector<4x16xbf16>, vector<16x512xbf16>, vector<4x512xf32> -> vector<4x512xf32>
    %84 = vector.broadcast %32 : vector<1x512xf32> to vector<4x512xf32>
    %85 = arith.mulf %83, %84 : vector<4x512xf32>
    %86 = arith.addf %78, %85 : vector<4x512xf32>
    %c496_i32 = arith.constant 496 : i32
    %87 = tpu.dynamic_rotate %34 by %c496_i32 dim 1 : vector<16x512xf32>, i32 -> vector<16x512xf32>
    %88 = arith.truncf %87 : vector<16x512xf32> to vector<16x512xbf16>
    %c7 = arith.constant 7 : index
    %c0_30 = arith.constant 0 : index
    %c0_31 = arith.constant 0 : index
    %89 = vector.load %arg1[%c7, %c0_30, %c0_31] : memref<9x4x16xbf16, #tpu.memory_space<vmem>>, vector<1x4x16xbf16>
    %90 = vector.shape_cast %89 : vector<1x4x16xbf16> to vector<4x16xbf16>
    %cst_32 = arith.constant dense<0.000000e+00> : vector<4x512xf32>
    %91 = tpu.matmul %90, %88, %cst_32 {dimension_numbers = #tpu.dot_dimension_numbers<[1], [0], [0], [1], [0, 0, 1, 1], [], []>} : vector<4x16xbf16>, vector<16x512xbf16>, vector<4x512xf32> -> vector<4x512xf32>
    %92 = vector.broadcast %25 : vector<1x512xf32> to vector<4x512xf32>
    %93 = arith.mulf %91, %92 : vector<4x512xf32>
    %94 = arith.addf %86, %93 : vector<4x512xf32>
    %c495_i32 = arith.constant 495 : i32
    %95 = tpu.dynamic_rotate %34 by %c495_i32 dim 1 : vector<16x512xf32>, i32 -> vector<16x512xf32>
    %96 = arith.truncf %95 : vector<16x512xf32> to vector<16x512xbf16>
    %c8 = arith.constant 8 : index
    %c0_33 = arith.constant 0 : index
    %c0_34 = arith.constant 0 : index
    %97 = vector.load %arg1[%c8, %c0_33, %c0_34] : memref<9x4x16xbf16, #tpu.memory_space<vmem>>, vector<1x4x16xbf16>
    %98 = vector.shape_cast %97 : vector<1x4x16xbf16> to vector<4x16xbf16>
    %cst_35 = arith.constant dense<0.000000e+00> : vector<4x512xf32>
    %99 = tpu.matmul %98, %96, %cst_35 {dimension_numbers = #tpu.dot_dimension_numbers<[1], [0], [0], [1], [0, 0, 1, 1], [], []>} : vector<4x16xbf16>, vector<16x512xbf16>, vector<4x512xf32> -> vector<4x512xf32>
    %100 = vector.broadcast %33 : vector<1x512xf32> to vector<4x512xf32>
    %101 = arith.mulf %99, %100 : vector<4x512xf32>
    %102 = arith.addf %94, %101 : vector<4x512xf32>
    %cst_36 = arith.constant dense<0.000000e+00> : vector<4xf32>
    %103 = vector.multi_reduction <add>, %102, %cst_36 [1] : vector<4x512xf32> to vector<4xf32>
    %104 = vector.shape_cast %103 : vector<4xf32> to vector<4x1xf32>
    %105 = arith.mulf %102, %102 : vector<4x512xf32>
    %cst_37 = arith.constant dense<0.000000e+00> : vector<4xf32>
    %106 = vector.multi_reduction <add>, %105, %cst_37 [1] : vector<4x512xf32> to vector<4xf32>
    %107 = vector.shape_cast %106 : vector<4xf32> to vector<4x1xf32>
    %cst_38 = arith.constant 0.001953125 : f32
    %108 = vector.broadcast %cst_38 : f32 to vector<4x1xf32>
    %109 = arith.mulf %104, %108 : vector<4x1xf32>
    %cst_39 = arith.constant 0.001953125 : f32
    %110 = vector.broadcast %cst_39 : f32 to vector<4x1xf32>
    %111 = arith.mulf %107, %110 : vector<4x1xf32>
    %112 = arith.mulf %109, %109 : vector<4x1xf32>
    %113 = arith.subf %111, %112 : vector<4x1xf32>
    %c0_40 = arith.constant 0 : index
    %c0_41 = arith.constant 0 : index
    %114 = vector.load %arg2[%c0_40, %c0_41] : memref<4x1xf32, #tpu.memory_space<vmem>>, vector<4x1xf32>
    %cst_42 = arith.constant 9.99999974E-6 : f32
    %115 = vector.broadcast %cst_42 : f32 to vector<4x1xf32>
    %116 = arith.addf %113, %115 : vector<4x1xf32>
    %117 = math.rsqrt %116 : vector<4x1xf32>
    %118 = arith.mulf %114, %117 : vector<4x1xf32>
    %c0_43 = arith.constant 0 : index
    %c0_44 = arith.constant 0 : index
    %119 = vector.load %arg3[%c0_43, %c0_44] : memref<4x1xf32, #tpu.memory_space<vmem>>, vector<4x1xf32>
    %120 = arith.mulf %109, %118 : vector<4x1xf32>
    %121 = arith.subf %119, %120 : vector<4x1xf32>
    %122 = vector.broadcast %118 : vector<4x1xf32> to vector<4x512xf32>
    %123 = arith.mulf %102, %122 : vector<4x512xf32>
    %124 = vector.broadcast %121 : vector<4x1xf32> to vector<4x512xf32>
    %125 = arith.addf %123, %124 : vector<4x512xf32>
    %cst_45 = arith.constant 0.000000e+00 : f32
    %126 = vector.broadcast %cst_45 : f32 to vector<4x512xf32>
    %127 = arith.maximumf %125, %126 : vector<4x512xf32>
    %c4_46 = arith.constant 4 : index
    %c0_47 = arith.constant 0 : index
    %c0_48 = arith.constant 0 : index
    %128 = vector.load %arg4[%c4_46, %c0_47, %c0_48] : memref<9x8x4xbf16, #tpu.memory_space<vmem>>, vector<1x8x4xbf16>
    %129 = vector.shape_cast %128 : vector<1x8x4xbf16> to vector<8x4xbf16>
    %130 = arith.truncf %127 : vector<4x512xf32> to vector<4x512xbf16>
    %cst_49 = arith.constant dense<0.000000e+00> : vector<8x512xf32>
    %131 = tpu.matmul %129, %130, %cst_49 {dimension_numbers = #tpu.dot_dimension_numbers<[1], [0], [0], [1], [0, 0, 1, 1], [], []>} : vector<8x4xbf16>, vector<4x512xbf16>, vector<8x512xf32> -> vector<8x512xf32>
    %c17_i32_50 = arith.constant 17 : i32
    %132 = tpu.dynamic_rotate %127 by %c17_i32_50 dim 1 : vector<4x512xf32>, i32 -> vector<4x512xf32>
    %133 = arith.truncf %132 : vector<4x512xf32> to vector<4x512xbf16>
    %c0_51 = arith.constant 0 : index
    %c0_52 = arith.constant 0 : index
    %c0_53 = arith.constant 0 : index
    %134 = vector.load %arg4[%c0_51, %c0_52, %c0_53] : memref<9x8x4xbf16, #tpu.memory_space<vmem>>, vector<1x8x4xbf16>
    %135 = vector.shape_cast %134 : vector<1x8x4xbf16> to vector<8x4xbf16>
    %cst_54 = arith.constant dense<0.000000e+00> : vector<8x512xf32>
    %136 = tpu.matmul %135, %133, %cst_54 {dimension_numbers = #tpu.dot_dimension_numbers<[1], [0], [0], [1], [0, 0, 1, 1], [], []>} : vector<8x4xbf16>, vector<4x512xbf16>, vector<8x512xf32> -> vector<8x512xf32>
    %137 = vector.broadcast %30 : vector<1x512xf32> to vector<8x512xf32>
    %138 = arith.mulf %136, %137 : vector<8x512xf32>
    %139 = arith.addf %131, %138 : vector<8x512xf32>
    %c16_i32_55 = arith.constant 16 : i32
    %140 = tpu.dynamic_rotate %127 by %c16_i32_55 dim 1 : vector<4x512xf32>, i32 -> vector<4x512xf32>
    %141 = arith.truncf %140 : vector<4x512xf32> to vector<4x512xbf16>
    %c1_56 = arith.constant 1 : index
    %c0_57 = arith.constant 0 : index
    %c0_58 = arith.constant 0 : index
    %142 = vector.load %arg4[%c1_56, %c0_57, %c0_58] : memref<9x8x4xbf16, #tpu.memory_space<vmem>>, vector<1x8x4xbf16>
    %143 = vector.shape_cast %142 : vector<1x8x4xbf16> to vector<8x4xbf16>
    %cst_59 = arith.constant dense<0.000000e+00> : vector<8x512xf32>
    %144 = tpu.matmul %143, %141, %cst_59 {dimension_numbers = #tpu.dot_dimension_numbers<[1], [0], [0], [1], [0, 0, 1, 1], [], []>} : vector<8x4xbf16>, vector<4x512xbf16>, vector<8x512xf32> -> vector<8x512xf32>
    %145 = vector.broadcast %23 : vector<1x512xf32> to vector<8x512xf32>
    %146 = arith.mulf %144, %145 : vector<8x512xf32>
    %147 = arith.addf %139, %146 : vector<8x512xf32>
    %c15_i32_60 = arith.constant 15 : i32
    %148 = tpu.dynamic_rotate %127 by %c15_i32_60 dim 1 : vector<4x512xf32>, i32 -> vector<4x512xf32>
    %149 = arith.truncf %148 : vector<4x512xf32> to vector<4x512xbf16>
    %c2_61 = arith.constant 2 : index
    %c0_62 = arith.constant 0 : index
    %c0_63 = arith.constant 0 : index
    %150 = vector.load %arg4[%c2_61, %c0_62, %c0_63] : memref<9x8x4xbf16, #tpu.memory_space<vmem>>, vector<1x8x4xbf16>
    %151 = vector.shape_cast %150 : vector<1x8x4xbf16> to vector<8x4xbf16>
    %cst_64 = arith.constant dense<0.000000e+00> : vector<8x512xf32>
    %152 = tpu.matmul %151, %149, %cst_64 {dimension_numbers = #tpu.dot_dimension_numbers<[1], [0], [0], [1], [0, 0, 1, 1], [], []>} : vector<8x4xbf16>, vector<4x512xbf16>, vector<8x512xf32> -> vector<8x512xf32>
    %153 = vector.broadcast %31 : vector<1x512xf32> to vector<8x512xf32>
    %154 = arith.mulf %152, %153 : vector<8x512xf32>
    %155 = arith.addf %147, %154 : vector<8x512xf32>
    %c1_i32_65 = arith.constant 1 : i32
    %156 = tpu.dynamic_rotate %127 by %c1_i32_65 dim 1 : vector<4x512xf32>, i32 -> vector<4x512xf32>
    %157 = arith.truncf %156 : vector<4x512xf32> to vector<4x512xbf16>
    %c3_66 = arith.constant 3 : index
    %c0_67 = arith.constant 0 : index
    %c0_68 = arith.constant 0 : index
    %158 = vector.load %arg4[%c3_66, %c0_67, %c0_68] : memref<9x8x4xbf16, #tpu.memory_space<vmem>>, vector<1x8x4xbf16>
    %159 = vector.shape_cast %158 : vector<1x8x4xbf16> to vector<8x4xbf16>
    %cst_69 = arith.constant dense<0.000000e+00> : vector<8x512xf32>
    %160 = tpu.matmul %159, %157, %cst_69 {dimension_numbers = #tpu.dot_dimension_numbers<[1], [0], [0], [1], [0, 0, 1, 1], [], []>} : vector<8x4xbf16>, vector<4x512xbf16>, vector<8x512xf32> -> vector<8x512xf32>
    %161 = vector.broadcast %27 : vector<1x512xf32> to vector<8x512xf32>
    %162 = arith.mulf %160, %161 : vector<8x512xf32>
    %163 = arith.addf %155, %162 : vector<8x512xf32>
    %c511_i32_70 = arith.constant 511 : i32
    %164 = tpu.dynamic_rotate %127 by %c511_i32_70 dim 1 : vector<4x512xf32>, i32 -> vector<4x512xf32>
    %165 = arith.truncf %164 : vector<4x512xf32> to vector<4x512xbf16>
    %c5_71 = arith.constant 5 : index
    %c0_72 = arith.constant 0 : index
    %c0_73 = arith.constant 0 : index
    %166 = vector.load %arg4[%c5_71, %c0_72, %c0_73] : memref<9x8x4xbf16, #tpu.memory_space<vmem>>, vector<1x8x4xbf16>
    %167 = vector.shape_cast %166 : vector<1x8x4xbf16> to vector<8x4xbf16>
    %cst_74 = arith.constant dense<0.000000e+00> : vector<8x512xf32>
    %168 = tpu.matmul %167, %165, %cst_74 {dimension_numbers = #tpu.dot_dimension_numbers<[1], [0], [0], [1], [0, 0, 1, 1], [], []>} : vector<8x4xbf16>, vector<4x512xbf16>, vector<8x512xf32> -> vector<8x512xf32>
    %169 = vector.broadcast %29 : vector<1x512xf32> to vector<8x512xf32>
    %170 = arith.mulf %168, %169 : vector<8x512xf32>
    %171 = arith.addf %163, %170 : vector<8x512xf32>
    %c497_i32_75 = arith.constant 497 : i32
    %172 = tpu.dynamic_rotate %127 by %c497_i32_75 dim 1 : vector<4x512xf32>, i32 -> vector<4x512xf32>
    %173 = arith.truncf %172 : vector<4x512xf32> to vector<4x512xbf16>
    %c6_76 = arith.constant 6 : index
    %c0_77 = arith.constant 0 : index
    %c0_78 = arith.constant 0 : index
    %174 = vector.load %arg4[%c6_76, %c0_77, %c0_78] : memref<9x8x4xbf16, #tpu.memory_space<vmem>>, vector<1x8x4xbf16>
    %175 = vector.shape_cast %174 : vector<1x8x4xbf16> to vector<8x4xbf16>
    %cst_79 = arith.constant dense<0.000000e+00> : vector<8x512xf32>
    %176 = tpu.matmul %175, %173, %cst_79 {dimension_numbers = #tpu.dot_dimension_numbers<[1], [0], [0], [1], [0, 0, 1, 1], [], []>} : vector<8x4xbf16>, vector<4x512xbf16>, vector<8x512xf32> -> vector<8x512xf32>
    %177 = vector.broadcast %32 : vector<1x512xf32> to vector<8x512xf32>
    %178 = arith.mulf %176, %177 : vector<8x512xf32>
    %179 = arith.addf %171, %178 : vector<8x512xf32>
    %c496_i32_80 = arith.constant 496 : i32
    %180 = tpu.dynamic_rotate %127 by %c496_i32_80 dim 1 : vector<4x512xf32>, i32 -> vector<4x512xf32>
    %181 = arith.truncf %180 : vector<4x512xf32> to vector<4x512xbf16>
    %c7_81 = arith.constant 7 : index
    %c0_82 = arith.constant 0 : index
    %c0_83 = arith.constant 0 : index
    %182 = vector.load %arg4[%c7_81, %c0_82, %c0_83] : memref<9x8x4xbf16, #tpu.memory_space<vmem>>, vector<1x8x4xbf16>
    %183 = vector.shape_cast %182 : vector<1x8x4xbf16> to vector<8x4xbf16>
    %cst_84 = arith.constant dense<0.000000e+00> : vector<8x512xf32>
    %184 = tpu.matmul %183, %181, %cst_84 {dimension_numbers = #tpu.dot_dimension_numbers<[1], [0], [0], [1], [0, 0, 1, 1], [], []>} : vector<8x4xbf16>, vector<4x512xbf16>, vector<8x512xf32> -> vector<8x512xf32>
    %185 = vector.broadcast %25 : vector<1x512xf32> to vector<8x512xf32>
    %186 = arith.mulf %184, %185 : vector<8x512xf32>
    %187 = arith.addf %179, %186 : vector<8x512xf32>
    %c495_i32_85 = arith.constant 495 : i32
    %188 = tpu.dynamic_rotate %127 by %c495_i32_85 dim 1 : vector<4x512xf32>, i32 -> vector<4x512xf32>
    %189 = arith.truncf %188 : vector<4x512xf32> to vector<4x512xbf16>
    %c8_86 = arith.constant 8 : index
    %c0_87 = arith.constant 0 : index
    %c0_88 = arith.constant 0 : index
    %190 = vector.load %arg4[%c8_86, %c0_87, %c0_88] : memref<9x8x4xbf16, #tpu.memory_space<vmem>>, vector<1x8x4xbf16>
    %191 = vector.shape_cast %190 : vector<1x8x4xbf16> to vector<8x4xbf16>
    %cst_89 = arith.constant dense<0.000000e+00> : vector<8x512xf32>
    %192 = tpu.matmul %191, %189, %cst_89 {dimension_numbers = #tpu.dot_dimension_numbers<[1], [0], [0], [1], [0, 0, 1, 1], [], []>} : vector<8x4xbf16>, vector<4x512xbf16>, vector<8x512xf32> -> vector<8x512xf32>
    %193 = vector.broadcast %33 : vector<1x512xf32> to vector<8x512xf32>
    %194 = arith.mulf %192, %193 : vector<8x512xf32>
    %195 = arith.addf %187, %194 : vector<8x512xf32>
    %cst_90 = arith.constant dense<0.000000e+00> : vector<8xf32>
    %196 = vector.multi_reduction <add>, %195, %cst_90 [1] : vector<8x512xf32> to vector<8xf32>
    %197 = vector.shape_cast %196 : vector<8xf32> to vector<8x1xf32>
    %198 = arith.mulf %195, %195 : vector<8x512xf32>
    %cst_91 = arith.constant dense<0.000000e+00> : vector<8xf32>
    %199 = vector.multi_reduction <add>, %198, %cst_91 [1] : vector<8x512xf32> to vector<8xf32>
    %200 = vector.shape_cast %199 : vector<8xf32> to vector<8x1xf32>
    %cst_92 = arith.constant 0.001953125 : f32
    %201 = vector.broadcast %cst_92 : f32 to vector<8x1xf32>
    %202 = arith.mulf %197, %201 : vector<8x1xf32>
    %cst_93 = arith.constant 0.001953125 : f32
    %203 = vector.broadcast %cst_93 : f32 to vector<8x1xf32>
    %204 = arith.mulf %200, %203 : vector<8x1xf32>
    %205 = arith.mulf %202, %202 : vector<8x1xf32>
    %206 = arith.subf %204, %205 : vector<8x1xf32>
    %c0_94 = arith.constant 0 : index
    %c0_95 = arith.constant 0 : index
    %207 = vector.load %arg5[%c0_94, %c0_95] : memref<8x1xf32, #tpu.memory_space<vmem>>, vector<8x1xf32>
    %cst_96 = arith.constant 9.99999974E-6 : f32
    %208 = vector.broadcast %cst_96 : f32 to vector<8x1xf32>
    %209 = arith.addf %206, %208 : vector<8x1xf32>
    %210 = math.rsqrt %209 : vector<8x1xf32>
    %211 = arith.mulf %207, %210 : vector<8x1xf32>
    %c0_97 = arith.constant 0 : index
    %c0_98 = arith.constant 0 : index
    %212 = vector.load %arg6[%c0_97, %c0_98] : memref<8x1xf32, #tpu.memory_space<vmem>>, vector<8x1xf32>
    %213 = arith.mulf %202, %211 : vector<8x1xf32>
    %214 = arith.subf %212, %213 : vector<8x1xf32>
    %215 = vector.broadcast %211 : vector<8x1xf32> to vector<8x512xf32>
    %216 = arith.mulf %195, %215 : vector<8x512xf32>
    %217 = vector.broadcast %214 : vector<8x1xf32> to vector<8x512xf32>
    %218 = arith.addf %216, %217 : vector<8x512xf32>
    %cst_99 = arith.constant 0.000000e+00 : f32
    %219 = vector.broadcast %cst_99 : f32 to vector<8x512xf32>
    %220 = arith.maximumf %218, %219 : vector<8x512xf32>
    %c16_i32_100 = arith.constant 16 : i32
    %221 = tpu.dynamic_rotate %220 by %c16_i32_100 dim 1 : vector<8x512xf32>, i32 -> vector<8x512xf32>
    %222 = vector.shape_cast %19 : vector<1x512xi1> to vector<1x512xi1>
    %223 = vector.broadcast %222 : vector<1x512xi1> to vector<8x512xi1>
    %224 = arith.select %223, %221, %220 : vector<8x512xi1>, vector<8x512xf32>
    %c496_i32_101 = arith.constant 496 : i32
    %225 = tpu.dynamic_rotate %220 by %c496_i32_101 dim 1 : vector<8x512xf32>, i32 -> vector<8x512xf32>
    %226 = vector.shape_cast %21 : vector<1x512xi1> to vector<1x512xi1>
    %227 = vector.broadcast %226 : vector<1x512xi1> to vector<8x512xi1>
    %228 = arith.select %227, %225, %220 : vector<8x512xi1>, vector<8x512xf32>
    %cst_102 = arith.constant 7.500000e-01 : f32
    %229 = vector.broadcast %cst_102 : f32 to vector<8x512xf32>
    %230 = arith.mulf %229, %220 : vector<8x512xf32>
    %cst_103 = arith.constant 2.500000e-01 : f32
    %231 = vector.broadcast %cst_103 : f32 to vector<8x512xf32>
    %232 = arith.mulf %231, %224 : vector<8x512xf32>
    %233 = arith.addf %230, %232 : vector<8x512xf32>
    %cst_104 = arith.constant 7.500000e-01 : f32
    %234 = vector.broadcast %cst_104 : f32 to vector<8x512xf32>
    %235 = arith.mulf %234, %220 : vector<8x512xf32>
    %cst_105 = arith.constant 2.500000e-01 : f32
    %236 = vector.broadcast %cst_105 : f32 to vector<8x512xf32>
    %237 = arith.mulf %236, %228 : vector<8x512xf32>
    %238 = arith.addf %235, %237 : vector<8x512xf32>
    %c1_i32_106 = arith.constant 1 : i32
    %239 = tpu.dynamic_rotate %233 by %c1_i32_106 dim 1 : vector<8x512xf32>, i32 -> vector<8x512xf32>
    %240 = vector.shape_cast %15 : vector<1x512xi1> to vector<1x512xi1>
    %241 = vector.broadcast %240 : vector<1x512xi1> to vector<8x512xi1>
    %242 = arith.select %241, %239, %233 : vector<8x512xi1>, vector<8x512xf32>
    %c511_i32_107 = arith.constant 511 : i32
    %243 = tpu.dynamic_rotate %233 by %c511_i32_107 dim 1 : vector<8x512xf32>, i32 -> vector<8x512xf32>
    %244 = vector.shape_cast %17 : vector<1x512xi1> to vector<1x512xi1>
    %245 = vector.broadcast %244 : vector<1x512xi1> to vector<8x512xi1>
    %246 = arith.select %245, %243, %233 : vector<8x512xi1>, vector<8x512xf32>
    %cst_108 = arith.constant 7.500000e-01 : f32
    %247 = vector.broadcast %cst_108 : f32 to vector<8x512xf32>
    %248 = arith.mulf %247, %233 : vector<8x512xf32>
    %cst_109 = arith.constant 2.500000e-01 : f32
    %249 = vector.broadcast %cst_109 : f32 to vector<8x512xf32>
    %250 = arith.mulf %249, %242 : vector<8x512xf32>
    %251 = arith.addf %248, %250 : vector<8x512xf32>
    %c0_110 = arith.constant 0 : index
    %c0_111 = arith.constant 0 : index
    %252 = vector.load %arg7[%c0_110, %c0_111] : memref<32x512xf32, #tpu.memory_space<vmem>>, vector<8x512xf32>
    tpu.vector_store %arg7[%c0_110, %c0_111], %251 {strides = array<i32>} : memref<32x512xf32, #tpu.memory_space<vmem>>, vector<8x512xf32>,
    %cst_112 = arith.constant 7.500000e-01 : f32
    %253 = vector.broadcast %cst_112 : f32 to vector<8x512xf32>
    %254 = arith.mulf %253, %233 : vector<8x512xf32>
    %cst_113 = arith.constant 2.500000e-01 : f32
    %255 = vector.broadcast %cst_113 : f32 to vector<8x512xf32>
    %256 = arith.mulf %255, %246 : vector<8x512xf32>
    %257 = arith.addf %254, %256 : vector<8x512xf32>
    %c8_114 = arith.constant 8 : index
    %c0_115 = arith.constant 0 : index
    %258 = vector.load %arg7[%c8_114, %c0_115] : memref<32x512xf32, #tpu.memory_space<vmem>>, vector<8x512xf32>
    tpu.vector_store %arg7[%c8_114, %c0_115], %257 {strides = array<i32>} : memref<32x512xf32, #tpu.memory_space<vmem>>, vector<8x512xf32>,
    %c1_i32_116 = arith.constant 1 : i32
    %259 = tpu.dynamic_rotate %238 by %c1_i32_116 dim 1 : vector<8x512xf32>, i32 -> vector<8x512xf32>
    %260 = vector.shape_cast %15 : vector<1x512xi1> to vector<1x512xi1>
    %261 = vector.broadcast %260 : vector<1x512xi1> to vector<8x512xi1>
    %262 = arith.select %261, %259, %238 : vector<8x512xi1>, vector<8x512xf32>
    %c511_i32_117 = arith.constant 511 : i32
    %263 = tpu.dynamic_rotate %238 by %c511_i32_117 dim 1 : vector<8x512xf32>, i32 -> vector<8x512xf32>
    %264 = vector.shape_cast %17 : vector<1x512xi1> to vector<1x512xi1>
    %265 = vector.broadcast %264 : vector<1x512xi1> to vector<8x512xi1>
    %266 = arith.select %265, %263, %238 : vector<8x512xi1>, vector<8x512xf32>
    %cst_118 = arith.constant 7.500000e-01 : f32
    %267 = vector.broadcast %cst_118 : f32 to vector<8x512xf32>
    %268 = arith.mulf %267, %238 : vector<8x512xf32>
    %cst_119 = arith.constant 2.500000e-01 : f32
    %269 = vector.broadcast %cst_119 : f32 to vector<8x512xf32>
    %270 = arith.mulf %269, %262 : vector<8x512xf32>
    %271 = arith.addf %268, %270 : vector<8x512xf32>
    %c16 = arith.constant 16 : index
    %c0_120 = arith.constant 0 : index
    %272 = vector.load %arg7[%c16, %c0_120] : memref<32x512xf32, #tpu.memory_space<vmem>>, vector<8x512xf32>
    tpu.vector_store %arg7[%c16, %c0_120], %271 {strides = array<i32>} : memref<32x512xf32, #tpu.memory_space<vmem>>, vector<8x512xf32>,
    %cst_121 = arith.constant 7.500000e-01 : f32
    %273 = vector.broadcast %cst_121 : f32 to vector<8x512xf32>
    %274 = arith.mulf %273, %238 : vector<8x512xf32>
    %cst_122 = arith.constant 2.500000e-01 : f32
    %275 = vector.broadcast %cst_122 : f32 to vector<8x512xf32>
    %276 = arith.mulf %275, %266 : vector<8x512xf32>
    %277 = arith.addf %274, %276 : vector<8x512xf32>
    %c24 = arith.constant 24 : index
    %c0_123 = arith.constant 0 : index
    %278 = vector.load %arg7[%c24, %c0_123] : memref<32x512xf32, #tpu.memory_space<vmem>>, vector<8x512xf32>
    tpu.vector_store %arg7[%c24, %c0_123], %277 {strides = array<i32>} : memref<32x512xf32, #tpu.memory_space<vmem>>, vector<8x512xf32>,
    return
  }
}

</mosaic_0001>

<llo_original>
// kernel: tpu_custom_call.1
$region0: #{tpu_custom_call.1}
  #allocation0 [shape = 'u32[]', space=smem, size = 0x4, offset = 0x4, fixed_abs, tag = 'smem constant byte address 0x4 - core index']
  #allocation1 [shape = 'u32[144,128]{1,0:T(1,128)}', space=vmem, size = 0x12000, scoped, tag = 'internal scratch']
  %s0 = inlined_call_operand.vmem [shape: f32[16,512], index: 0, kind: input, shape index: {}]
  %s1 = inlined_call_operand.hbm [shape: bf16[9,4,16], index: 1, kind: input, shape index: {}]
  %s2 = inlined_call_operand.vmem [shape: f32[4,1], index: 2, kind: input, shape index: {}]
  %s3 = inlined_call_operand.vmem [shape: f32[4,1], index: 3, kind: input, shape index: {}]
  %s4 = inlined_call_operand.vmem [shape: bf16[9,8,4], index: 4, kind: input, shape index: {}]
  %s5 = inlined_call_operand.vmem [shape: f32[8,1], index: 5, kind: input, shape index: {}]
  %s6 = inlined_call_operand.vmem [shape: f32[8,1], index: 6, kind: input, shape index: {}]
  %s7 = inlined_call_operand.hbm [shape: f32[32,512], index: 7, kind: output, shape index: {}]
  %s8 = sld [smem:[#allocation0]]
  $region42: #{tpu_custom_call.1} parent=0
    _
  %s10 = ssub.s32 1, %s8
  %s11 = scalar_select 0, %s10, %s8
  $region1: #{tpu_custom_call.1} parent=0
    #allocation2 [shape = 'u8[9216]{0}', space=vmem, size = 0x2400, scoped, tag = 'input window, operand 1, single buffered']
    #allocation3 [shape = 's32[1]{0}', space=sflag, size = 0x4, scoped, tag = 'scoped memory for tpu_custom_call.1']
    #allocation4 [shape = 's32[1]{0}', space=sflag, size = 0x4, scoped, tag = 'scoped memory for tpu_custom_call.1']
    #allocation5 [shape = 'u8[65536]{0}', space=vmem, size = 0x10000, scoped, tag = 'output window, operand 0, single buffered']
    %12 = vsyncpa [#allocation3], 0
    %13 = vsyncpa [#allocation4], 0
    // Predicated region
    $region2: #{tpu_custom_call.1} parent=1 // pred_check
      _
    $region3: #{tpu_custom_call.1} parent=1 // pred_check_branch
      %15 = sbr.rel (0) target = $region5
    $region4: #{tpu_custom_call.1} parent=1 // pred_region
      _
    $region5: #{tpu_custom_call.1} parent=1 // pred_fallthru
      _
    // Predicated region
    $region6: #{tpu_custom_call.1} parent=1 // pred_check
      _
    $region7: #{tpu_custom_call.1} parent=1 // pred_check_branch
      %17 = sbr.rel (0) target = $region9
    $region8: #{tpu_custom_call.1} parent=1 // pred_region
      %s19 = ssub.s32 288, 288
      %20 = vsyncadd [#allocation3], %s19
      %s21 = sshll.u32 [#allocation2], 4
      %s22 = int_to_ptr.vmem [resolvable:$true] %s21
      %27 = dma.hbm_to_vmem [thread:$0]  %s1, 288, %s22, [#allocation3], 32, 32, 2
    $region9: #{tpu_custom_call.1} parent=1 // pred_fallthru
      _
    // Predicated region
    $region10: #{tpu_custom_call.1} parent=1 // pred_check
      _
    $region11: #{tpu_custom_call.1} parent=1 // pred_check_branch
      %29 = sbr.rel (0) target = $region13
    $region12: #{tpu_custom_call.1} parent=1 // pred_region
      _
    $region13: #{tpu_custom_call.1} parent=1 // pred_fallthru
      _
    // Predicated region
    $region14: #{tpu_custom_call.1} parent=1 // pred_check
      _
    $region15: #{tpu_custom_call.1} parent=1 // pred_check_branch
      %31 = sbr.rel (0) target = $region17
    $region16: #{tpu_custom_call.1} parent=1 // pred_region
      _
    $region17: #{tpu_custom_call.1} parent=1 // pred_fallthru
      _
    // Predicated region
    $region18: #{tpu_custom_call.1} parent=1 // pred_check
      _
    $region19: #{tpu_custom_call.1} parent=1 // pred_check_branch
      %33 = sbr.rel (0) target = $region21
    $region20: #{tpu_custom_call.1} parent=1 // pred_region
      _
    $region21: #{tpu_custom_call.1} parent=1 // pred_fallthru
      _
    // Predicated region
    $region22: #{tpu_custom_call.1} parent=1 // pred_check
      _
    $region23: #{tpu_custom_call.1} parent=1 // pred_check_branch
      %35 = sbr.rel (0) target = $region25
    $region24: #{tpu_custom_call.1} parent=1 // pred_region
      _
    $region25: #{tpu_custom_call.1} parent=1 // pred_fallthru
      _
    // Predicated region
    $region26: #{tpu_custom_call.1} parent=1 // pred_check
      _
    $region27: #{tpu_custom_call.1} parent=1 // pred_check_branch
      %37 = sbr.rel (0) target = $region29
    $region28: #{tpu_custom_call.1} parent=1 // pred_region
      _
    $region29: #{tpu_custom_call.1} parent=1 // pred_fallthru
      _
    // Predicated region
    $region30: #{tpu_custom_call.1} parent=1 // pred_check
      _
    $region31: #{tpu_custom_call.1} parent=1 // pred_check_branch
      %39 = sbr.rel (0) target = $region33
    $region32: #{tpu_custom_call.1} parent=1 // pred_region
      %40 = dma.done [#allocation3], 288
    $region33: #{tpu_custom_call.1} parent=1 // pred_fallthru
      _
    %v42 = vlaneseq
    %v43 = vand.u32 %v42, 127
    %v44 = vadd.s32 %v43, 128
    %v45 = vadd.s32 %v43, 256
    %v46 = vadd.s32 %v43, 384
    %v47 = vcvt.s32.f32 %v43
    %v48 = vcvt.s32.f32 %v44
    %v49 = vcvt.s32.f32 %v45
    %v50 = vcvt.s32.f32 %v46
    %v51 = vrcp.pop 16.0
    %v52 = vmul.f32 %v47, %v51
    %v53 = vmul.f32 %v48, %v51
    %v54 = vmul.f32 %v49, %v51
    %v55 = vmul.f32 %v50, %v51
    %v56 = vfloor.f32 %v52
    %v57 = vfloor.f32 %v53
    %v58 = vfloor.f32 %v54
    %v59 = vfloor.f32 %v55
    %v60 = vmul.f32 %v56, 16.0
    %v61 = vmul.f32 %v57, 16.0
    %v62 = vmul.f32 %v58, 16.0
    %v63 = vmul.f32 %v59, 16.0
    %v64 = vsub.f32 %v47, %v60
    %v65 = vsub.f32 %v48, %v61
    %v66 = vsub.f32 %v49, %v62
    %v67 = vsub.f32 %v50, %v63
    %v68 = vrcp.pop 256.0
    %v69 = vmul.f32 %v47, %v68
    %v70 = vmul.f32 %v48, %v68
    %v71 = vmul.f32 %v49, %v68
    %v72 = vmul.f32 %v50, %v68
    %v73 = vfloor.f32 %v69
    %v74 = vfloor.f32 %v70
    %v75 = vfloor.f32 %v71
    %v76 = vfloor.f32 %v72
    %v77 = vmul.f32 %v73, 16.0
    %v78 = vmul.f32 %v74, 16.0
    %v79 = vmul.f32 %v75, 16.0
    %v80 = vmul.f32 %v76, 16.0
    %v81 = vsub.f32 %v56, %v77
    %v82 = vsub.f32 %v57, %v78
    %v83 = vsub.f32 %v58, %v79
    %v84 = vsub.f32 %v59, %v80
    %vm85 = vcmp.ge.f32.partialorder %v64, 1.0
    %vm86 = vcmp.ge.f32.partialorder %v65, 1.0
    %vm87 = vcmp.ge.f32.partialorder %v66, 1.0
    %vm88 = vcmp.ge.f32.partialorder %v67, 1.0
    %vm89 = vcmp.le.f32.partialorder %v64, 14.0
    %vm90 = vcmp.le.f32.partialorder %v65, 14.0
    %vm91 = vcmp.le.f32.partialorder %v66, 14.0
    %vm92 = vcmp.le.f32.partialorder %v67, 14.0
    %vm93 = vcmp.ge.f32.partialorder %v81, 1.0
    %vm94 = vcmp.ge.f32.partialorder %v82, 1.0
    %vm95 = vcmp.ge.f32.partialorder %v83, 1.0
    %vm96 = vcmp.ge.f32.partialorder %v84, 1.0
    %vm97 = vcmp.le.f32.partialorder %v81, 14.0
    %vm98 = vcmp.le.f32.partialorder %v82, 14.0
    %vm99 = vcmp.le.f32.partialorder %v83, 14.0
    %vm100 = vcmp.le.f32.partialorder %v84, 14.0
    %v101 = vsel %vm93, 1, 0
    %v102 = vsel %vm94, 1, 0
    %v103 = vsel %vm95, 1, 0
    %v104 = vsel %vm96, 1, 0
    %v105 = vcvt.s32.f32 %v101
    %v106 = vcvt.s32.f32 %v102
    %v107 = vcvt.s32.f32 %v103
    %v108 = vcvt.s32.f32 %v104
    %v109 = vsel %vm97, 1, 0
    %v110 = vsel %vm98, 1, 0
    %v111 = vsel %vm99, 1, 0
    %v112 = vsel %vm100, 1, 0
    %v113 = vcvt.s32.f32 %v109
    %v114 = vcvt.s32.f32 %v110
    %v115 = vcvt.s32.f32 %v111
    %v116 = vcvt.s32.f32 %v112
    %v117 = vsel %vm85, 1, 0
    %v118 = vsel %vm86, 1, 0
    %v119 = vsel %vm87, 1, 0
    %v120 = vsel %vm88, 1, 0
    %v121 = vcvt.s32.f32 %v117
    %v122 = vcvt.s32.f32 %v118
    %v123 = vcvt.s32.f32 %v119
    %v124 = vcvt.s32.f32 %v120
    %v125 = vsel %vm89, 1, 0
    %v126 = vsel %vm90, 1, 0
    %v127 = vsel %vm91, 1, 0
    %v128 = vsel %vm92, 1, 0
    %v129 = vcvt.s32.f32 %v125
    %v130 = vcvt.s32.f32 %v126
    %v131 = vcvt.s32.f32 %v127
    %v132 = vcvt.s32.f32 %v128
    %v133 = vmul.f32 %v105, %v121
    %v134 = vmul.f32 %v106, %v122
    %v135 = vmul.f32 %v107, %v123
    %v136 = vmul.f32 %v108, %v124
    %v137 = vmul.f32 %v105, %v129
    %v138 = vmul.f32 %v106, %v130
    %v139 = vmul.f32 %v107, %v131
    %v140 = vmul.f32 %v108, %v132
    %v141 = vmul.f32 %v113, %v121
    %v142 = vmul.f32 %v114, %v122
    %v143 = vmul.f32 %v115, %v123
    %v144 = vmul.f32 %v116, %v124
    %v145 = vmul.f32 %v113, %v129
    %v146 = vmul.f32 %v114, %v130
    %v147 = vmul.f32 %v115, %v131
    %v148 = vmul.f32 %v116, %v132
    %v149 = vld [vmem:[%s0] sm:$0xff]
    %v150 = vld [vmem:[%s0 + $0x8] sm:$0xff]
    %v151 = vld [vmem:[%s0 + $0x10] sm:$0xff]
    %v152 = vld [vmem:[%s0 + $0x18] sm:$0xff]
    %v153 = vld [vmem:[%s0 + $0x20] sm:$0xff]
    %v154 = vld [vmem:[%s0 + $0x28] sm:$0xff]
    %v155 = vld [vmem:[%s0 + $0x30] sm:$0xff]
    %v156 = vld [vmem:[%s0 + $0x38] sm:$0xff]
    %s157 = scalar_lea.vmem [#allocation2], 8
    %v158 = vld [vmem:[%s157] sm:$0x3]
    %v159 = vpack.c.bf16 %v153, %v149
    %v160 = vpack.c.bf16 %v154, %v150
    %v161 = vpack.c.bf16 %v155, %v151
    %v162 = vpack.c.bf16 %v156, %v152
    %163 = vrot.lane.b32.xlu0 %v149, 17
    %v164 = vpop.permute.xlu0 %163
    %165 = vrot.lane.b32.xlu0 %v153, 17
    %v166 = vpop.permute.xlu0 %165
    %167 = vrot.lane.b32.xlu0 %v150, 17
    %v168 = vpop.permute.xlu0 %167
    %169 = vrot.lane.b32.xlu0 %v154, 17
    %v170 = vpop.permute.xlu0 %169
    %171 = vrot.lane.b32.xlu0 %v151, 17
    %v172 = vpop.permute.xlu0 %171
    %173 = vrot.lane.b32.xlu0 %v155, 17
    %v174 = vpop.permute.xlu0 %173
    %175 = vrot.lane.b32.xlu0 %v152, 17
    %v176 = vpop.permute.xlu0 %175
    %177 = vrot.lane.b32.xlu0 %v156, 17
    %v178 = vpop.permute.xlu0 %177
    %vm179 = vcmp.lt.s32.totalorder %v43, 17
    %v180 = vsel %vm179, %v172, %v176
    %v181 = vsel %vm179, %v174, %v178
    %v182 = vsel %vm179, %v168, %v172
    %v183 = vsel %vm179, %v170, %v174
    %v184 = vsel %vm179, %v164, %v168
    %v185 = vsel %vm179, %v166, %v170
    %v186 = vsel %vm179, %v176, %v164
    %v187 = vsel %vm179, %v178, %v166
    %v188 = vpack.c.bf16 %v187, %v186
    %v189 = vpack.c.bf16 %v185, %v184
    %v190 = vpack.c.bf16 %v183, %v182
    %v191 = vpack.c.bf16 %v181, %v180
    %v192 = vld [vmem:[#allocation2] sm:$0x3]
    %vm193 = vcmask 130048
    %v195 = vsel %vm193, %v192, 0
    %197 = vmatprep.subr.bf16.mxu0 0
    %198 = vmatpush1.bf16.msra.mxu0 0
    %199 = vmatprep.subr.bf16.mxu0 0
    %200 = vmatpush1.bf16.msra.mxu0 0
    %201 = vmatprep.subr.bf16.mxu0 0
    %202 = vmatpush1.bf16.msra.mxu0 0
    %203 = vmatprep.subr.bf16.mxu0 0
    %204 = vmatpush1.bf16.msra.mxu0 0
    %205 = vmatprep.subr.bf16.mxu0 0
    %206 = vmatpush1.bf16.msra.mxu0 0
    %207 = vmatprep.subr.bf16.mxu0 0
    %208 = vmatpush1.bf16.msra.mxu0 0
    %209 = vmatprep.subr.bf16.mxu0 0
    %210 = vmatpush1.bf16.msra.mxu0 0
    %211 = vmatprep.subr.bf16.mxu0 %v189
    %212 = vmatpush1.bf16.msra.mxu0 %v188
    %213 = vmatprep.subr.bf16.mxu0 0
    %214 = vmatpush2.bf16.msra.mxu0 0
    %215 = vmatprep.subr.bf16.mxu0 0
    %216 = vmatpush2.bf16.msra.mxu0 0
    %217 = vmatprep.subr.bf16.mxu0 0
    %218 = vmatpush2.bf16.msra.mxu0 0
    %219 = vmatprep.subr.bf16.mxu0 0
    %220 = vmatpush2.bf16.msra.mxu0 0
    %221 = vmatprep.subr.bf16.mxu0 0
    %222 = vmatpush2.bf16.msra.mxu0 0
    %223 = vmatprep.subr.bf16.mxu0 0
    %224 = vmatpush2.bf16.msra.mxu0 0
    %225 = vmatprep.subr.bf16.mxu0 0
    %226 = vmatpush2.bf16.msra.mxu0 0
    %227 = vmatprep.subr.bf16.mxu0 0
    %228 = vmatpush2.bf16.msra.mxu0 0
    %229 = vmatprep.mubr.bf16.mxu0 0
    %230 = vmatmul.mubr.bf16.gmra.mxu0 %v195
    %v231 = vpop.f32.mrf.mxu0
    %v232 = vadd.f32 0.0, %v231
    %v233 = vpop.f32.mrf.mxu0
    %v234 = vadd.f32 0.0, %v233
    %v235 = vpop.f32.mrf.mxu0
    %v236 = vpop.f32.mrf.mxu0
    %237 = vdwg.mxu0
    %238 = vmatprep.subr.bf16.mxu0 0
    %239 = vmatpush1.bf16.msra.mxu0 0
    %240 = vmatprep.subr.bf16.mxu0 0
    %241 = vmatpush1.bf16.msra.mxu0 0
    %242 = vmatprep.subr.bf16.mxu0 0
    %243 = vmatpush1.bf16.msra.mxu0 0
    %244 = vmatprep.subr.bf16.mxu0 0
    %245 = vmatpush1.bf16.msra.mxu0 0
    %246 = vmatprep.subr.bf16.mxu0 0
    %247 = vmatpush1.bf16.msra.mxu0 0
    %248 = vmatprep.subr.bf16.mxu0 0
    %249 = vmatpush1.bf16.msra.mxu0 0
    %250 = vmatprep.subr.bf16.mxu0 0
    %251 = vmatpush1.bf16.msra.mxu0 0
    %252 = vmatprep.subr.bf16.mxu0 %v191
    %253 = vmatpush1.bf16.msra.mxu0 %v190
    %254 = vmatprep.subr.bf16.mxu0 0
    %255 = vmatpush2.bf16.msra.mxu0 0
    %256 = vmatprep.subr.bf16.mxu0 0
    %257 = vmatpush2.bf16.msra.mxu0 0
    %258 = vmatprep.subr.bf16.mxu0 0
    %259 = vmatpush2.bf16.msra.mxu0 0
    %260 = vmatprep.subr.bf16.mxu0 0
    %261 = vmatpush2.bf16.msra.mxu0 0
    %262 = vmatprep.subr.bf16.mxu0 0
    %263 = vmatpush2.bf16.msra.mxu0 0
    %264 = vmatprep.subr.bf16.mxu0 0
    %265 = vmatpush2.bf16.msra.mxu0 0
    %266 = vmatprep.subr.bf16.mxu0 0
    %267 = vmatpush2.bf16.msra.mxu0 0
    %268 = vmatprep.subr.bf16.mxu0 0
    %269 = vmatpush2.bf16.msra.mxu0 0
    %270 = vmatprep.mubr.bf16.mxu0 0
    %271 = vmatmul.mubr.bf16.gmra.mxu0 %v195
    %v272 = vpop.f32.mrf.mxu0
    %v273 = vadd.f32 0.0, %v272
    %v274 = vpop.f32.mrf.mxu0
    %v275 = vadd.f32 0.0, %v274
    %v276 = vpop.f32.mrf.mxu0
    %v277 = vpop.f32.mrf.mxu0
    %278 = vdwg.mxu0
    %v279 = vmul.f32 %v232, %v133
    %v280 = vmul.f32 %v234, %v134
    %v281 = vmul.f32 %v273, %v135
    %v282 = vmul.f32 %v275, %v136
    %v284 = vsel %vm193, %v158, 0
    %286 = vmatprep.subr.bf16.mxu0 0
    %287 = vmatpush1.bf16.msra.mxu0 0
    %288 = vmatprep.subr.bf16.mxu0 0
    %289 = vmatpush1.bf16.msra.mxu0 0
    %290 = vmatprep.subr.bf16.mxu0 0
    %291 = vmatpush1.bf16.msra.mxu0 0
    %292 = vmatprep.subr.bf16.mxu0 0
    %293 = vmatpush1.bf16.msra.mxu0 0
    %294 = vmatprep.subr.bf16.mxu0 0
    %295 = vmatpush1.bf16.msra.mxu0 0
    %296 = vmatprep.subr.bf16.mxu0 0
    %297 = vmatpush1.bf16.msra.mxu0 0
    %298 = vmatprep.subr.bf16.mxu0 0
    %299 = vmatpush1.bf16.msra.mxu0 0
    %300 = vmatprep.subr.bf16.mxu0 %v160
    %301 = vmatpush1.bf16.msra.mxu0 %v159
    %302 = vmatprep.subr.bf16.mxu0 0
    %303 = vmatpush2.bf16.msra.mxu0 0
    %304 = vmatprep.subr.bf16.mxu0 0
    %305 = vmatpush2.bf16.msra.mxu0 0
    %306 = vmatprep.subr.bf16.mxu0 0
    %307 = vmatpush2.bf16.msra.mxu0 0
    %308 = vmatprep.subr.bf16.mxu0 0
    %309 = vmatpush2.bf16.msra.mxu0 0
    %310 = vmatprep.subr.bf16.mxu0 0
    %311 = vmatpush2.bf16.msra.mxu0 0
    %312 = vmatprep.subr.bf16.mxu0 0
    %313 = vmatpush2.bf16.msra.mxu0 0
    %314 = vmatprep.subr.bf16.mxu0 0
    %315 = vmatpush2.bf16.msra.mxu0 0
    %316 = vmatprep.subr.bf16.mxu0 0
    %317 = vmatpush2.bf16.msra.mxu0 0
    %318 = vmatprep.mubr.bf16.mxu0 0
    %319 = vmatmul.mubr.bf16.gmra.mxu0 %v284
    %v320 = vpop.f32.mrf.mxu0
    %v321 = vadd.f32 %v279, %v320
    %v322 = vpop.f32.mrf.mxu0
    %v323 = vadd.f32 %v280, %v322
    %v324 = vpop.f32.mrf.mxu0
    %v325 = vpop.f32.mrf.mxu0
    %326 = vdwg.mxu0
    %327 = vmatprep.subr.bf16.mxu0 0
    %328 = vmatpush1.bf16.msra.mxu0 0
    %329 = vmatprep.subr.bf16.mxu0 0
    %330 = vmatpush1.bf16.msra.mxu0 0
    %331 = vmatprep.subr.bf16.mxu0 0
    %332 = vmatpush1.bf16.msra.mxu0 0
    %333 = vmatprep.subr.bf16.mxu0 0
    %334 = vmatpush1.bf16.msra.mxu0 0
    %335 = vmatprep.subr.bf16.mxu0 0
    %336 = vmatpush1.bf16.msra.mxu0 0
    %337 = vmatprep.subr.bf16.mxu0 0
    %338 = vmatpush1.bf16.msra.mxu0 0
    %339 = vmatprep.subr.bf16.mxu0 0
    %340 = vmatpush1.bf16.msra.mxu0 0
    %341 = vmatprep.subr.bf16.mxu0 %v162
    %342 = vmatpush1.bf16.msra.mxu0 %v161
    %343 = vmatprep.subr.bf16.mxu0 0
    %344 = vmatpush2.bf16.msra.mxu0 0
    %345 = vmatprep.subr.bf16.mxu0 0
    %346 = vmatpush2.bf16.msra.mxu0 0
    %347 = vmatprep.subr.bf16.mxu0 0
    %348 = vmatpush2.bf16.msra.mxu0 0
    %349 = vmatprep.subr.bf16.mxu0 0
    %350 = vmatpush2.bf16.msra.mxu0 0
    %351 = vmatprep.subr.bf16.mxu0 0
    %352 = vmatpush2.bf16.msra.mxu0 0
    %353 = vmatprep.subr.bf16.mxu0 0
    %354 = vmatpush2.bf16.msra.mxu0 0
    %355 = vmatprep.subr.bf16.mxu0 0
    %356 = vmatpush2.bf16.msra.mxu0 0
    %357 = vmatprep.subr.bf16.mxu0 0
    %358 = vmatpush2.bf16.msra.mxu0 0
    %359 = vmatprep.mubr.bf16.mxu0 0
    %360 = vmatmul.mubr.bf16.gmra.mxu0 %v284
    %v361 = vpop.f32.mrf.mxu0
    %v362 = vadd.f32 %v281, %v361
    %v363 = vpop.f32.mrf.mxu0
    %v364 = vadd.f32 %v282, %v363
    %v365 = vpop.f32.mrf.mxu0
    %v366 = vpop.f32.mrf.mxu0
    %367 = vdwg.mxu0
    %368 = vrot.lane.b32.xlu0 %v149, 16
    %v369 = vpop.permute.xlu0 %368
    %370 = vrot.lane.b32.xlu0 %v153, 16
    %v371 = vpop.permute.xlu0 %370
    %372 = vrot.lane.b32.xlu0 %v150, 16
    %v373 = vpop.permute.xlu0 %372
    %374 = vrot.lane.b32.xlu0 %v154, 16
    %v375 = vpop.permute.xlu0 %374
    %376 = vrot.lane.b32.xlu0 %v151, 16
    %v377 = vpop.permute.xlu0 %376
    %378 = vrot.lane.b32.xlu0 %v155, 16
    %v379 = vpop.permute.xlu0 %378
    %380 = vrot.lane.b32.xlu0 %v152, 16
    %v381 = vpop.permute.xlu0 %380
    %382 = vrot.lane.b32.xlu0 %v156, 16
    %v383 = vpop.permute.xlu0 %382
    %vm384 = vcmp.lt.s32.totalorder %v43, 16
    %v385 = vsel %vm384, %v377, %v381
    %v386 = vsel %vm384, %v379, %v383
    %v387 = vsel %vm384, %v373, %v377
    %v388 = vsel %vm384, %v375, %v379
    %v389 = vsel %vm384, %v369, %v373
    %v390 = vsel %vm384, %v371, %v375
    %v391 = vsel %vm384, %v381, %v369
    %v392 = vsel %vm384, %v383, %v371
    %v393 = vpack.c.bf16 %v392, %v391
    %v394 = vpack.c.bf16 %v390, %v389
    %v395 = vpack.c.bf16 %v388, %v387
    %v396 = vpack.c.bf16 %v386, %v385
    %s397 = scalar_lea.vmem [#allocation2], 2
    %v398 = vld [vmem:[%s397] sm:$0x3]
    %v400 = vsel %vm193, %v398, 0
    %402 = vmatprep.subr.bf16.mxu0 0
    %403 = vmatpush1.bf16.msra.mxu0 0
    %404 = vmatprep.subr.bf16.mxu0 0
    %405 = vmatpush1.bf16.msra.mxu0 0
    %406 = vmatprep.subr.bf16.mxu0 0
    %407 = vmatpush1.bf16.msra.mxu0 0
    %408 = vmatprep.subr.bf16.mxu0 0
    %409 = vmatpush1.bf16.msra.mxu0 0
    %410 = vmatprep.subr.bf16.mxu0 0
    %411 = vmatpush1.bf16.msra.mxu0 0
    %412 = vmatprep.subr.bf16.mxu0 0
    %413 = vmatpush1.bf16.msra.mxu0 0
    %414 = vmatprep.subr.bf16.mxu0 0
    %415 = vmatpush1.bf16.msra.mxu0 0
    %416 = vmatprep.subr.bf16.mxu0 %v394
    %417 = vmatpush1.bf16.msra.mxu0 %v393
    %418 = vmatprep.subr.bf16.mxu0 0
    %419 = vmatpush2.bf16.msra.mxu0 0
    %420 = vmatprep.subr.bf16.mxu0 0
    %421 = vmatpush2.bf16.msra.mxu0 0
    %422 = vmatprep.subr.bf16.mxu0 0
    %423 = vmatpush2.bf16.msra.mxu0 0
    %424 = vmatprep.subr.bf16.mxu0 0
    %425 = vmatpush2.bf16.msra.mxu0 0
    %426 = vmatprep.subr.bf16.mxu0 0
    %427 = vmatpush2.bf16.msra.mxu0 0
    %428 = vmatprep.subr.bf16.mxu0 0
    %429 = vmatpush2.bf16.msra.mxu0 0
    %430 = vmatprep.subr.bf16.mxu0 0
    %431 = vmatpush2.bf16.msra.mxu0 0
    %432 = vmatprep.subr.bf16.mxu0 0
    %433 = vmatpush2.bf16.msra.mxu0 0
    %434 = vmatprep.mubr.bf16.mxu0 0
    %435 = vmatmul.mubr.bf16.gmra.mxu0 %v400
    %v436 = vpop.f32.mrf.mxu0
    %v437 = vadd.f32 0.0, %v436
    %v438 = vpop.f32.mrf.mxu0
    %v439 = vadd.f32 0.0, %v438
    %v440 = vpop.f32.mrf.mxu0
    %v441 = vpop.f32.mrf.mxu0
    %442 = vdwg.mxu0
    %443 = vmatprep.subr.bf16.mxu0 0
    %444 = vmatpush1.bf16.msra.mxu0 0
    %445 = vmatprep.subr.bf16.mxu0 0
    %446 = vmatpush1.bf16.msra.mxu0 0
    %447 = vmatprep.subr.bf16.mxu0 0
    %448 = vmatpush1.bf16.msra.mxu0 0
    %449 = vmatprep.subr.bf16.mxu0 0
    %450 = vmatpush1.bf16.msra.mxu0 0
    %451 = vmatprep.subr.bf16.mxu0 0
    %452 = vmatpush1.bf16.msra.mxu0 0
    %453 = vmatprep.subr.bf16.mxu0 0
    %454 = vmatpush1.bf16.msra.mxu0 0
    %455 = vmatprep.subr.bf16.mxu0 0
    %456 = vmatpush1.bf16.msra.mxu0 0
    %457 = vmatprep.subr.bf16.mxu0 %v396
    %458 = vmatpush1.bf16.msra.mxu0 %v395
    %459 = vmatprep.subr.bf16.mxu0 0
    %460 = vmatpush2.bf16.msra.mxu0 0
    %461 = vmatprep.subr.bf16.mxu0 0
    %462 = vmatpush2.bf16.msra.mxu0 0
    %463 = vmatprep.subr.bf16.mxu0 0
    %464 = vmatpush2.bf16.msra.mxu0 0
    %465 = vmatprep.subr.bf16.mxu0 0
    %466 = vmatpush2.bf16.msra.mxu0 0
    %467 = vmatprep.subr.bf16.mxu0 0
    %468 = vmatpush2.bf16.msra.mxu0 0
    %469 = vmatprep.subr.bf16.mxu0 0
    %470 = vmatpush2.bf16.msra.mxu0 0
    %471 = vmatprep.subr.bf16.mxu0 0
    %472 = vmatpush2.bf16.msra.mxu0 0
    %473 = vmatprep.subr.bf16.mxu0 0
    %474 = vmatpush2.bf16.msra.mxu0 0
    %475 = vmatprep.mubr.bf16.mxu0 0
    %476 = vmatmul.mubr.bf16.gmra.mxu0 %v400
    %v477 = vpop.f32.mrf.mxu0
    %v478 = vadd.f32 0.0, %v477
    %v479 = vpop.f32.mrf.mxu0
    %v480 = vadd.f32 0.0, %v479
    %v481 = vpop.f32.mrf.mxu0
    %v482 = vpop.f32.mrf.mxu0
    %483 = vdwg.mxu0
    %v484 = vmul.f32 %v437, %v105
    %v485 = vmul.f32 %v439, %v106
    %v486 = vmul.f32 %v478, %v107
    %v487 = vmul.f32 %v480, %v108
    %v488 = vadd.f32 %v321, %v484
    %v489 = vadd.f32 %v323, %v485
    %v490 = vadd.f32 %v362, %v486
    %v491 = vadd.f32 %v364, %v487
    %492 = vrot.lane.b32.xlu0 %v149, 15
    %v493 = vpop.permute.xlu0 %492
    %494 = vrot.lane.b32.xlu0 %v153, 15
    %v495 = vpop.permute.xlu0 %494
    %496 = vrot.lane.b32.xlu0 %v150, 15
    %v497 = vpop.permute.xlu0 %496
    %498 = vrot.lane.b32.xlu0 %v154, 15
    %v499 = vpop.permute.xlu0 %498
    %500 = vrot.lane.b32.xlu0 %v151, 15
    %v501 = vpop.permute.xlu0 %500
    %502 = vrot.lane.b32.xlu0 %v155, 15
    %v503 = vpop.permute.xlu0 %502
    %504 = vrot.lane.b32.xlu0 %v152, 15
    %v505 = vpop.permute.xlu0 %504
    %506 = vrot.lane.b32.xlu0 %v156, 15
    %v507 = vpop.permute.xlu0 %506
    %vm508 = vcmp.lt.s32.totalorder %v43, 15
    %v509 = vsel %vm508, %v501, %v505
    %v510 = vsel %vm508, %v503, %v507
    %v511 = vsel %vm508, %v497, %v501
    %v512 = vsel %vm508, %v499, %v503
    %v513 = vsel %vm508, %v493, %v497
    %v514 = vsel %vm508, %v495, %v499
    %v515 = vsel %vm508, %v505, %v493
    %v516 = vsel %vm508, %v507, %v495
    %v517 = vpack.c.bf16 %v516, %v515
    %v518 = vpack.c.bf16 %v514, %v513
    %v519 = vpack.c.bf16 %v512, %v511
    %v520 = vpack.c.bf16 %v510, %v509
    %s521 = scalar_lea.vmem [#allocation2], 4
    %v522 = vld [vmem:[%s521] sm:$0x3]
    %v524 = vsel %vm193, %v522, 0
    %526 = vmatprep.subr.bf16.mxu0 0
    %527 = vmatpush1.bf16.msra.mxu0 0
    %528 = vmatprep.subr.bf16.mxu0 0
    %529 = vmatpush1.bf16.msra.mxu0 0
    %530 = vmatprep.subr.bf16.mxu0 0
    %531 = vmatpush1.bf16.msra.mxu0 0
    %532 = vmatprep.subr.bf16.mxu0 0
    %533 = vmatpush1.bf16.msra.mxu0 0
    %534 = vmatprep.subr.bf16.mxu0 0
    %535 = vmatpush1.bf16.msra.mxu0 0
    %536 = vmatprep.subr.bf16.mxu0 0
    %537 = vmatpush1.bf16.msra.mxu0 0
    %538 = vmatprep.subr.bf16.mxu0 0
    %539 = vmatpush1.bf16.msra.mxu0 0
    %540 = vmatprep.subr.bf16.mxu0 %v518
    %541 = vmatpush1.bf16.msra.mxu0 %v517
    %542 = vmatprep.subr.bf16.mxu0 0
    %543 = vmatpush2.bf16.msra.mxu0 0
    %544 = vmatprep.subr.bf16.mxu0 0
    %545 = vmatpush2.bf16.msra.mxu0 0
    %546 = vmatprep.subr.bf16.mxu0 0
    %547 = vmatpush2.bf16.msra.mxu0 0
    %548 = vmatprep.subr.bf16.mxu0 0
    %549 = vmatpush2.bf16.msra.mxu0 0
    %550 = vmatprep.subr.bf16.mxu0 0
    %551 = vmatpush2.bf16.msra.mxu0 0
    %552 = vmatprep.subr.bf16.mxu0 0
    %553 = vmatpush2.bf16.msra.mxu0 0
    %554 = vmatprep.subr.bf16.mxu0 0
    %555 = vmatpush2.bf16.msra.mxu0 0
    %556 = vmatprep.subr.bf16.mxu0 0
    %557 = vmatpush2.bf16.msra.mxu0 0
    %558 = vmatprep.mubr.bf16.mxu0 0
    %559 = vmatmul.mubr.bf16.gmra.mxu0 %v524
    %v560 = vpop.f32.mrf.mxu0
    %v561 = vadd.f32 0.0, %v560
    %v562 = vpop.f32.mrf.mxu0
    %v563 = vadd.f32 0.0, %v562
    %v564 = vpop.f32.mrf.mxu0
    %v565 = vpop.f32.mrf.mxu0
    %566 = vdwg.mxu0
    %567 = vmatprep.subr.bf16.mxu0 0
    %568 = vmatpush1.bf16.msra.mxu0 0
    %569 = vmatprep.subr.bf16.mxu0 0
    %570 = vmatpush1.bf16.msra.mxu0 0
    %571 = vmatprep.subr.bf16.mxu0 0
    %572 = vmatpush1.bf16.msra.mxu0 0
    %573 = vmatprep.subr.bf16.mxu0 0
    %574 = vmatpush1.bf16.msra.mxu0 0
    %575 = vmatprep.subr.bf16.mxu0 0
    %576 = vmatpush1.bf16.msra.mxu0 0
    %577 = vmatprep.subr.bf16.mxu0 0
    %578 = vmatpush1.bf16.msra.mxu0 0
    %579 = vmatprep.subr.bf16.mxu0 0
    %580 = vmatpush1.bf16.msra.mxu0 0
    %581 = vmatprep.subr.bf16.mxu0 %v520
    %582 = vmatpush1.bf16.msra.mxu0 %v519
    %583 = vmatprep.subr.bf16.mxu0 0
    %584 = vmatpush2.bf16.msra.mxu0 0
    %585 = vmatprep.subr.bf16.mxu0 0
    %586 = vmatpush2.bf16.msra.mxu0 0
    %587 = vmatprep.subr.bf16.mxu0 0
    %588 = vmatpush2.bf16.msra.mxu0 0
    %589 = vmatprep.subr.bf16.mxu0 0
    %590 = vmatpush2.bf16.msra.mxu0 0
    %591 = vmatprep.subr.bf16.mxu0 0
    %592 = vmatpush2.bf16.msra.mxu0 0
    %593 = vmatprep.subr.bf16.mxu0 0
    %594 = vmatpush2.bf16.msra.mxu0 0
    %595 = vmatprep.subr.bf16.mxu0 0
    %596 = vmatpush2.bf16.msra.mxu0 0
    %597 = vmatprep.subr.bf16.mxu0 0
    %598 = vmatpush2.bf16.msra.mxu0 0
    %599 = vmatprep.mubr.bf16.mxu0 0
    %600 = vmatmul.mubr.bf16.gmra.mxu0 %v524
    %v601 = vpop.f32.mrf.mxu0
    %v602 = vadd.f32 0.0, %v601
    %v603 = vpop.f32.mrf.mxu0
    %v604 = vadd.f32 0.0, %v603
    %v605 = vpop.f32.mrf.mxu0
    %v606 = vpop.f32.mrf.mxu0
    %607 = vdwg.mxu0
    %v608 = vmul.f32 %v561, %v137
    %v609 = vmul.f32 %v563, %v138
    %v610 = vmul.f32 %v602, %v139
    %v611 = vmul.f32 %v604, %v140
    %v612 = vadd.f32 %v488, %v608
    %v613 = vadd.f32 %v489, %v609
    %v614 = vadd.f32 %v490, %v610
    %v615 = vadd.f32 %v491, %v611
    %616 = vrot.lane.b32.xlu0 %v149, 1
    %v617 = vpop.permute.xlu0 %616
    %618 = vrot.lane.b32.xlu0 %v153, 1
    %v619 = vpop.permute.xlu0 %618
    %620 = vrot.lane.b32.xlu0 %v150, 1
    %v621 = vpop.permute.xlu0 %620
    %622 = vrot.lane.b32.xlu0 %v154, 1
    %v623 = vpop.permute.xlu0 %622
    %624 = vrot.lane.b32.xlu0 %v151, 1
    %v625 = vpop.permute.xlu0 %624
    %626 = vrot.lane.b32.xlu0 %v155, 1
    %v627 = vpop.permute.xlu0 %626
    %628 = vrot.lane.b32.xlu0 %v152, 1
    %v629 = vpop.permute.xlu0 %628
    %630 = vrot.lane.b32.xlu0 %v156, 1
    %v631 = vpop.permute.xlu0 %630
    %vm632 = vcmp.lt.s32.totalorder %v43, 1
    %v633 = vsel %vm632, %v625, %v629
    %v634 = vsel %vm632, %v627, %v631
    %v635 = vsel %vm632, %v621, %v625
    %v636 = vsel %vm632, %v623, %v627
    %v637 = vsel %vm632, %v617, %v621
    %v638 = vsel %vm632, %v619, %v623
    %v639 = vsel %vm632, %v629, %v617
    %v640 = vsel %vm632, %v631, %v619
    %v641 = vpack.c.bf16 %v640, %v639
    %v642 = vpack.c.bf16 %v638, %v637
    %v643 = vpack.c.bf16 %v636, %v635
    %v644 = vpack.c.bf16 %v634, %v633
    %s645 = scalar_lea.vmem [#allocation2], 6
    %v646 = vld [vmem:[%s645] sm:$0x3]
    %v648 = vsel %vm193, %v646, 0
    %650 = vmatprep.subr.bf16.mxu0 0
    %651 = vmatpush1.bf16.msra.mxu0 0
    %652 = vmatprep.subr.bf16.mxu0 0
    %653 = vmatpush1.bf16.msra.mxu0 0
    %654 = vmatprep.subr.bf16.mxu0 0
    %655 = vmatpush1.bf16.msra.mxu0 0
    %656 = vmatprep.subr.bf16.mxu0 0
    %657 = vmatpush1.bf16.msra.mxu0 0
    %658 = vmatprep.subr.bf16.mxu0 0
    %659 = vmatpush1.bf16.msra.mxu0 0
    %660 = vmatprep.subr.bf16.mxu0 0
    %661 = vmatpush1.bf16.msra.mxu0 0
    %662 = vmatprep.subr.bf16.mxu0 0
    %663 = vmatpush1.bf16.msra.mxu0 0
    %664 = vmatprep.subr.bf16.mxu0 %v642
    %665 = vmatpush1.bf16.msra.mxu0 %v641
    %666 = vmatprep.subr.bf16.mxu0 0
    %667 = vmatpush2.bf16.msra.mxu0 0
    %668 = vmatprep.subr.bf16.mxu0 0
    %669 = vmatpush2.bf16.msra.mxu0 0
    %670 = vmatprep.subr.bf16.mxu0 0
    %671 = vmatpush2.bf16.msra.mxu0 0
    %672 = vmatprep.subr.bf16.mxu0 0
    %673 = vmatpush2.bf16.msra.mxu0 0
    %674 = vmatprep.subr.bf16.mxu0 0
    %675 = vmatpush2.bf16.msra.mxu0 0
    %676 = vmatprep.subr.bf16.mxu0 0
    %677 = vmatpush2.bf16.msra.mxu0 0
    %678 = vmatprep.subr.bf16.mxu0 0
    %679 = vmatpush2.bf16.msra.mxu0 0
    %680 = vmatprep.subr.bf16.mxu0 0
    %681 = vmatpush2.bf16.msra.mxu0 0
    %682 = vmatprep.mubr.bf16.mxu0 0
    %683 = vmatmul.mubr.bf16.gmra.mxu0 %v648
    %v684 = vpop.f32.mrf.mxu0
    %v685 = vadd.f32 0.0, %v684
    %v686 = vpop.f32.mrf.mxu0
    %v687 = vadd.f32 0.0, %v686
    %v688 = vpop.f32.mrf.mxu0
    %v689 = vpop.f32.mrf.mxu0
    %690 = vdwg.mxu0
    %691 = vmatprep.subr.bf16.mxu0 0
    %692 = vmatpush1.bf16.msra.mxu0 0
    %693 = vmatprep.subr.bf16.mxu0 0
    %694 = vmatpush1.bf16.msra.mxu0 0
    %695 = vmatprep.subr.bf16.mxu0 0
    %696 = vmatpush1.bf16.msra.mxu0 0
    %697 = vmatprep.subr.bf16.mxu0 0
    %698 = vmatpush1.bf16.msra.mxu0 0
    %699 = vmatprep.subr.bf16.mxu0 0
    %700 = vmatpush1.bf16.msra.mxu0 0
    %701 = vmatprep.subr.bf16.mxu0 0
    %702 = vmatpush1.bf16.msra.mxu0 0
    %703 = vmatprep.subr.bf16.mxu0 0
    %704 = vmatpush1.bf16.msra.mxu0 0
    %705 = vmatprep.subr.bf16.mxu0 %v644
    %706 = vmatpush1.bf16.msra.mxu0 %v643
    %707 = vmatprep.subr.bf16.mxu0 0
    %708 = vmatpush2.bf16.msra.mxu0 0
    %709 = vmatprep.subr.bf16.mxu0 0
    %710 = vmatpush2.bf16.msra.mxu0 0
    %711 = vmatprep.subr.bf16.mxu0 0
    %712 = vmatpush2.bf16.msra.mxu0 0
    %713 = vmatprep.subr.bf16.mxu0 0
    %714 = vmatpush2.bf16.msra.mxu0 0
    %715 = vmatprep.subr.bf16.mxu0 0
    %716 = vmatpush2.bf16.msra.mxu0 0
    %717 = vmatprep.subr.bf16.mxu0 0
    %718 = vmatpush2.bf16.msra.mxu0 0
    %719 = vmatprep.subr.bf16.mxu0 0
    %720 = vmatpush2.bf16.msra.mxu0 0
    %721 = vmatprep.subr.bf16.mxu0 0
    %722 = vmatpush2.bf16.msra.mxu0 0
    %723 = vmatprep.mubr.bf16.mxu0 0
    %724 = vmatmul.mubr.bf16.gmra.mxu0 %v648
    %v725 = vpop.f32.mrf.mxu0
    %v726 = vadd.f32 0.0, %v725
    %v727 = vpop.f32.mrf.mxu0
    %v728 = vadd.f32 0.0, %v727
    %v729 = vpop.f32.mrf.mxu0
    %v730 = vpop.f32.mrf.mxu0
    %731 = vdwg.mxu0
    %v732 = vmul.f32 %v685, %v121
    %v733 = vmul.f32 %v687, %v122
    %v734 = vmul.f32 %v726, %v123
    %v735 = vmul.f32 %v728, %v124
    %v736 = vadd.f32 %v612, %v732
    %v737 = vadd.f32 %v613, %v733
    %v738 = vadd.f32 %v614, %v734
    %v739 = vadd.f32 %v615, %v735
    %740 = vrot.lane.b32.xlu0 %v149, 127
    %v741 = vpop.permute.xlu0 %740
    %742 = vrot.lane.b32.xlu0 %v153, 127
    %v743 = vpop.permute.xlu0 %742
    %744 = vrot.lane.b32.xlu0 %v150, 127
    %v745 = vpop.permute.xlu0 %744
    %746 = vrot.lane.b32.xlu0 %v154, 127
    %v747 = vpop.permute.xlu0 %746
    %748 = vrot.lane.b32.xlu0 %v151, 127
    %v749 = vpop.permute.xlu0 %748
    %750 = vrot.lane.b32.xlu0 %v155, 127
    %v751 = vpop.permute.xlu0 %750
    %752 = vrot.lane.b32.xlu0 %v152, 127
    %v753 = vpop.permute.xlu0 %752
    %754 = vrot.lane.b32.xlu0 %v156, 127
    %v755 = vpop.permute.xlu0 %754
    %vm756 = vcmp.lt.s32.totalorder %v43, 127
    %v757 = vsel %vm756, %v749, %v753
    %v758 = vsel %vm756, %v751, %v755
    %v759 = vsel %vm756, %v745, %v749
    %v760 = vsel %vm756, %v747, %v751
    %v761 = vsel %vm756, %v741, %v745
    %v762 = vsel %vm756, %v743, %v747
    %v763 = vsel %vm756, %v753, %v741
    %v764 = vsel %vm756, %v755, %v743
    %v765 = vpack.c.bf16 %v762, %v761
    %v766 = vpack.c.bf16 %v760, %v759
    %v767 = vpack.c.bf16 %v758, %v757
    %v768 = vpack.c.bf16 %v764, %v763
    %s769 = scalar_lea.vmem [#allocation2], 10
    %v770 = vld [vmem:[%s769] sm:$0x3]
    %v772 = vsel %vm193, %v770, 0
    %774 = vmatprep.subr.bf16.mxu0 0
    %775 = vmatpush1.bf16.msra.mxu0 0
    %776 = vmatprep.subr.bf16.mxu0 0
    %777 = vmatpush1.bf16.msra.mxu0 0
    %778 = vmatprep.subr.bf16.mxu0 0
    %779 = vmatpush1.bf16.msra.mxu0 0
    %780 = vmatprep.subr.bf16.mxu0 0
    %781 = vmatpush1.bf16.msra.mxu0 0
    %782 = vmatprep.subr.bf16.mxu0 0
    %783 = vmatpush1.bf16.msra.mxu0 0
    %784 = vmatprep.subr.bf16.mxu0 0
    %785 = vmatpush1.bf16.msra.mxu0 0
    %786 = vmatprep.subr.bf16.mxu0 0
    %787 = vmatpush1.bf16.msra.mxu0 0
    %788 = vmatprep.subr.bf16.mxu0 %v766
    %789 = vmatpush1.bf16.msra.mxu0 %v765
    %790 = vmatprep.subr.bf16.mxu0 0
    %791 = vmatpush2.bf16.msra.mxu0 0
    %792 = vmatprep.subr.bf16.mxu0 0
    %793 = vmatpush2.bf16.msra.mxu0 0
    %794 = vmatprep.subr.bf16.mxu0 0
    %795 = vmatpush2.bf16.msra.mxu0 0
    %796 = vmatprep.subr.bf16.mxu0 0
    %797 = vmatpush2.bf16.msra.mxu0 0
    %798 = vmatprep.subr.bf16.mxu0 0
    %799 = vmatpush2.bf16.msra.mxu0 0
    %800 = vmatprep.subr.bf16.mxu0 0
    %801 = vmatpush2.bf16.msra.mxu0 0
    %802 = vmatprep.subr.bf16.mxu0 0
    %803 = vmatpush2.bf16.msra.mxu0 0
    %804 = vmatprep.subr.bf16.mxu0 0
    %805 = vmatpush2.bf16.msra.mxu0 0
    %806 = vmatprep.mubr.bf16.mxu0 0
    %807 = vmatmul.mubr.bf16.gmra.mxu0 %v772
    %v808 = vpop.f32.mrf.mxu0
    %v809 = vadd.f32 0.0, %v808
    %v810 = vpop.f32.mrf.mxu0
    %v811 = vadd.f32 0.0, %v810
    %v812 = vpop.f32.mrf.mxu0
    %v813 = vpop.f32.mrf.mxu0
    %814 = vdwg.mxu0
    %815 = vmatprep.subr.bf16.mxu0 0
    %816 = vmatpush1.bf16.msra.mxu0 0
    %817 = vmatprep.subr.bf16.mxu0 0
    %818 = vmatpush1.bf16.msra.mxu0 0
    %819 = vmatprep.subr.bf16.mxu0 0
    %820 = vmatpush1.bf16.msra.mxu0 0
    %821 = vmatprep.subr.bf16.mxu0 0
    %822 = vmatpush1.bf16.msra.mxu0 0
    %823 = vmatprep.subr.bf16.mxu0 0
    %824 = vmatpush1.bf16.msra.mxu0 0
    %825 = vmatprep.subr.bf16.mxu0 0
    %826 = vmatpush1.bf16.msra.mxu0 0
    %827 = vmatprep.subr.bf16.mxu0 0
    %828 = vmatpush1.bf16.msra.mxu0 0
    %829 = vmatprep.subr.bf16.mxu0 %v768
    %830 = vmatpush1.bf16.msra.mxu0 %v767
    %831 = vmatprep.subr.bf16.mxu0 0
    %832 = vmatpush2.bf16.msra.mxu0 0
    %833 = vmatprep.subr.bf16.mxu0 0
    %834 = vmatpush2.bf16.msra.mxu0 0
    %835 = vmatprep.subr.bf16.mxu0 0
    %836 = vmatpush2.bf16.msra.mxu0 0
    %837 = vmatprep.subr.bf16.mxu0 0
    %838 = vmatpush2.bf16.msra.mxu0 0
    %839 = vmatprep.subr.bf16.mxu0 0
    %840 = vmatpush2.bf16.msra.mxu0 0
    %841 = vmatprep.subr.bf16.mxu0 0
    %842 = vmatpush2.bf16.msra.mxu0 0
    %843 = vmatprep.subr.bf16.mxu0 0
    %844 = vmatpush2.bf16.msra.mxu0 0
    %845 = vmatprep.subr.bf16.mxu0 0
    %846 = vmatpush2.bf16.msra.mxu0 0
    %847 = vmatprep.mubr.bf16.mxu0 0
    %848 = vmatmul.mubr.bf16.gmra.mxu0 %v772
    %v849 = vpop.f32.mrf.mxu0
    %v850 = vadd.f32 0.0, %v849
    %v851 = vpop.f32.mrf.mxu0
    %v852 = vadd.f32 0.0, %v851
    %v853 = vpop.f32.mrf.mxu0
    %v854 = vpop.f32.mrf.mxu0
    %855 = vdwg.mxu0
    %v856 = vmul.f32 %v809, %v129
    %v857 = vmul.f32 %v811, %v130
    %v858 = vmul.f32 %v850, %v131
    %v859 = vmul.f32 %v852, %v132
    %v860 = vadd.f32 %v736, %v856
    %v861 = vadd.f32 %v737, %v857
    %v862 = vadd.f32 %v738, %v858
    %v863 = vadd.f32 %v739, %v859
    %864 = vrot.lane.b32.xlu0 %v149, 113
    %v865 = vpop.permute.xlu0 %864
    %866 = vrot.lane.b32.xlu0 %v153, 113
    %v867 = vpop.permute.xlu0 %866
    %868 = vrot.lane.b32.xlu0 %v150, 113
    %v869 = vpop.permute.xlu0 %868
    %870 = vrot.lane.b32.xlu0 %v154, 113
    %v871 = vpop.permute.xlu0 %870
    %872 = vrot.lane.b32.xlu0 %v151, 113
    %v873 = vpop.permute.xlu0 %872
    %874 = vrot.lane.b32.xlu0 %v155, 113
    %v875 = vpop.permute.xlu0 %874
    %876 = vrot.lane.b32.xlu0 %v152, 113
    %v877 = vpop.permute.xlu0 %876
    %878 = vrot.lane.b32.xlu0 %v156, 113
    %v879 = vpop.permute.xlu0 %878
    %vm880 = vcmp.lt.s32.totalorder %v43, 113
    %v881 = vsel %vm880, %v873, %v877
    %v882 = vsel %vm880, %v875, %v879
    %v883 = vsel %vm880, %v869, %v873
    %v884 = vsel %vm880, %v871, %v875
    %v885 = vsel %vm880, %v865, %v869
    %v886 = vsel %vm880, %v867, %v871
    %v887 = vsel %vm880, %v877, %v865
    %v888 = vsel %vm880, %v879, %v867
    %v889 = vpack.c.bf16 %v886, %v885
    %v890 = vpack.c.bf16 %v884, %v883
    %v891 = vpack.c.bf16 %v882, %v881
    %v892 = vpack.c.bf16 %v888, %v887
    %s893 = scalar_lea.vmem [#allocation2], 12
    %v894 = vld [vmem:[%s893] sm:$0x3]
    %v896 = vsel %vm193, %v894, 0
    %898 = vmatprep.subr.bf16.mxu0 0
    %899 = vmatpush1.bf16.msra.mxu0 0
    %900 = vmatprep.subr.bf16.mxu0 0
    %901 = vmatpush1.bf16.msra.mxu0 0
    %902 = vmatprep.subr.bf16.mxu0 0
    %903 = vmatpush1.bf16.msra.mxu0 0
    %904 = vmatprep.subr.bf16.mxu0 0
    %905 = vmatpush1.bf16.msra.mxu0 0
    %906 = vmatprep.subr.bf16.mxu0 0
    %907 = vmatpush1.bf16.msra.mxu0 0
    %908 = vmatprep.subr.bf16.mxu0 0
    %909 = vmatpush1.bf16.msra.mxu0 0
    %910 = vmatprep.subr.bf16.mxu0 0
    %911 = vmatpush1.bf16.msra.mxu0 0
    %912 = vmatprep.subr.bf16.mxu0 %v890
    %913 = vmatpush1.bf16.msra.mxu0 %v889
    %914 = vmatprep.subr.bf16.mxu0 0
    %915 = vmatpush2.bf16.msra.mxu0 0
    %916 = vmatprep.subr.bf16.mxu0 0
    %917 = vmatpush2.bf16.msra.mxu0 0
    %918 = vmatprep.subr.bf16.mxu0 0
    %919 = vmatpush2.bf16.msra.mxu0 0
    %920 = vmatprep.subr.bf16.mxu0 0
    %921 = vmatpush2.bf16.msra.mxu0 0
    %922 = vmatprep.subr.bf16.mxu0 0
    %923 = vmatpush2.bf16.msra.mxu0 0
    %924 = vmatprep.subr.bf16.mxu0 0
    %925 = vmatpush2.bf16.msra.mxu0 0
    %926 = vmatprep.subr.bf16.mxu0 0
    %927 = vmatpush2.bf16.msra.mxu0 0
    %928 = vmatprep.subr.bf16.mxu0 0
    %929 = vmatpush2.bf16.msra.mxu0 0
    %930 = vmatprep.mubr.bf16.mxu0 0
    %931 = vmatmul.mubr.bf16.gmra.mxu0 %v896
    %v932 = vpop.f32.mrf.mxu0
    %v933 = vadd.f32 0.0, %v932
    %v934 = vpop.f32.mrf.mxu0
    %v935 = vadd.f32 0.0, %v934
    %v936 = vpop.f32.mrf.mxu0
    %v937 = vpop.f32.mrf.mxu0
    %938 = vdwg.mxu0
    %939 = vmatprep.subr.bf16.mxu0 0
    %940 = vmatpush1.bf16.msra.mxu0 0
    %941 = vmatprep.subr.bf16.mxu0 0
    %942 = vmatpush1.bf16.msra.mxu0 0
    %943 = vmatprep.subr.bf16.mxu0 0
    %944 = vmatpush1.bf16.msra.mxu0 0
    %945 = vmatprep.subr.bf16.mxu0 0
    %946 = vmatpush1.bf16.msra.mxu0 0
    %947 = vmatprep.subr.bf16.mxu0 0
    %948 = vmatpush1.bf16.msra.mxu0 0
    %949 = vmatprep.subr.bf16.mxu0 0
    %950 = vmatpush1.bf16.msra.mxu0 0
    %951 = vmatprep.subr.bf16.mxu0 0
    %952 = vmatpush1.bf16.msra.mxu0 0
    %953 = vmatprep.subr.bf16.mxu0 %v892
    %954 = vmatpush1.bf16.msra.mxu0 %v891
    %955 = vmatprep.subr.bf16.mxu0 0
    %956 = vmatpush2.bf16.msra.mxu0 0
    %957 = vmatprep.subr.bf16.mxu0 0
    %958 = vmatpush2.bf16.msra.mxu0 0
    %959 = vmatprep.subr.bf16.mxu0 0
    %960 = vmatpush2.bf16.msra.mxu0 0
    %961 = vmatprep.subr.bf16.mxu0 0
    %962 = vmatpush2.bf16.msra.mxu0 0
    %963 = vmatprep.subr.bf16.mxu0 0
    %964 = vmatpush2.bf16.msra.mxu0 0
    %965 = vmatprep.subr.bf16.mxu0 0
    %966 = vmatpush2.bf16.msra.mxu0 0
    %967 = vmatprep.subr.bf16.mxu0 0
    %968 = vmatpush2.bf16.msra.mxu0 0
    %969 = vmatprep.subr.bf16.mxu0 0
    %970 = vmatpush2.bf16.msra.mxu0 0
    %971 = vmatprep.mubr.bf16.mxu0 0
    %972 = vmatmul.mubr.bf16.gmra.mxu0 %v896
    %v973 = vpop.f32.mrf.mxu0
    %v974 = vadd.f32 0.0, %v973
    %v975 = vpop.f32.mrf.mxu0
    %v976 = vadd.f32 0.0, %v975
    %v977 = vpop.f32.mrf.mxu0
    %v978 = vpop.f32.mrf.mxu0
    %979 = vdwg.mxu0
    %v980 = vmul.f32 %v933, %v141
    %v981 = vmul.f32 %v935, %v142
    %v982 = vmul.f32 %v974, %v143
    %v983 = vmul.f32 %v976, %v144
    %v984 = vadd.f32 %v860, %v980
    %v985 = vadd.f32 %v861, %v981
    %v986 = vadd.f32 %v862, %v982
    %v987 = vadd.f32 %v863, %v983
    %988 = vrot.lane.b32.xlu0 %v149, 112
    %v989 = vpop.permute.xlu0 %988
    %990 = vrot.lane.b32.xlu0 %v153, 112
    %v991 = vpop.permute.xlu0 %990
    %992 = vrot.lane.b32.xlu0 %v150, 112
    %v993 = vpop.permute.xlu0 %992
    %994 = vrot.lane.b32.xlu0 %v154, 112
    %v995 = vpop.permute.xlu0 %994
    %996 = vrot.lane.b32.xlu0 %v151, 112
    %v997 = vpop.permute.xlu0 %996
    %998 = vrot.lane.b32.xlu0 %v155, 112
    %v999 = vpop.permute.xlu0 %998
    %1000 = vrot.lane.b32.xlu0 %v152, 112
    %v1001 = vpop.permute.xlu0 %1000
    %1002 = vrot.lane.b32.xlu0 %v156, 112
    %v1003 = vpop.permute.xlu0 %1002
    %vm1004 = vcmp.lt.s32.totalorder %v43, 112
    %v1005 = vsel %vm1004, %v997, %v1001
    %v1006 = vsel %vm1004, %v999, %v1003
    %v1007 = vsel %vm1004, %v993, %v997
    %v1008 = vsel %vm1004, %v995, %v999
    %v1009 = vsel %vm1004, %v989, %v993
    %v1010 = vsel %vm1004, %v991, %v995
    %v1011 = vsel %vm1004, %v1001, %v989
    %v1012 = vsel %vm1004, %v1003, %v991
    %v1013 = vpack.c.bf16 %v1010, %v1009
    %v1014 = vpack.c.bf16 %v1008, %v1007
    %v1015 = vpack.c.bf16 %v1006, %v1005
    %v1016 = vpack.c.bf16 %v1012, %v1011
    %s1017 = scalar_lea.vmem [#allocation2], 14
    %v1018 = vld [vmem:[%s1017] sm:$0x3]
    %v1020 = vsel %vm193, %v1018, 0
    %1022 = vmatprep.subr.bf16.mxu0 0
    %1023 = vmatpush1.bf16.msra.mxu0 0
    %1024 = vmatprep.subr.bf16.mxu0 0
    %1025 = vmatpush1.bf16.msra.mxu0 0
    %1026 = vmatprep.subr.bf16.mxu0 0
    %1027 = vmatpush1.bf16.msra.mxu0 0
    %1028 = vmatprep.subr.bf16.mxu0 0
    %1029 = vmatpush1.bf16.msra.mxu0 0
    %1030 = vmatprep.subr.bf16.mxu0 0
    %1031 = vmatpush1.bf16.msra.mxu0 0
    %1032 = vmatprep.subr.bf16.mxu0 0
    %1033 = vmatpush1.bf16.msra.mxu0 0
    %1034 = vmatprep.subr.bf16.mxu0 0
    %1035 = vmatpush1.bf16.msra.mxu0 0
    %1036 = vmatprep.subr.bf16.mxu0 %v1014
    %1037 = vmatpush1.bf16.msra.mxu0 %v1013
    %1038 = vmatprep.subr.bf16.mxu0 0
    %1039 = vmatpush2.bf16.msra.mxu0 0
    %1040 = vmatprep.subr.bf16.mxu0 0
    %1041 = vmatpush2.bf16.msra.mxu0 0
    %1042 = vmatprep.subr.bf16.mxu0 0
    %1043 = vmatpush2.bf16.msra.mxu0 0
    %1044 = vmatprep.subr.bf16.mxu0 0
    %1045 = vmatpush2.bf16.msra.mxu0 0
    %1046 = vmatprep.subr.bf16.mxu0 0
    %1047 = vmatpush2.bf16.msra.mxu0 0
    %1048 = vmatprep.subr.bf16.mxu0 0
    %1049 = vmatpush2.bf16.msra.mxu0 0
    %1050 = vmatprep.subr.bf16.mxu0 0
    %1051 = vmatpush2.bf16.msra.mxu0 0
    %1052 = vmatprep.subr.bf16.mxu0 0
    %1053 = vmatpush2.bf16.msra.mxu0 0
    %1054 = vmatprep.mubr.bf16.mxu0 0
    %1055 = vmatmul.mubr.bf16.gmra.mxu0 %v1020
    %v1056 = vpop.f32.mrf.mxu0
    %v1057 = vadd.f32 0.0, %v1056
    %v1058 = vpop.f32.mrf.mxu0
    %v1059 = vadd.f32 0.0, %v1058
    %v1060 = vpop.f32.mrf.mxu0
    %v1061 = vpop.f32.mrf.mxu0
    %1062 = vdwg.mxu0
    %1063 = vmatprep.subr.bf16.mxu0 0
    %1064 = vmatpush1.bf16.msra.mxu0 0
    %1065 = vmatprep.subr.bf16.mxu0 0
    %1066 = vmatpush1.bf16.msra.mxu0 0
    %1067 = vmatprep.subr.bf16.mxu0 0
    %1068 = vmatpush1.bf16.msra.mxu0 0
    %1069 = vmatprep.subr.bf16.mxu0 0
    %1070 = vmatpush1.bf16.msra.mxu0 0
    %1071 = vmatprep.subr.bf16.mxu0 0
    %1072 = vmatpush1.bf16.msra.mxu0 0
    %1073 = vmatprep.subr.bf16.mxu0 0
    %1074 = vmatpush1.bf16.msra.mxu0 0
    %1075 = vmatprep.subr.bf16.mxu0 0
    %1076 = vmatpush1.bf16.msra.mxu0 0
    %1077 = vmatprep.subr.bf16.mxu0 %v1016
    %1078 = vmatpush1.bf16.msra.mxu0 %v1015
    %1079 = vmatprep.subr.bf16.mxu0 0
    %1080 = vmatpush2.bf16.msra.mxu0 0
    %1081 = vmatprep.subr.bf16.mxu0 0
    %1082 = vmatpush2.bf16.msra.mxu0 0
    %1083 = vmatprep.subr.bf16.mxu0 0
    %1084 = vmatpush2.bf16.msra.mxu0 0
    %1085 = vmatprep.subr.bf16.mxu0 0
    %1086 = vmatpush2.bf16.msra.mxu0 0
    %1087 = vmatprep.subr.bf16.mxu0 0
    %1088 = vmatpush2.bf16.msra.mxu0 0
    %1089 = vmatprep.subr.bf16.mxu0 0
    %1090 = vmatpush2.bf16.msra.mxu0 0
    %1091 = vmatprep.subr.bf16.mxu0 0
    %1092 = vmatpush2.bf16.msra.mxu0 0
    %1093 = vmatprep.subr.bf16.mxu0 0
    %1094 = vmatpush2.bf16.msra.mxu0 0
    %1095 = vmatprep.mubr.bf16.mxu0 0
    %1096 = vmatmul.mubr.bf16.gmra.mxu0 %v1020
    %v1097 = vpop.f32.mrf.mxu0
    %v1098 = vadd.f32 0.0, %v1097
    %v1099 = vpop.f32.mrf.mxu0
    %v1100 = vadd.f32 0.0, %v1099
    %v1101 = vpop.f32.mrf.mxu0
    %v1102 = vpop.f32.mrf.mxu0
    %1103 = vdwg.mxu0
    %v1104 = vmul.f32 %v1057, %v113
    %v1105 = vmul.f32 %v1059, %v114
    %v1106 = vmul.f32 %v1098, %v115
    %v1107 = vmul.f32 %v1100, %v116
    %v1108 = vadd.f32 %v984, %v1104
    %v1109 = vadd.f32 %v985, %v1105
    %v1110 = vadd.f32 %v986, %v1106
    %v1111 = vadd.f32 %v987, %v1107
    %1112 = vrot.lane.b32.xlu0 %v149, 111
    %v1113 = vpop.permute.xlu0 %1112
    %1114 = vrot.lane.b32.xlu0 %v153, 111
    %v1115 = vpop.permute.xlu0 %1114
    %1116 = vrot.lane.b32.xlu0 %v150, 111
    %v1117 = vpop.permute.xlu0 %1116
    %1118 = vrot.lane.b32.xlu0 %v154, 111
    %v1119 = vpop.permute.xlu0 %1118
    %1120 = vrot.lane.b32.xlu0 %v151, 111
    %v1121 = vpop.permute.xlu0 %1120
    %1122 = vrot.lane.b32.xlu0 %v155, 111
    %v1123 = vpop.permute.xlu0 %1122
    %1124 = vrot.lane.b32.xlu0 %v152, 111
    %v1125 = vpop.permute.xlu0 %1124
    %1126 = vrot.lane.b32.xlu0 %v156, 111
    %v1127 = vpop.permute.xlu0 %1126
    %vm1128 = vcmp.lt.s32.totalorder %v43, 111
    %v1129 = vsel %vm1128, %v1121, %v1125
    %v1130 = vsel %vm1128, %v1123, %v1127
    %v1131 = vsel %vm1128, %v1117, %v1121
    %v1132 = vsel %vm1128, %v1119, %v1123
    %v1133 = vsel %vm1128, %v1113, %v1117
    %v1134 = vsel %vm1128, %v1115, %v1119
    %v1135 = vsel %vm1128, %v1125, %v1113
    %v1136 = vsel %vm1128, %v1127, %v1115
    %v1137 = vpack.c.bf16 %v1134, %v1133
    %v1138 = vpack.c.bf16 %v1132, %v1131
    %v1139 = vpack.c.bf16 %v1130, %v1129
    %v1140 = vpack.c.bf16 %v1136, %v1135
    %s1141 = scalar_lea.vmem [#allocation2], 16
    %v1142 = vld [vmem:[%s1141] sm:$0x3]
    %v1144 = vsel %vm193, %v1142, 0
    %1146 = vmatprep.subr.bf16.mxu0 0
    %1147 = vmatpush1.bf16.msra.mxu0 0
    %1148 = vmatprep.subr.bf16.mxu0 0
    %1149 = vmatpush1.bf16.msra.mxu0 0
    %1150 = vmatprep.subr.bf16.mxu0 0
    %1151 = vmatpush1.bf16.msra.mxu0 0
    %1152 = vmatprep.subr.bf16.mxu0 0
    %1153 = vmatpush1.bf16.msra.mxu0 0
    %1154 = vmatprep.subr.bf16.mxu0 0
    %1155 = vmatpush1.bf16.msra.mxu0 0
    %1156 = vmatprep.subr.bf16.mxu0 0
    %1157 = vmatpush1.bf16.msra.mxu0 0
    %1158 = vmatprep.subr.bf16.mxu0 0
    %1159 = vmatpush1.bf16.msra.mxu0 0
    %1160 = vmatprep.subr.bf16.mxu0 %v1138
    %1161 = vmatpush1.bf16.msra.mxu0 %v1137
    %1162 = vmatprep.subr.bf16.mxu0 0
    %1163 = vmatpush2.bf16.msra.mxu0 0
    %1164 = vmatprep.subr.bf16.mxu0 0
    %1165 = vmatpush2.bf16.msra.mxu0 0
    %1166 = vmatprep.subr.bf16.mxu0 0
    %1167 = vmatpush2.bf16.msra.mxu0 0
    %1168 = vmatprep.subr.bf16.mxu0 0
    %1169 = vmatpush2.bf16.msra.mxu0 0
    %1170 = vmatprep.subr.bf16.mxu0 0
    %1171 = vmatpush2.bf16.msra.mxu0 0
    %1172 = vmatprep.subr.bf16.mxu0 0
    %1173 = vmatpush2.bf16.msra.mxu0 0
    %1174 = vmatprep.subr.bf16.mxu0 0
    %1175 = vmatpush2.bf16.msra.mxu0 0
    %1176 = vmatprep.subr.bf16.mxu0 0
    %1177 = vmatpush2.bf16.msra.mxu0 0
    %1178 = vmatprep.mubr.bf16.mxu0 0
    %1179 = vmatmul.mubr.bf16.gmra.mxu0 %v1144
    %v1180 = vpop.f32.mrf.mxu0
    %v1181 = vadd.f32 0.0, %v1180
    %v1182 = vpop.f32.mrf.mxu0
    %v1183 = vadd.f32 0.0, %v1182
    %v1184 = vpop.f32.mrf.mxu0
    %v1185 = vpop.f32.mrf.mxu0
    %1186 = vdwg.mxu0
    %1187 = vmatprep.subr.bf16.mxu0 0
    %1188 = vmatpush1.bf16.msra.mxu0 0
    %1189 = vmatprep.subr.bf16.mxu0 0
    %1190 = vmatpush1.bf16.msra.mxu0 0
    %1191 = vmatprep.subr.bf16.mxu0 0
    %1192 = vmatpush1.bf16.msra.mxu0 0
    %1193 = vmatprep.subr.bf16.mxu0 0
    %1194 = vmatpush1.bf16.msra.mxu0 0
    %1195 = vmatprep.subr.bf16.mxu0 0
    %1196 = vmatpush1.bf16.msra.mxu0 0
    %1197 = vmatprep.subr.bf16.mxu0 0
    %1198 = vmatpush1.bf16.msra.mxu0 0
    %1199 = vmatprep.subr.bf16.mxu0 0
    %1200 = vmatpush1.bf16.msra.mxu0 0
    %1201 = vmatprep.subr.bf16.mxu0 %v1140
    %1202 = vmatpush1.bf16.msra.mxu0 %v1139
    %1203 = vmatprep.subr.bf16.mxu0 0
    %1204 = vmatpush2.bf16.msra.mxu0 0
    %1205 = vmatprep.subr.bf16.mxu0 0
    %1206 = vmatpush2.bf16.msra.mxu0 0
    %1207 = vmatprep.subr.bf16.mxu0 0
    %1208 = vmatpush2.bf16.msra.mxu0 0
    %1209 = vmatprep.subr.bf16.mxu0 0
    %1210 = vmatpush2.bf16.msra.mxu0 0
    %1211 = vmatprep.subr.bf16.mxu0 0
    %1212 = vmatpush2.bf16.msra.mxu0 0
    %1213 = vmatprep.subr.bf16.mxu0 0
    %1214 = vmatpush2.bf16.msra.mxu0 0
    %1215 = vmatprep.subr.bf16.mxu0 0
    %1216 = vmatpush2.bf16.msra.mxu0 0
    %1217 = vmatprep.subr.bf16.mxu0 0
    %1218 = vmatpush2.bf16.msra.mxu0 0
    %1219 = vmatprep.mubr.bf16.mxu0 0
    %1220 = vmatmul.mubr.bf16.gmra.mxu0 %v1144
    %v1221 = vpop.f32.mrf.mxu0
    %v1222 = vadd.f32 0.0, %v1221
    %v1223 = vpop.f32.mrf.mxu0
    %v1224 = vadd.f32 0.0, %v1223
    %v1225 = vpop.f32.mrf.mxu0
    %v1226 = vpop.f32.mrf.mxu0
    %1227 = vdwg.mxu0
    %v1228 = vmul.f32 %v1181, %v145
    %v1229 = vmul.f32 %v1183, %v146
    %v1230 = vmul.f32 %v1222, %v147
    %v1231 = vmul.f32 %v1224, %v148
    %v1232 = vadd.f32 %v1108, %v1228
    %v1233 = vadd.f32 %v1109, %v1229
    %v1234 = vadd.f32 %v1110, %v1230
    %v1235 = vadd.f32 %v1111, %v1231
    %vm1236 = vcmask 1043456
    %v1237 = vsel %vm1236, %v1232, 0.0
    %v1238 = vsel %vm1236, %v1233, 0.0
    %v1239 = vadd.f32 %v1237, %v1238
    %v1240 = vsel %vm1236, %v1234, 0.0
    %v1241 = vadd.f32 %v1239, %v1240
    %v1242 = vsel %vm1236, %v1235, 0.0
    %v1243 = vadd.f32 %v1241, %v1242
    %1244 = vadd.xlane.f32.xlu0 %v1243
    %v1245 = vpop.xlane.xlu0 %1244
    %v1246 = vmul.f32 %v1232, %v1232
    %v1247 = vmul.f32 %v1233, %v1233
    %v1248 = vmul.f32 %v1234, %v1234
    %v1249 = vmul.f32 %v1235, %v1235
    %v1250 = vsel %vm1236, %v1246, 0.0
    %v1251 = vsel %vm1236, %v1247, 0.0
    %v1252 = vadd.f32 %v1250, %v1251
    %v1253 = vsel %vm1236, %v1248, 0.0
    %v1254 = vadd.f32 %v1252, %v1253
    %v1255 = vsel %vm1236, %v1249, 0.0
    %v1256 = vadd.f32 %v1254, %v1255
    %1257 = vadd.xlane.f32.xlu0 %v1256
    %v1258 = vpop.xlane.xlu0 %1257
    %v1259 = vmul.f32 %v1245, 0.001953125
    %v1260 = vmul.f32 %v1258, 0.001953125
    %v1261 = vmul.f32 %v1259, %v1259
    %v1262 = vsub.f32 %v1260, %v1261
    %v1263 = vld [vmem:[%s2] sm:$0xf]
    %v1264 = vadd.f32 %v1262, 1e-05
    %v1265 = vrsqrt.pop %v1264
    %v1266 = vmul.f32 %v1263, %v1265
    %v1267 = vld [vmem:[%s3] sm:$0xf]
    %v1268 = vmul.f32 %v1259, %v1266
    %v1269 = vsub.f32 %v1267, %v1268
    %1271 = vset.pattern.permute.xlu0 0
    %1272 = vperm.xlu0 %1271, %v1266
    %v1273 = vpop.permute.xlu0 %1272
    %v1275 = vmul.f32 %v1232, %v1273
    %v1276 = vmul.f32 %v1233, %v1273
    %v1277 = vmul.f32 %v1234, %v1273
    %v1278 = vmul.f32 %v1235, %v1273
    %1280 = vset.pattern.permute.xlu0 0
    %1281 = vperm.xlu0 %1280, %v1269
    %v1282 = vpop.permute.xlu0 %1281
    %v1284 = vadd.f32 %v1275, %v1282
    %v1285 = vadd.f32 %v1276, %v1282
    %v1286 = vadd.f32 %v1277, %v1282
    %v1287 = vadd.f32 %v1278, %v1282
    %v1288 = vmax.f32 %v1284, 0.0
    %v1289 = vmax.f32 %v1285, 0.0
    %v1290 = vmax.f32 %v1286, 0.0
    %v1291 = vmax.f32 %v1287, 0.0
    %s1292 = scalar_lea.vmem %s4, 16
    %v1293 = vld [vmem:[%s1292] sm:$0xf]
    %v1294 = vpack.c.bf16 %v1288, %v1288
    %v1295 = vpack.c.bf16 %v1289, %v1289
    %v1296 = vpack.c.bf16 %v1290, %v1290
    %v1297 = vpack.c.bf16 %v1291, %v1291
    %1298 = vrot.lane.b32.xlu0 %v1288, 17
    %v1299 = vpop.permute.xlu0 %1298
    %1300 = vrot.lane.b32.xlu0 %v1289, 17
    %v1301 = vpop.permute.xlu0 %1300
    %1302 = vrot.lane.b32.xlu0 %v1290, 17
    %v1303 = vpop.permute.xlu0 %1302
    %1304 = vrot.lane.b32.xlu0 %v1291, 17
    %v1305 = vpop.permute.xlu0 %1304
    %v1306 = vsel %vm179, %v1303, %v1305
    %v1307 = vsel %vm179, %v1301, %v1303
    %v1308 = vsel %vm179, %v1299, %v1301
    %v1309 = vsel %vm179, %v1305, %v1299
    %v1310 = vpack.c.bf16 %v1309, %v1309
    %v1311 = vpack.c.bf16 %v1308, %v1308
    %v1312 = vpack.c.bf16 %v1307, %v1307
    %v1313 = vpack.c.bf16 %v1306, %v1306
    %v1314 = vld [vmem:[%s4] sm:$0xf]
    %vm1315 = vcmask 31744
    %v1317 = vsel %vm1315, %v1314, 0
    %vm1319 = vcmask 1041408
    %v1321 = vsel %vm1319, %v1310, 0
    %v1324 = vsel %vm1319, %v1311, 0
    %v1327 = vsel %vm1319, %v1312, 0
    %v1330 = vsel %vm1319, %v1313, 0
    %1332 = vmatprep.subr.bf16.mxu0 0
    %1333 = vmatpush1.bf16.msra.mxu0 0
    %1334 = vmatprep.subr.bf16.mxu0 0
    %1335 = vmatpush1.bf16.msra.mxu0 0
    %1336 = vmatprep.subr.bf16.mxu0 0
    %1337 = vmatpush1.bf16.msra.mxu0 0
    %1338 = vmatprep.subr.bf16.mxu0 0
    %1339 = vmatpush1.bf16.msra.mxu0 0
    %1340 = vmatprep.subr.bf16.mxu0 0
    %1341 = vmatpush1.bf16.msra.mxu0 0
    %1342 = vmatprep.subr.bf16.mxu0 0
    %1343 = vmatpush1.bf16.msra.mxu0 0
    %1344 = vmatprep.subr.bf16.mxu0 0
    %1345 = vmatpush1.bf16.msra.mxu0 0
    %1346 = vmatprep.subr.bf16.mxu0 %v1324
    %1347 = vmatpush1.bf16.msra.mxu0 %v1321
    %1348 = vmatprep.subr.bf16.mxu0 0
    %1349 = vmatpush2.bf16.msra.mxu0 0
    %1350 = vmatprep.subr.bf16.mxu0 0
    %1351 = vmatpush2.bf16.msra.mxu0 0
    %1352 = vmatprep.subr.bf16.mxu0 0
    %1353 = vmatpush2.bf16.msra.mxu0 0
    %1354 = vmatprep.subr.bf16.mxu0 0
    %1355 = vmatpush2.bf16.msra.mxu0 0
    %1356 = vmatprep.subr.bf16.mxu0 0
    %1357 = vmatpush2.bf16.msra.mxu0 0
    %1358 = vmatprep.subr.bf16.mxu0 0
    %1359 = vmatpush2.bf16.msra.mxu0 0
    %1360 = vmatprep.subr.bf16.mxu0 0
    %1361 = vmatpush2.bf16.msra.mxu0 0
    %1362 = vmatprep.subr.bf16.mxu0 0
    %1363 = vmatpush2.bf16.msra.mxu0 0
    %1364 = vmatprep.mubr.bf16.mxu0 0
    %1365 = vmatmul.mubr.bf16.gmra.mxu0 %v1317
    %v1366 = vpop.f32.mrf.mxu0
    %v1367 = vadd.f32 0.0, %v1366
    %v1368 = vpop.f32.mrf.mxu0
    %v1369 = vadd.f32 0.0, %v1368
    %v1370 = vpop.f32.mrf.mxu0
    %v1371 = vpop.f32.mrf.mxu0
    %1372 = vdwg.mxu0
    %1373 = vmatprep.subr.bf16.mxu0 0
    %1374 = vmatpush1.bf16.msra.mxu0 0
    %1375 = vmatprep.subr.bf16.mxu0 0
    %1376 = vmatpush1.bf16.msra.mxu0 0
    %1377 = vmatprep.subr.bf16.mxu0 0
    %1378 = vmatpush1.bf16.msra.mxu0 0
    %1379 = vmatprep.subr.bf16.mxu0 0
    %1380 = vmatpush1.bf16.msra.mxu0 0
    %1381 = vmatprep.subr.bf16.mxu0 0
    %1382 = vmatpush1.bf16.msra.mxu0 0
    %1383 = vmatprep.subr.bf16.mxu0 0
    %1384 = vmatpush1.bf16.msra.mxu0 0
    %1385 = vmatprep.subr.bf16.mxu0 0
    %1386 = vmatpush1.bf16.msra.mxu0 0
    %1387 = vmatprep.subr.bf16.mxu0 %v1330
    %1388 = vmatpush1.bf16.msra.mxu0 %v1327
    %1389 = vmatprep.subr.bf16.mxu0 0
    %1390 = vmatpush2.bf16.msra.mxu0 0
    %1391 = vmatprep.subr.bf16.mxu0 0
    %1392 = vmatpush2.bf16.msra.mxu0 0
    %1393 = vmatprep.subr.bf16.mxu0 0
    %1394 = vmatpush2.bf16.msra.mxu0 0
    %1395 = vmatprep.subr.bf16.mxu0 0
    %1396 = vmatpush2.bf16.msra.mxu0 0
    %1397 = vmatprep.subr.bf16.mxu0 0
    %1398 = vmatpush2.bf16.msra.mxu0 0
    %1399 = vmatprep.subr.bf16.mxu0 0
    %1400 = vmatpush2.bf16.msra.mxu0 0
    %1401 = vmatprep.subr.bf16.mxu0 0
    %1402 = vmatpush2.bf16.msra.mxu0 0
    %1403 = vmatprep.subr.bf16.mxu0 0
    %1404 = vmatpush2.bf16.msra.mxu0 0
    %1405 = vmatprep.mubr.bf16.mxu0 0
    %1406 = vmatmul.mubr.bf16.gmra.mxu0 %v1317
    %v1407 = vpop.f32.mrf.mxu0
    %v1408 = vadd.f32 0.0, %v1407
    %v1409 = vpop.f32.mrf.mxu0
    %v1410 = vadd.f32 0.0, %v1409
    %v1411 = vpop.f32.mrf.mxu0
    %v1412 = vpop.f32.mrf.mxu0
    %1413 = vdwg.mxu0
    %v1414 = vmul.f32 %v1367, %v133
    %v1415 = vmul.f32 %v1369, %v134
    %v1416 = vmul.f32 %v1408, %v135
    %v1417 = vmul.f32 %v1410, %v136
    %v1419 = vsel %vm1315, %v1293, 0
    %v1422 = vsel %vm1319, %v1294, 0
    %v1425 = vsel %vm1319, %v1295, 0
    %v1428 = vsel %vm1319, %v1296, 0
    %v1431 = vsel %vm1319, %v1297, 0
    %1433 = vmatprep.subr.bf16.mxu0 0
    %1434 = vmatpush1.bf16.msra.mxu0 0
    %1435 = vmatprep.subr.bf16.mxu0 0
    %1436 = vmatpush1.bf16.msra.mxu0 0
    %1437 = vmatprep.subr.bf16.mxu0 0
    %1438 = vmatpush1.bf16.msra.mxu0 0
    %1439 = vmatprep.subr.bf16.mxu0 0
    %1440 = vmatpush1.bf16.msra.mxu0 0
    %1441 = vmatprep.subr.bf16.mxu0 0
    %1442 = vmatpush1.bf16.msra.mxu0 0
    %1443 = vmatprep.subr.bf16.mxu0 0
    %1444 = vmatpush1.bf16.msra.mxu0 0
    %1445 = vmatprep.subr.bf16.mxu0 0
    %1446 = vmatpush1.bf16.msra.mxu0 0
    %1447 = vmatprep.subr.bf16.mxu0 %v1425
    %1448 = vmatpush1.bf16.msra.mxu0 %v1422
    %1449 = vmatprep.subr.bf16.mxu0 0
    %1450 = vmatpush2.bf16.msra.mxu0 0
    %1451 = vmatprep.subr.bf16.mxu0 0
    %1452 = vmatpush2.bf16.msra.mxu0 0
    %1453 = vmatprep.subr.bf16.mxu0 0
    %1454 = vmatpush2.bf16.msra.mxu0 0
    %1455 = vmatprep.subr.bf16.mxu0 0
    %1456 = vmatpush2.bf16.msra.mxu0 0
    %1457 = vmatprep.subr.bf16.mxu0 0
    %1458 = vmatpush2.bf16.msra.mxu0 0
    %1459 = vmatprep.subr.bf16.mxu0 0
    %1460 = vmatpush2.bf16.msra.mxu0 0
    %1461 = vmatprep.subr.bf16.mxu0 0
    %1462 = vmatpush2.bf16.msra.mxu0 0
    %1463 = vmatprep.subr.bf16.mxu0 0
    %1464 = vmatpush2.bf16.msra.mxu0 0
    %1465 = vmatprep.mubr.bf16.mxu0 0
    %1466 = vmatmul.mubr.bf16.gmra.mxu0 %v1419
    %v1467 = vpop.f32.mrf.mxu0
    %v1468 = vadd.f32 %v1414, %v1467
    %v1469 = vpop.f32.mrf.mxu0
    %v1470 = vadd.f32 %v1415, %v1469
    %v1471 = vpop.f32.mrf.mxu0
    %v1472 = vpop.f32.mrf.mxu0
    %1473 = vdwg.mxu0
    %1474 = vmatprep.subr.bf16.mxu0 0
    %1475 = vmatpush1.bf16.msra.mxu0 0
    %1476 = vmatprep.subr.bf16.mxu0 0
    %1477 = vmatpush1.bf16.msra.mxu0 0
    %1478 = vmatprep.subr.bf16.mxu0 0
    %1479 = vmatpush1.bf16.msra.mxu0 0
    %1480 = vmatprep.subr.bf16.mxu0 0
    %1481 = vmatpush1.bf16.msra.mxu0 0
    %1482 = vmatprep.subr.bf16.mxu0 0
    %1483 = vmatpush1.bf16.msra.mxu0 0
    %1484 = vmatprep.subr.bf16.mxu0 0
    %1485 = vmatpush1.bf16.msra.mxu0 0
    %1486 = vmatprep.subr.bf16.mxu0 0
    %1487 = vmatpush1.bf16.msra.mxu0 0
    %1488 = vmatprep.subr.bf16.mxu0 %v1431
    %1489 = vmatpush1.bf16.msra.mxu0 %v1428
    %1490 = vmatprep.subr.bf16.mxu0 0
    %1491 = vmatpush2.bf16.msra.mxu0 0
    %1492 = vmatprep.subr.bf16.mxu0 0
    %1493 = vmatpush2.bf16.msra.mxu0 0
    %1494 = vmatprep.subr.bf16.mxu0 0
    %1495 = vmatpush2.bf16.msra.mxu0 0
    %1496 = vmatprep.subr.bf16.mxu0 0
    %1497 = vmatpush2.bf16.msra.mxu0 0
    %1498 = vmatprep.subr.bf16.mxu0 0
    %1499 = vmatpush2.bf16.msra.mxu0 0
    %1500 = vmatprep.subr.bf16.mxu0 0
    %1501 = vmatpush2.bf16.msra.mxu0 0
    %1502 = vmatprep.subr.bf16.mxu0 0
    %1503 = vmatpush2.bf16.msra.mxu0 0
    %1504 = vmatprep.subr.bf16.mxu0 0
    %1505 = vmatpush2.bf16.msra.mxu0 0
    %1506 = vmatprep.mubr.bf16.mxu0 0
    %1507 = vmatmul.mubr.bf16.gmra.mxu0 %v1419
    %v1508 = vpop.f32.mrf.mxu0
    %v1509 = vadd.f32 %v1416, %v1508
    %v1510 = vpop.f32.mrf.mxu0
    %v1511 = vadd.f32 %v1417, %v1510
    %v1512 = vpop.f32.mrf.mxu0
    %v1513 = vpop.f32.mrf.mxu0
    %1514 = vdwg.mxu0
    %1515 = vrot.lane.b32.xlu0 %v1288, 16
    %v1516 = vpop.permute.xlu0 %1515
    %1517 = vrot.lane.b32.xlu0 %v1289, 16
    %v1518 = vpop.permute.xlu0 %1517
    %1519 = vrot.lane.b32.xlu0 %v1290, 16
    %v1520 = vpop.permute.xlu0 %1519
    %1521 = vrot.lane.b32.xlu0 %v1291, 16
    %v1522 = vpop.permute.xlu0 %1521
    %v1523 = vsel %vm384, %v1520, %v1522
    %v1524 = vsel %vm384, %v1518, %v1520
    %v1525 = vsel %vm384, %v1516, %v1518
    %v1526 = vsel %vm384, %v1522, %v1516
    %v1527 = vpack.c.bf16 %v1526, %v1526
    %v1528 = vpack.c.bf16 %v1525, %v1525
    %v1529 = vpack.c.bf16 %v1524, %v1524
    %v1530 = vpack.c.bf16 %v1523, %v1523
    %s1531 = scalar_lea.vmem %s4, 4
    %v1532 = vld [vmem:[%s1531] sm:$0xf]
    %v1534 = vsel %vm1315, %v1532, 0
    %v1537 = vsel %vm1319, %v1527, 0
    %v1540 = vsel %vm1319, %v1528, 0
    %v1543 = vsel %vm1319, %v1529, 0
    %v1546 = vsel %vm1319, %v1530, 0
    %1548 = vmatprep.subr.bf16.mxu0 0
    %1549 = vmatpush1.bf16.msra.mxu0 0
    %1550 = vmatprep.subr.bf16.mxu0 0
    %1551 = vmatpush1.bf16.msra.mxu0 0
    %1552 = vmatprep.subr.bf16.mxu0 0
    %1553 = vmatpush1.bf16.msra.mxu0 0
    %1554 = vmatprep.subr.bf16.mxu0 0
    %1555 = vmatpush1.bf16.msra.mxu0 0
    %1556 = vmatprep.subr.bf16.mxu0 0
    %1557 = vmatpush1.bf16.msra.mxu0 0
    %1558 = vmatprep.subr.bf16.mxu0 0
    %1559 = vmatpush1.bf16.msra.mxu0 0
    %1560 = vmatprep.subr.bf16.mxu0 0
    %1561 = vmatpush1.bf16.msra.mxu0 0
    %1562 = vmatprep.subr.bf16.mxu0 %v1540
    %1563 = vmatpush1.bf16.msra.mxu0 %v1537
    %1564 = vmatprep.subr.bf16.mxu0 0
    %1565 = vmatpush2.bf16.msra.mxu0 0
    %1566 = vmatprep.subr.bf16.mxu0 0
    %1567 = vmatpush2.bf16.msra.mxu0 0
    %1568 = vmatprep.subr.bf16.mxu0 0
    %1569 = vmatpush2.bf16.msra.mxu0 0
    %1570 = vmatprep.subr.bf16.mxu0 0
    %1571 = vmatpush2.bf16.msra.mxu0 0
    %1572 = vmatprep.subr.bf16.mxu0 0
    %1573 = vmatpush2.bf16.msra.mxu0 0
    %1574 = vmatprep.subr.bf16.mxu0 0
    %1575 = vmatpush2.bf16.msra.mxu0 0
    %1576 = vmatprep.subr.bf16.mxu0 0
    %1577 = vmatpush2.bf16.msra.mxu0 0
    %1578 = vmatprep.subr.bf16.mxu0 0
    %1579 = vmatpush2.bf16.msra.mxu0 0
    %1580 = vmatprep.mubr.bf16.mxu0 0
    %1581 = vmatmul.mubr.bf16.gmra.mxu0 %v1534
    %v1582 = vpop.f32.mrf.mxu0
    %v1583 = vadd.f32 0.0, %v1582
    %v1584 = vpop.f32.mrf.mxu0
    %v1585 = vadd.f32 0.0, %v1584
    %v1586 = vpop.f32.mrf.mxu0
    %v1587 = vpop.f32.mrf.mxu0
    %1588 = vdwg.mxu0
    %1589 = vmatprep.subr.bf16.mxu0 0
    %1590 = vmatpush1.bf16.msra.mxu0 0
    %1591 = vmatprep.subr.bf16.mxu0 0
    %1592 = vmatpush1.bf16.msra.mxu0 0
    %1593 = vmatprep.subr.bf16.mxu0 0
    %1594 = vmatpush1.bf16.msra.mxu0 0
    %1595 = vmatprep.subr.bf16.mxu0 0
    %1596 = vmatpush1.bf16.msra.mxu0 0
    %1597 = vmatprep.subr.bf16.mxu0 0
    %1598 = vmatpush1.bf16.msra.mxu0 0
    %1599 = vmatprep.subr.bf16.mxu0 0
    %1600 = vmatpush1.bf16.msra.mxu0 0
    %1601 = vmatprep.subr.bf16.mxu0 0
    %1602 = vmatpush1.bf16.msra.mxu0 0
    %1603 = vmatprep.subr.bf16.mxu0 %v1546
    %1604 = vmatpush1.bf16.msra.mxu0 %v1543
    %1605 = vmatprep.subr.bf16.mxu0 0
    %1606 = vmatpush2.bf16.msra.mxu0 0
    %1607 = vmatprep.subr.bf16.mxu0 0
    %1608 = vmatpush2.bf16.msra.mxu0 0
    %1609 = vmatprep.subr.bf16.mxu0 0
    %1610 = vmatpush2.bf16.msra.mxu0 0
    %1611 = vmatprep.subr.bf16.mxu0 0
    %1612 = vmatpush2.bf16.msra.mxu0 0
    %1613 = vmatprep.subr.bf16.mxu0 0
    %1614 = vmatpush2.bf16.msra.mxu0 0
    %1615 = vmatprep.subr.bf16.mxu0 0
    %1616 = vmatpush2.bf16.msra.mxu0 0
    %1617 = vmatprep.subr.bf16.mxu0 0
    %1618 = vmatpush2.bf16.msra.mxu0 0
    %1619 = vmatprep.subr.bf16.mxu0 0
    %1620 = vmatpush2.bf16.msra.mxu0 0
    %1621 = vmatprep.mubr.bf16.mxu0 0
    %1622 = vmatmul.mubr.bf16.gmra.mxu0 %v1534
    %v1623 = vpop.f32.mrf.mxu0
    %v1624 = vadd.f32 0.0, %v1623
    %v1625 = vpop.f32.mrf.mxu0
    %v1626 = vadd.f32 0.0, %v1625
    %v1627 = vpop.f32.mrf.mxu0
    %v1628 = vpop.f32.mrf.mxu0
    %1629 = vdwg.mxu0
    %v1630 = vmul.f32 %v1583, %v105
    %v1631 = vmul.f32 %v1585, %v106
    %v1632 = vmul.f32 %v1624, %v107
    %v1633 = vmul.f32 %v1626, %v108
    %v1634 = vadd.f32 %v1468, %v1630
    %v1635 = vadd.f32 %v1470, %v1631
    %v1636 = vadd.f32 %v1509, %v1632
    %v1637 = vadd.f32 %v1511, %v1633
    %1638 = vrot.lane.b32.xlu0 %v1288, 15
    %v1639 = vpop.permute.xlu0 %1638
    %1640 = vrot.lane.b32.xlu0 %v1289, 15
    %v1641 = vpop.permute.xlu0 %1640
    %1642 = vrot.lane.b32.xlu0 %v1290, 15
    %v1643 = vpop.permute.xlu0 %1642
    %1644 = vrot.lane.b32.xlu0 %v1291, 15
    %v1645 = vpop.permute.xlu0 %1644
    %v1646 = vsel %vm508, %v1643, %v1645
    %v1647 = vsel %vm508, %v1641, %v1643
    %v1648 = vsel %vm508, %v1639, %v1641
    %v1649 = vsel %vm508, %v1645, %v1639
    %v1650 = vpack.c.bf16 %v1649, %v1649
    %v1651 = vpack.c.bf16 %v1648, %v1648
    %v1652 = vpack.c.bf16 %v1647, %v1647
    %v1653 = vpack.c.bf16 %v1646, %v1646
    %s1654 = scalar_lea.vmem %s4, 8
    %v1655 = vld [vmem:[%s1654] sm:$0xf]
    %v1657 = vsel %vm1315, %v1655, 0
    %v1660 = vsel %vm1319, %v1650, 0
    %v1663 = vsel %vm1319, %v1651, 0
    %v1666 = vsel %vm1319, %v1652, 0
    %v1669 = vsel %vm1319, %v1653, 0
    %1671 = vmatprep.subr.bf16.mxu0 0
    %1672 = vmatpush1.bf16.msra.mxu0 0
    %1673 = vmatprep.subr.bf16.mxu0 0
    %1674 = vmatpush1.bf16.msra.mxu0 0
    %1675 = vmatprep.subr.bf16.mxu0 0
    %1676 = vmatpush1.bf16.msra.mxu0 0
    %1677 = vmatprep.subr.bf16.mxu0 0
    %1678 = vmatpush1.bf16.msra.mxu0 0
    %1679 = vmatprep.subr.bf16.mxu0 0
    %1680 = vmatpush1.bf16.msra.mxu0 0
    %1681 = vmatprep.subr.bf16.mxu0 0
    %1682 = vmatpush1.bf16.msra.mxu0 0
    %1683 = vmatprep.subr.bf16.mxu0 0
    %1684 = vmatpush1.bf16.msra.mxu0 0
    %1685 = vmatprep.subr.bf16.mxu0 %v1663
    %1686 = vmatpush1.bf16.msra.mxu0 %v1660
    %1687 = vmatprep.subr.bf16.mxu0 0
    %1688 = vmatpush2.bf16.msra.mxu0 0
    %1689 = vmatprep.subr.bf16.mxu0 0
    %1690 = vmatpush2.bf16.msra.mxu0 0
    %1691 = vmatprep.subr.bf16.mxu0 0
    %1692 = vmatpush2.bf16.msra.mxu0 0
    %1693 = vmatprep.subr.bf16.mxu0 0
    %1694 = vmatpush2.bf16.msra.mxu0 0
    %1695 = vmatprep.subr.bf16.mxu0 0
    %1696 = vmatpush2.bf16.msra.mxu0 0
    %1697 = vmatprep.subr.bf16.mxu0 0
    %1698 = vmatpush2.bf16.msra.mxu0 0
    %1699 = vmatprep.subr.bf16.mxu0 0
    %1700 = vmatpush2.bf16.msra.mxu0 0
    %1701 = vmatprep.subr.bf16.mxu0 0
    %1702 = vmatpush2.bf16.msra.mxu0 0
    %1703 = vmatprep.mubr.bf16.mxu0 0
    %1704 = vmatmul.mubr.bf16.gmra.mxu0 %v1657
    %v1705 = vpop.f32.mrf.mxu0
    %v1706 = vadd.f32 0.0, %v1705
    %v1707 = vpop.f32.mrf.mxu0
    %v1708 = vadd.f32 0.0, %v1707
    %v1709 = vpop.f32.mrf.mxu0
    %v1710 = vpop.f32.mrf.mxu0
    %1711 = vdwg.mxu0
    %1712 = vmatprep.subr.bf16.mxu0 0
    %1713 = vmatpush1.bf16.msra.mxu0 0
    %1714 = vmatprep.subr.bf16.mxu0 0
    %1715 = vmatpush1.bf16.msra.mxu0 0
    %1716 = vmatprep.subr.bf16.mxu0 0
    %1717 = vmatpush1.bf16.msra.mxu0 0
    %1718 = vmatprep.subr.bf16.mxu0 0
    %1719 = vmatpush1.bf16.msra.mxu0 0
    %1720 = vmatprep.subr.bf16.mxu0 0
    %1721 = vmatpush1.bf16.msra.mxu0 0
    %1722 = vmatprep.subr.bf16.mxu0 0
    %1723 = vmatpush1.bf16.msra.mxu0 0
    %1724 = vmatprep.subr.bf16.mxu0 0
    %1725 = vmatpush1.bf16.msra.mxu0 0
    %1726 = vmatprep.subr.bf16.mxu0 %v1669
    %1727 = vmatpush1.bf16.msra.mxu0 %v1666
    %1728 = vmatprep.subr.bf16.mxu0 0
    %1729 = vmatpush2.bf16.msra.mxu0 0
    %1730 = vmatprep.subr.bf16.mxu0 0
    %1731 = vmatpush2.bf16.msra.mxu0 0
    %1732 = vmatprep.subr.bf16.mxu0 0
    %1733 = vmatpush2.bf16.msra.mxu0 0
    %1734 = vmatprep.subr.bf16.mxu0 0
    %1735 = vmatpush2.bf16.msra.mxu0 0
    %1736 = vmatprep.subr.bf16.mxu0 0
    %1737 = vmatpush2.bf16.msra.mxu0 0
    %1738 = vmatprep.subr.bf16.mxu0 0
    %1739 = vmatpush2.bf16.msra.mxu0 0
    %1740 = vmatprep.subr.bf16.mxu0 0
    %1741 = vmatpush2.bf16.msra.mxu0 0
    %1742 = vmatprep.subr.bf16.mxu0 0
    %1743 = vmatpush2.bf16.msra.mxu0 0
    %1744 = vmatprep.mubr.bf16.mxu0 0
    %1745 = vmatmul.mubr.bf16.gmra.mxu0 %v1657
    %v1746 = vpop.f32.mrf.mxu0
    %v1747 = vadd.f32 0.0, %v1746
    %v1748 = vpop.f32.mrf.mxu0
    %v1749 = vadd.f32 0.0, %v1748
    %v1750 = vpop.f32.mrf.mxu0
    %v1751 = vpop.f32.mrf.mxu0
    %1752 = vdwg.mxu0
    %v1753 = vmul.f32 %v1706, %v137
    %v1754 = vmul.f32 %v1708, %v138
    %v1755 = vmul.f32 %v1747, %v139
    %v1756 = vmul.f32 %v1749, %v140
    %v1757 = vadd.f32 %v1634, %v1753
    %v1758 = vadd.f32 %v1635, %v1754
    %v1759 = vadd.f32 %v1636, %v1755
    %v1760 = vadd.f32 %v1637, %v1756
    %1761 = vrot.lane.b32.xlu0 %v1288, 1
    %v1762 = vpop.permute.xlu0 %1761
    %1763 = vrot.lane.b32.xlu0 %v1289, 1
    %v1764 = vpop.permute.xlu0 %1763
    %1765 = vrot.lane.b32.xlu0 %v1290, 1
    %v1766 = vpop.permute.xlu0 %1765
    %1767 = vrot.lane.b32.xlu0 %v1291, 1
    %v1768 = vpop.permute.xlu0 %1767
    %v1769 = vsel %vm632, %v1766, %v1768
    %v1770 = vsel %vm632, %v1764, %v1766
    %v1771 = vsel %vm632, %v1762, %v1764
    %v1772 = vsel %vm632, %v1768, %v1762
    %v1773 = vpack.c.bf16 %v1772, %v1772
    %v1774 = vpack.c.bf16 %v1771, %v1771
    %v1775 = vpack.c.bf16 %v1770, %v1770
    %v1776 = vpack.c.bf16 %v1769, %v1769
    %s1777 = scalar_lea.vmem %s4, 12
    %v1778 = vld [vmem:[%s1777] sm:$0xf]
    %v1780 = vsel %vm1315, %v1778, 0
    %v1783 = vsel %vm1319, %v1773, 0
    %v1786 = vsel %vm1319, %v1774, 0
    %v1789 = vsel %vm1319, %v1775, 0
    %v1792 = vsel %vm1319, %v1776, 0
    %1794 = vmatprep.subr.bf16.mxu0 0
    %1795 = vmatpush1.bf16.msra.mxu0 0
    %1796 = vmatprep.subr.bf16.mxu0 0
    %1797 = vmatpush1.bf16.msra.mxu0 0
    %1798 = vmatprep.subr.bf16.mxu0 0
    %1799 = vmatpush1.bf16.msra.mxu0 0
    %1800 = vmatprep.subr.bf16.mxu0 0
    %1801 = vmatpush1.bf16.msra.mxu0 0
    %1802 = vmatprep.subr.bf16.mxu0 0
    %1803 = vmatpush1.bf16.msra.mxu0 0
    %1804 = vmatprep.subr.bf16.mxu0 0
    %1805 = vmatpush1.bf16.msra.mxu0 0
    %1806 = vmatprep.subr.bf16.mxu0 0
    %1807 = vmatpush1.bf16.msra.mxu0 0
    %1808 = vmatprep.subr.bf16.mxu0 %v1786
    %1809 = vmatpush1.bf16.msra.mxu0 %v1783
    %1810 = vmatprep.subr.bf16.mxu0 0
    %1811 = vmatpush2.bf16.msra.mxu0 0
    %1812 = vmatprep.subr.bf16.mxu0 0
    %1813 = vmatpush2.bf16.msra.mxu0 0
    %1814 = vmatprep.subr.bf16.mxu0 0
    %1815 = vmatpush2.bf16.msra.mxu0 0
    %1816 = vmatprep.subr.bf16.mxu0 0
    %1817 = vmatpush2.bf16.msra.mxu0 0
    %1818 = vmatprep.subr.bf16.mxu0 0
    %1819 = vmatpush2.bf16.msra.mxu0 0
    %1820 = vmatprep.subr.bf16.mxu0 0
    %1821 = vmatpush2.bf16.msra.mxu0 0
    %1822 = vmatprep.subr.bf16.mxu0 0
    %1823 = vmatpush2.bf16.msra.mxu0 0
    %1824 = vmatprep.subr.bf16.mxu0 0
    %1825 = vmatpush2.bf16.msra.mxu0 0
    %1826 = vmatprep.mubr.bf16.mxu0 0
    %1827 = vmatmul.mubr.bf16.gmra.mxu0 %v1780
    %v1828 = vpop.f32.mrf.mxu0
    %v1829 = vadd.f32 0.0, %v1828
    %v1830 = vpop.f32.mrf.mxu0
    %v1831 = vadd.f32 0.0, %v1830
    %v1832 = vpop.f32.mrf.mxu0
    %v1833 = vpop.f32.mrf.mxu0
    %1834 = vdwg.mxu0
    %1835 = vmatprep.subr.bf16.mxu0 0
    %1836 = vmatpush1.bf16.msra.mxu0 0
    %1837 = vmatprep.subr.bf16.mxu0 0
    %1838 = vmatpush1.bf16.msra.mxu0 0
    %1839 = vmatprep.subr.bf16.mxu0 0
    %1840 = vmatpush1.bf16.msra.mxu0 0
    %1841 = vmatprep.subr.bf16.mxu0 0
    %1842 = vmatpush1.bf16.msra.mxu0 0
    %1843 = vmatprep.subr.bf16.mxu0 0
    %1844 = vmatpush1.bf16.msra.mxu0 0
    %1845 = vmatprep.subr.bf16.mxu0 0
    %1846 = vmatpush1.bf16.msra.mxu0 0
    %1847 = vmatprep.subr.bf16.mxu0 0
    %1848 = vmatpush1.bf16.msra.mxu0 0
    %1849 = vmatprep.subr.bf16.mxu0 %v1792
    %1850 = vmatpush1.bf16.msra.mxu0 %v1789
    %1851 = vmatprep.subr.bf16.mxu0 0
    %1852 = vmatpush2.bf16.msra.mxu0 0
    %1853 = vmatprep.subr.bf16.mxu0 0
    %1854 = vmatpush2.bf16.msra.mxu0 0
    %1855 = vmatprep.subr.bf16.mxu0 0
    %1856 = vmatpush2.bf16.msra.mxu0 0
    %1857 = vmatprep.subr.bf16.mxu0 0
    %1858 = vmatpush2.bf16.msra.mxu0 0
    %1859 = vmatprep.subr.bf16.mxu0 0
    %1860 = vmatpush2.bf16.msra.mxu0 0
    %1861 = vmatprep.subr.bf16.mxu0 0
    %1862 = vmatpush2.bf16.msra.mxu0 0
    %1863 = vmatprep.subr.bf16.mxu0 0
    %1864 = vmatpush2.bf16.msra.mxu0 0
    %1865 = vmatprep.subr.bf16.mxu0 0
    %1866 = vmatpush2.bf16.msra.mxu0 0
    %1867 = vmatprep.mubr.bf16.mxu0 0
    %1868 = vmatmul.mubr.bf16.gmra.mxu0 %v1780
    %v1869 = vpop.f32.mrf.mxu0
    %v1870 = vadd.f32 0.0, %v1869
    %v1871 = vpop.f32.mrf.mxu0
    %v1872 = vadd.f32 0.0, %v1871
    %v1873 = vpop.f32.mrf.mxu0
    %v1874 = vpop.f32.mrf.mxu0
    %1875 = vdwg.mxu0
    %v1876 = vmul.f32 %v1829, %v121
    %v1877 = vmul.f32 %v1831, %v122
    %v1878 = vmul.f32 %v1870, %v123
    %v1879 = vmul.f32 %v1872, %v124
    %v1880 = vadd.f32 %v1757, %v1876
    %v1881 = vadd.f32 %v1758, %v1877
    %v1882 = vadd.f32 %v1759, %v1878
    %v1883 = vadd.f32 %v1760, %v1879
    %1884 = vrot.lane.b32.xlu0 %v1288, 127
    %v1885 = vpop.permute.xlu0 %1884
    %1886 = vrot.lane.b32.xlu0 %v1289, 127
    %v1887 = vpop.permute.xlu0 %1886
    %1888 = vrot.lane.b32.xlu0 %v1290, 127
    %v1889 = vpop.permute.xlu0 %1888
    %1890 = vrot.lane.b32.xlu0 %v1291, 127
    %v1891 = vpop.permute.xlu0 %1890
    %v1892 = vsel %vm756, %v1889, %v1891
    %v1893 = vsel %vm756, %v1887, %v1889
    %v1894 = vsel %vm756, %v1885, %v1887
    %v1895 = vsel %vm756, %v1891, %v1885
    %v1896 = vpack.c.bf16 %v1894, %v1894
    %v1897 = vpack.c.bf16 %v1893, %v1893
    %v1898 = vpack.c.bf16 %v1892, %v1892
    %v1899 = vpack.c.bf16 %v1895, %v1895
    %s1900 = scalar_lea.vmem %s4, 20
    %v1901 = vld [vmem:[%s1900] sm:$0xf]
    %v1903 = vsel %vm1315, %v1901, 0
    %v1906 = vsel %vm1319, %v1896, 0
    %v1909 = vsel %vm1319, %v1897, 0
    %v1912 = vsel %vm1319, %v1898, 0
    %v1915 = vsel %vm1319, %v1899, 0
    %1917 = vmatprep.subr.bf16.mxu0 0
    %1918 = vmatpush1.bf16.msra.mxu0 0
    %1919 = vmatprep.subr.bf16.mxu0 0
    %1920 = vmatpush1.bf16.msra.mxu0 0
    %1921 = vmatprep.subr.bf16.mxu0 0
    %1922 = vmatpush1.bf16.msra.mxu0 0
    %1923 = vmatprep.subr.bf16.mxu0 0
    %1924 = vmatpush1.bf16.msra.mxu0 0
    %1925 = vmatprep.subr.bf16.mxu0 0
    %1926 = vmatpush1.bf16.msra.mxu0 0
    %1927 = vmatprep.subr.bf16.mxu0 0
    %1928 = vmatpush1.bf16.msra.mxu0 0
    %1929 = vmatprep.subr.bf16.mxu0 0
    %1930 = vmatpush1.bf16.msra.mxu0 0
    %1931 = vmatprep.subr.bf16.mxu0 %v1909
    %1932 = vmatpush1.bf16.msra.mxu0 %v1906
    %1933 = vmatprep.subr.bf16.mxu0 0
    %1934 = vmatpush2.bf16.msra.mxu0 0
    %1935 = vmatprep.subr.bf16.mxu0 0
    %1936 = vmatpush2.bf16.msra.mxu0 0
    %1937 = vmatprep.subr.bf16.mxu0 0
    %1938 = vmatpush2.bf16.msra.mxu0 0
    %1939 = vmatprep.subr.bf16.mxu0 0
    %1940 = vmatpush2.bf16.msra.mxu0 0
    %1941 = vmatprep.subr.bf16.mxu0 0
    %1942 = vmatpush2.bf16.msra.mxu0 0
    %1943 = vmatprep.subr.bf16.mxu0 0
    %1944 = vmatpush2.bf16.msra.mxu0 0
    %1945 = vmatprep.subr.bf16.mxu0 0
    %1946 = vmatpush2.bf16.msra.mxu0 0
    %1947 = vmatprep.subr.bf16.mxu0 0
    %1948 = vmatpush2.bf16.msra.mxu0 0
    %1949 = vmatprep.mubr.bf16.mxu0 0
    %1950 = vmatmul.mubr.bf16.gmra.mxu0 %v1903
    %v1951 = vpop.f32.mrf.mxu0
    %v1952 = vadd.f32 0.0, %v1951
    %v1953 = vpop.f32.mrf.mxu0
    %v1954 = vadd.f32 0.0, %v1953
    %v1955 = vpop.f32.mrf.mxu0
    %v1956 = vpop.f32.mrf.mxu0
    %1957 = vdwg.mxu0
    %1958 = vmatprep.subr.bf16.mxu0 0
    %1959 = vmatpush1.bf16.msra.mxu0 0
    %1960 = vmatprep.subr.bf16.mxu0 0
    %1961 = vmatpush1.bf16.msra.mxu0 0
    %1962 = vmatprep.subr.bf16.mxu0 0
    %1963 = vmatpush1.bf16.msra.mxu0 0
    %1964 = vmatprep.subr.bf16.mxu0 0
    %1965 = vmatpush1.bf16.msra.mxu0 0
    %1966 = vmatprep.subr.bf16.mxu0 0
    %1967 = vmatpush1.bf16.msra.mxu0 0
    %1968 = vmatprep.subr.bf16.mxu0 0
    %1969 = vmatpush1.bf16.msra.mxu0 0
    %1970 = vmatprep.subr.bf16.mxu0 0
    %1971 = vmatpush1.bf16.msra.mxu0 0
    %1972 = vmatprep.subr.bf16.mxu0 %v1915
    %1973 = vmatpush1.bf16.msra.mxu0 %v1912
    %1974 = vmatprep.subr.bf16.mxu0 0
    %1975 = vmatpush2.bf16.msra.mxu0 0
    %1976 = vmatprep.subr.bf16.mxu0 0
    %1977 = vmatpush2.bf16.msra.mxu0 0
    %1978 = vmatprep.subr.bf16.mxu0 0
    %1979 = vmatpush2.bf16.msra.mxu0 0
    %1980 = vmatprep.subr.bf16.mxu0 0
    %1981 = vmatpush2.bf16.msra.mxu0 0
    %1982 = vmatprep.subr.bf16.mxu0 0
    %1983 = vmatpush2.bf16.msra.mxu0 0
    %1984 = vmatprep.subr.bf16.mxu0 0
    %1985 = vmatpush2.bf16.msra.mxu0 0
    %1986 = vmatprep.subr.bf16.mxu0 0
    %1987 = vmatpush2.bf16.msra.mxu0 0
    %1988 = vmatprep.subr.bf16.mxu0 0
    %1989 = vmatpush2.bf16.msra.mxu0 0
    %1990 = vmatprep.mubr.bf16.mxu0 0
    %1991 = vmatmul.mubr.bf16.gmra.mxu0 %v1903
    %v1992 = vpop.f32.mrf.mxu0
    %v1993 = vadd.f32 0.0, %v1992
    %v1994 = vpop.f32.mrf.mxu0
    %v1995 = vadd.f32 0.0, %v1994
    %v1996 = vpop.f32.mrf.mxu0
    %v1997 = vpop.f32.mrf.mxu0
    %1998 = vdwg.mxu0
    %v1999 = vmul.f32 %v1952, %v129
    %v2000 = vmul.f32 %v1954, %v130
    %v2001 = vmul.f32 %v1993, %v131
    %v2002 = vmul.f32 %v1995, %v132
    %v2003 = vadd.f32 %v1880, %v1999
    %v2004 = vadd.f32 %v1881, %v2000
    %v2005 = vadd.f32 %v1882, %v2001
    %v2006 = vadd.f32 %v1883, %v2002
    %2007 = vrot.lane.b32.xlu0 %v1288, 113
    %v2008 = vpop.permute.xlu0 %2007
    %2009 = vrot.lane.b32.xlu0 %v1289, 113
    %v2010 = vpop.permute.xlu0 %2009
    %2011 = vrot.lane.b32.xlu0 %v1290, 113
    %v2012 = vpop.permute.xlu0 %2011
    %2013 = vrot.lane.b32.xlu0 %v1291, 113
    %v2014 = vpop.permute.xlu0 %2013
    %v2015 = vsel %vm880, %v2012, %v2014
    %v2016 = vsel %vm880, %v2010, %v2012
    %v2017 = vsel %vm880, %v2008, %v2010
    %v2018 = vsel %vm880, %v2014, %v2008
    %v2019 = vpack.c.bf16 %v2017, %v2017
    %v2020 = vpack.c.bf16 %v2016, %v2016
    %v2021 = vpack.c.bf16 %v2015, %v2015
    %v2022 = vpack.c.bf16 %v2018, %v2018
    %s2023 = scalar_lea.vmem %s4, 24
    %v2024 = vld [vmem:[%s2023] sm:$0xf]
    %v2026 = vsel %vm1315, %v2024, 0
    %v2029 = vsel %vm1319, %v2019, 0
    %v2032 = vsel %vm1319, %v2020, 0
    %v2035 = vsel %vm1319, %v2021, 0
    %v2038 = vsel %vm1319, %v2022, 0
    %2040 = vmatprep.subr.bf16.mxu0 0
    %2041 = vmatpush1.bf16.msra.mxu0 0
    %2042 = vmatprep.subr.bf16.mxu0 0
    %2043 = vmatpush1.bf16.msra.mxu0 0
    %2044 = vmatprep.subr.bf16.mxu0 0
    %2045 = vmatpush1.bf16.msra.mxu0 0
    %2046 = vmatprep.subr.bf16.mxu0 0
    %2047 = vmatpush1.bf16.msra.mxu0 0
    %2048 = vmatprep.subr.bf16.mxu0 0
    %2049 = vmatpush1.bf16.msra.mxu0 0
    %2050 = vmatprep.subr.bf16.mxu0 0
    %2051 = vmatpush1.bf16.msra.mxu0 0
    %2052 = vmatprep.subr.bf16.mxu0 0
    %2053 = vmatpush1.bf16.msra.mxu0 0
    %2054 = vmatprep.subr.bf16.mxu0 %v2032
    %2055 = vmatpush1.bf16.msra.mxu0 %v2029
    %2056 = vmatprep.subr.bf16.mxu0 0
    %2057 = vmatpush2.bf16.msra.mxu0 0
    %2058 = vmatprep.subr.bf16.mxu0 0
    %2059 = vmatpush2.bf16.msra.mxu0 0
    %2060 = vmatprep.subr.bf16.mxu0 0
    %2061 = vmatpush2.bf16.msra.mxu0 0
    %2062 = vmatprep.subr.bf16.mxu0 0
    %2063 = vmatpush2.bf16.msra.mxu0 0
    %2064 = vmatprep.subr.bf16.mxu0 0
    %2065 = vmatpush2.bf16.msra.mxu0 0
    %2066 = vmatprep.subr.bf16.mxu0 0
    %2067 = vmatpush2.bf16.msra.mxu0 0
    %2068 = vmatprep.subr.bf16.mxu0 0
    %2069 = vmatpush2.bf16.msra.mxu0 0
    %2070 = vmatprep.subr.bf16.mxu0 0
    %2071 = vmatpush2.bf16.msra.mxu0 0
    %2072 = vmatprep.mubr.bf16.mxu0 0
    %2073 = vmatmul.mubr.bf16.gmra.mxu0 %v2026
    %v2074 = vpop.f32.mrf.mxu0
    %v2075 = vadd.f32 0.0, %v2074
    %v2076 = vpop.f32.mrf.mxu0
    %v2077 = vadd.f32 0.0, %v2076
    %v2078 = vpop.f32.mrf.mxu0
    %v2079 = vpop.f32.mrf.mxu0
    %2080 = vdwg.mxu0
    %2081 = vmatprep.subr.bf16.mxu0 0
    %2082 = vmatpush1.bf16.msra.mxu0 0
    %2083 = vmatprep.subr.bf16.mxu0 0
    %2084 = vmatpush1.bf16.msra.mxu0 0
    %2085 = vmatprep.subr.bf16.mxu0 0
    %2086 = vmatpush1.bf16.msra.mxu0 0
    %2087 = vmatprep.subr.bf16.mxu0 0
    %2088 = vmatpush1.bf16.msra.mxu0 0
    %2089 = vmatprep.subr.bf16.mxu0 0
    %2090 = vmatpush1.bf16.msra.mxu0 0
    %2091 = vmatprep.subr.bf16.mxu0 0
    %2092 = vmatpush1.bf16.msra.mxu0 0
    %2093 = vmatprep.subr.bf16.mxu0 0
    %2094 = vmatpush1.bf16.msra.mxu0 0
    %2095 = vmatprep.subr.bf16.mxu0 %v2038
    %2096 = vmatpush1.bf16.msra.mxu0 %v2035
    %2097 = vmatprep.subr.bf16.mxu0 0
    %2098 = vmatpush2.bf16.msra.mxu0 0
    %2099 = vmatprep.subr.bf16.mxu0 0
    %2100 = vmatpush2.bf16.msra.mxu0 0
    %2101 = vmatprep.subr.bf16.mxu0 0
    %2102 = vmatpush2.bf16.msra.mxu0 0
    %2103 = vmatprep.subr.bf16.mxu0 0
    %2104 = vmatpush2.bf16.msra.mxu0 0
    %2105 = vmatprep.subr.bf16.mxu0 0
    %2106 = vmatpush2.bf16.msra.mxu0 0
    %2107 = vmatprep.subr.bf16.mxu0 0
    %2108 = vmatpush2.bf16.msra.mxu0 0
    %2109 = vmatprep.subr.bf16.mxu0 0
    %2110 = vmatpush2.bf16.msra.mxu0 0
    %2111 = vmatprep.subr.bf16.mxu0 0
    %2112 = vmatpush2.bf16.msra.mxu0 0
    %2113 = vmatprep.mubr.bf16.mxu0 0
    %2114 = vmatmul.mubr.bf16.gmra.mxu0 %v2026
    %v2115 = vpop.f32.mrf.mxu0
    %v2116 = vadd.f32 0.0, %v2115
    %v2117 = vpop.f32.mrf.mxu0
    %v2118 = vadd.f32 0.0, %v2117
    %v2119 = vpop.f32.mrf.mxu0
    %v2120 = vpop.f32.mrf.mxu0
    %2121 = vdwg.mxu0
    %v2122 = vmul.f32 %v2075, %v141
    %v2123 = vmul.f32 %v2077, %v142
    %v2124 = vmul.f32 %v2116, %v143
    %v2125 = vmul.f32 %v2118, %v144
    %v2126 = vadd.f32 %v2003, %v2122
    %v2127 = vadd.f32 %v2004, %v2123
    %v2128 = vadd.f32 %v2005, %v2124
    %v2129 = vadd.f32 %v2006, %v2125
    %2130 = vrot.lane.b32.xlu0 %v1288, 112
    %v2131 = vpop.permute.xlu0 %2130
    %2132 = vrot.lane.b32.xlu0 %v1289, 112
    %v2133 = vpop.permute.xlu0 %2132
    %2134 = vrot.lane.b32.xlu0 %v1290, 112
    %v2135 = vpop.permute.xlu0 %2134
    %2136 = vrot.lane.b32.xlu0 %v1291, 112
    %v2137 = vpop.permute.xlu0 %2136
    %v2138 = vsel %vm1004, %v2135, %v2137
    %v2139 = vsel %vm1004, %v2133, %v2135
    %v2140 = vsel %vm1004, %v2131, %v2133
    %v2141 = vsel %vm1004, %v2137, %v2131
    %v2142 = vpack.c.bf16 %v2140, %v2140
    %v2143 = vpack.c.bf16 %v2139, %v2139
    %v2144 = vpack.c.bf16 %v2138, %v2138
    %v2145 = vpack.c.bf16 %v2141, %v2141
    %s2146 = scalar_lea.vmem %s4, 28
    %v2147 = vld [vmem:[%s2146] sm:$0xf]
    %v2149 = vsel %vm1315, %v2147, 0
    %v2152 = vsel %vm1319, %v2142, 0
    %v2155 = vsel %vm1319, %v2143, 0
    %v2158 = vsel %vm1319, %v2144, 0
    %v2161 = vsel %vm1319, %v2145, 0
    %2163 = vmatprep.subr.bf16.mxu0 0
    %2164 = vmatpush1.bf16.msra.mxu0 0
    %2165 = vmatprep.subr.bf16.mxu0 0
    %2166 = vmatpush1.bf16.msra.mxu0 0
    %2167 = vmatprep.subr.bf16.mxu0 0
    %2168 = vmatpush1.bf16.msra.mxu0 0
    %2169 = vmatprep.subr.bf16.mxu0 0
    %2170 = vmatpush1.bf16.msra.mxu0 0
    %2171 = vmatprep.subr.bf16.mxu0 0
    %2172 = vmatpush1.bf16.msra.mxu0 0
    %2173 = vmatprep.subr.bf16.mxu0 0
    %2174 = vmatpush1.bf16.msra.mxu0 0
    %2175 = vmatprep.subr.bf16.mxu0 0
    %2176 = vmatpush1.bf16.msra.mxu0 0
    %2177 = vmatprep.subr.bf16.mxu0 %v2155
    %2178 = vmatpush1.bf16.msra.mxu0 %v2152
    %2179 = vmatprep.subr.bf16.mxu0 0
    %2180 = vmatpush2.bf16.msra.mxu0 0
    %2181 = vmatprep.subr.bf16.mxu0 0
    %2182 = vmatpush2.bf16.msra.mxu0 0
    %2183 = vmatprep.subr.bf16.mxu0 0
    %2184 = vmatpush2.bf16.msra.mxu0 0
    %2185 = vmatprep.subr.bf16.mxu0 0
    %2186 = vmatpush2.bf16.msra.mxu0 0
    %2187 = vmatprep.subr.bf16.mxu0 0
    %2188 = vmatpush2.bf16.msra.mxu0 0
    %2189 = vmatprep.subr.bf16.mxu0 0
    %2190 = vmatpush2.bf16.msra.mxu0 0
    %2191 = vmatprep.subr.bf16.mxu0 0
    %2192 = vmatpush2.bf16.msra.mxu0 0
    %2193 = vmatprep.subr.bf16.mxu0 0
    %2194 = vmatpush2.bf16.msra.mxu0 0
    %2195 = vmatprep.mubr.bf16.mxu0 0
    %2196 = vmatmul.mubr.bf16.gmra.mxu0 %v2149
    %v2197 = vpop.f32.mrf.mxu0
    %v2198 = vadd.f32 0.0, %v2197
    %v2199 = vpop.f32.mrf.mxu0
    %v2200 = vadd.f32 0.0, %v2199
    %v2201 = vpop.f32.mrf.mxu0
    %v2202 = vpop.f32.mrf.mxu0
    %2203 = vdwg.mxu0
    %2204 = vmatprep.subr.bf16.mxu0 0
    %2205 = vmatpush1.bf16.msra.mxu0 0
    %2206 = vmatprep.subr.bf16.mxu0 0
    %2207 = vmatpush1.bf16.msra.mxu0 0
    %2208 = vmatprep.subr.bf16.mxu0 0
    %2209 = vmatpush1.bf16.msra.mxu0 0
    %2210 = vmatprep.subr.bf16.mxu0 0
    %2211 = vmatpush1.bf16.msra.mxu0 0
    %2212 = vmatprep.subr.bf16.mxu0 0
    %2213 = vmatpush1.bf16.msra.mxu0 0
    %2214 = vmatprep.subr.bf16.mxu0 0
    %2215 = vmatpush1.bf16.msra.mxu0 0
    %2216 = vmatprep.subr.bf16.mxu0 0
    %2217 = vmatpush1.bf16.msra.mxu0 0
    %2218 = vmatprep.subr.bf16.mxu0 %v2161
    %2219 = vmatpush1.bf16.msra.mxu0 %v2158
    %2220 = vmatprep.subr.bf16.mxu0 0
    %2221 = vmatpush2.bf16.msra.mxu0 0
    %2222 = vmatprep.subr.bf16.mxu0 0
    %2223 = vmatpush2.bf16.msra.mxu0 0
    %2224 = vmatprep.subr.bf16.mxu0 0
    %2225 = vmatpush2.bf16.msra.mxu0 0
    %2226 = vmatprep.subr.bf16.mxu0 0
    %2227 = vmatpush2.bf16.msra.mxu0 0
    %2228 = vmatprep.subr.bf16.mxu0 0
    %2229 = vmatpush2.bf16.msra.mxu0 0
    %2230 = vmatprep.subr.bf16.mxu0 0
    %2231 = vmatpush2.bf16.msra.mxu0 0
    %2232 = vmatprep.subr.bf16.mxu0 0
    %2233 = vmatpush2.bf16.msra.mxu0 0
    %2234 = vmatprep.subr.bf16.mxu0 0
    %2235 = vmatpush2.bf16.msra.mxu0 0
    %2236 = vmatprep.mubr.bf16.mxu0 0
    %2237 = vmatmul.mubr.bf16.gmra.mxu0 %v2149
    %v2238 = vpop.f32.mrf.mxu0
    %v2239 = vadd.f32 0.0, %v2238
    %v2240 = vpop.f32.mrf.mxu0
    %v2241 = vadd.f32 0.0, %v2240
    %v2242 = vpop.f32.mrf.mxu0
    %v2243 = vpop.f32.mrf.mxu0
    %2244 = vdwg.mxu0
    %v2245 = vmul.f32 %v2198, %v113
    %v2246 = vmul.f32 %v2200, %v114
    %v2247 = vmul.f32 %v2239, %v115
    %v2248 = vmul.f32 %v2241, %v116
    %v2249 = vadd.f32 %v2126, %v2245
    %v2250 = vadd.f32 %v2127, %v2246
    %v2251 = vadd.f32 %v2128, %v2247
    %v2252 = vadd.f32 %v2129, %v2248
    %2253 = vrot.lane.b32.xlu0 %v1288, 111
    %v2254 = vpop.permute.xlu0 %2253
    %2255 = vrot.lane.b32.xlu0 %v1289, 111
    %v2256 = vpop.permute.xlu0 %2255
    %2257 = vrot.lane.b32.xlu0 %v1290, 111
    %v2258 = vpop.permute.xlu0 %2257
    %2259 = vrot.lane.b32.xlu0 %v1291, 111
    %v2260 = vpop.permute.xlu0 %2259
    %v2261 = vsel %vm1128, %v2258, %v2260
    %v2262 = vsel %vm1128, %v2256, %v2258
    %v2263 = vsel %vm1128, %v2254, %v2256
    %v2264 = vsel %vm1128, %v2260, %v2254
    %v2265 = vpack.c.bf16 %v2263, %v2263
    %v2266 = vpack.c.bf16 %v2262, %v2262
    %v2267 = vpack.c.bf16 %v2261, %v2261
    %v2268 = vpack.c.bf16 %v2264, %v2264
    %s2269 = scalar_lea.vmem %s4, 32
    %v2270 = vld [vmem:[%s2269] sm:$0xf]
    %v2272 = vsel %vm1315, %v2270, 0
    %v2275 = vsel %vm1319, %v2265, 0
    %v2278 = vsel %vm1319, %v2266, 0
    %v2281 = vsel %vm1319, %v2267, 0
    %v2284 = vsel %vm1319, %v2268, 0
    %2286 = vmatprep.subr.bf16.mxu0 0
    %2287 = vmatpush1.bf16.msra.mxu0 0
    %2288 = vmatprep.subr.bf16.mxu0 0
    %2289 = vmatpush1.bf16.msra.mxu0 0
    %2290 = vmatprep.subr.bf16.mxu0 0
    %2291 = vmatpush1.bf16.msra.mxu0 0
    %2292 = vmatprep.subr.bf16.mxu0 0
    %2293 = vmatpush1.bf16.msra.mxu0 0
    %2294 = vmatprep.subr.bf16.mxu0 0
    %2295 = vmatpush1.bf16.msra.mxu0 0
    %2296 = vmatprep.subr.bf16.mxu0 0
    %2297 = vmatpush1.bf16.msra.mxu0 0
    %2298 = vmatprep.subr.bf16.mxu0 0
    %2299 = vmatpush1.bf16.msra.mxu0 0
    %2300 = vmatprep.subr.bf16.mxu0 %v2278
    %2301 = vmatpush1.bf16.msra.mxu0 %v2275
    %2302 = vmatprep.subr.bf16.mxu0 0
    %2303 = vmatpush2.bf16.msra.mxu0 0
    %2304 = vmatprep.subr.bf16.mxu0 0
    %2305 = vmatpush2.bf16.msra.mxu0 0
    %2306 = vmatprep.subr.bf16.mxu0 0
    %2307 = vmatpush2.bf16.msra.mxu0 0
    %2308 = vmatprep.subr.bf16.mxu0 0
    %2309 = vmatpush2.bf16.msra.mxu0 0
    %2310 = vmatprep.subr.bf16.mxu0 0
    %2311 = vmatpush2.bf16.msra.mxu0 0
    %2312 = vmatprep.subr.bf16.mxu0 0
    %2313 = vmatpush2.bf16.msra.mxu0 0
    %2314 = vmatprep.subr.bf16.mxu0 0
    %2315 = vmatpush2.bf16.msra.mxu0 0
    %2316 = vmatprep.subr.bf16.mxu0 0
    %2317 = vmatpush2.bf16.msra.mxu0 0
    %2318 = vmatprep.mubr.bf16.mxu0 0
    %2319 = vmatmul.mubr.bf16.gmra.mxu0 %v2272
    %v2320 = vpop.f32.mrf.mxu0
    %v2321 = vadd.f32 0.0, %v2320
    %v2322 = vpop.f32.mrf.mxu0
    %v2323 = vadd.f32 0.0, %v2322
    %v2324 = vpop.f32.mrf.mxu0
    %v2325 = vpop.f32.mrf.mxu0
    %2326 = vdwg.mxu0
    %2327 = vmatprep.subr.bf16.mxu0 0
    %2328 = vmatpush1.bf16.msra.mxu0 0
    %2329 = vmatprep.subr.bf16.mxu0 0
    %2330 = vmatpush1.bf16.msra.mxu0 0
    %2331 = vmatprep.subr.bf16.mxu0 0
    %2332 = vmatpush1.bf16.msra.mxu0 0
    %2333 = vmatprep.subr.bf16.mxu0 0
    %2334 = vmatpush1.bf16.msra.mxu0 0
    %2335 = vmatprep.subr.bf16.mxu0 0
    %2336 = vmatpush1.bf16.msra.mxu0 0
    %2337 = vmatprep.subr.bf16.mxu0 0
    %2338 = vmatpush1.bf16.msra.mxu0 0
    %2339 = vmatprep.subr.bf16.mxu0 0
    %2340 = vmatpush1.bf16.msra.mxu0 0
    %2341 = vmatprep.subr.bf16.mxu0 %v2284
    %2342 = vmatpush1.bf16.msra.mxu0 %v2281
    %2343 = vmatprep.subr.bf16.mxu0 0
    %2344 = vmatpush2.bf16.msra.mxu0 0
    %2345 = vmatprep.subr.bf16.mxu0 0
    %2346 = vmatpush2.bf16.msra.mxu0 0
    %2347 = vmatprep.subr.bf16.mxu0 0
    %2348 = vmatpush2.bf16.msra.mxu0 0
    %2349 = vmatprep.subr.bf16.mxu0 0
    %2350 = vmatpush2.bf16.msra.mxu0 0
    %2351 = vmatprep.subr.bf16.mxu0 0
    %2352 = vmatpush2.bf16.msra.mxu0 0
    %2353 = vmatprep.subr.bf16.mxu0 0
    %2354 = vmatpush2.bf16.msra.mxu0 0
    %2355 = vmatprep.subr.bf16.mxu0 0
    %2356 = vmatpush2.bf16.msra.mxu0 0
    %2357 = vmatprep.subr.bf16.mxu0 0
    %2358 = vmatpush2.bf16.msra.mxu0 0
    %2359 = vmatprep.mubr.bf16.mxu0 0
    %2360 = vmatmul.mubr.bf16.gmra.mxu0 %v2272
    %v2361 = vpop.f32.mrf.mxu0
    %v2362 = vadd.f32 0.0, %v2361
    %v2363 = vpop.f32.mrf.mxu0
    %v2364 = vadd.f32 0.0, %v2363
    %v2365 = vpop.f32.mrf.mxu0
    %v2366 = vpop.f32.mrf.mxu0
    %2367 = vdwg.mxu0
    %v2368 = vmul.f32 %v2321, %v145
    %v2369 = vmul.f32 %v2323, %v146
    %v2370 = vmul.f32 %v2362, %v147
    %v2371 = vmul.f32 %v2364, %v148
    %v2372 = vadd.f32 %v2249, %v2368
    %v2373 = vadd.f32 %v2250, %v2369
    %v2374 = vadd.f32 %v2251, %v2370
    %v2375 = vadd.f32 %v2252, %v2371
    %v2376 = vadd.f32 %v2372, %v2373
    %v2377 = vadd.f32 %v2376, %v2374
    %v2378 = vadd.f32 %v2377, %v2375
    %2379 = vadd.xlane.f32.xlu0 %v2378
    %v2380 = vpop.xlane.xlu0 %2379
    %v2381 = vmul.f32 %v2372, %v2372
    %v2382 = vmul.f32 %v2373, %v2373
    %v2383 = vmul.f32 %v2374, %v2374
    %v2384 = vmul.f32 %v2375, %v2375
    %v2385 = vadd.f32 %v2381, %v2382
    %v2386 = vadd.f32 %v2385, %v2383
    %v2387 = vadd.f32 %v2386, %v2384
    %2388 = vadd.xlane.f32.xlu0 %v2387
    %v2389 = vpop.xlane.xlu0 %2388
    %v2390 = vmul.f32 %v2380, 0.001953125
    %v2391 = vmul.f32 %v2389, 0.001953125
    %v2392 = vmul.f32 %v2390, %v2390
    %v2393 = vsub.f32 %v2391, %v2392
    %v2394 = vld [vmem:[%s5] sm:$0xff]
    %v2395 = vadd.f32 %v2393, 1e-05
    %v2396 = vrsqrt.pop %v2395
    %v2397 = vmul.f32 %v2394, %v2396
    %v2398 = vld [vmem:[%s6] sm:$0xff]
    %v2399 = vmul.f32 %v2390, %v2397
    %v2400 = vsub.f32 %v2398, %v2399
    %2402 = vset.pattern.permute.xlu0 0
    %2403 = vperm.xlu0 %2402, %v2397
    %v2404 = vpop.permute.xlu0 %2403
    %v2406 = vmul.f32 %v2372, %v2404
    %v2407 = vmul.f32 %v2373, %v2404
    %v2408 = vmul.f32 %v2374, %v2404
    %v2409 = vmul.f32 %v2375, %v2404
    %2411 = vset.pattern.permute.xlu0 0
    %2412 = vperm.xlu0 %2411, %v2400
    %v2413 = vpop.permute.xlu0 %2412
    %v2415 = vadd.f32 %v2406, %v2413
    %v2416 = vadd.f32 %v2407, %v2413
    %v2417 = vadd.f32 %v2408, %v2413
    %v2418 = vadd.f32 %v2409, %v2413
    %v2419 = vmax.f32 %v2415, 0.0
    %v2420 = vmax.f32 %v2416, 0.0
    %v2421 = vmax.f32 %v2417, 0.0
    %v2422 = vmax.f32 %v2418, 0.0
    %2423 = vrot.lane.b32.xlu0 %v2419, 16
    %v2424 = vpop.permute.xlu0 %2423
    %2425 = vrot.lane.b32.xlu0 %v2420, 16
    %v2426 = vpop.permute.xlu0 %2425
    %2427 = vrot.lane.b32.xlu0 %v2421, 16
    %v2428 = vpop.permute.xlu0 %2427
    %2429 = vrot.lane.b32.xlu0 %v2422, 16
    %v2430 = vpop.permute.xlu0 %2429
    %v2431 = vsel %vm384, %v2428, %v2430
    %v2432 = vsel %vm384, %v2426, %v2428
    %v2433 = vsel %vm384, %v2424, %v2426
    %v2434 = vsel %vm384, %v2430, %v2424
    %vm2435 = vcmp.eq.s32.totalorder %v101, 1
    %vm2436 = vcmp.eq.s32.totalorder %v102, 1
    %vm2437 = vcmp.eq.s32.totalorder %v103, 1
    %vm2438 = vcmp.eq.s32.totalorder %v104, 1
    %v2439 = vsel %vm2435, %v2434, %v2419
    %v2440 = vsel %vm2436, %v2433, %v2420
    %v2441 = vsel %vm2437, %v2432, %v2421
    %v2442 = vsel %vm2438, %v2431, %v2422
    %2443 = vrot.lane.b32.xlu0 %v2419, 112
    %v2444 = vpop.permute.xlu0 %2443
    %2445 = vrot.lane.b32.xlu0 %v2420, 112
    %v2446 = vpop.permute.xlu0 %2445
    %2447 = vrot.lane.b32.xlu0 %v2421, 112
    %v2448 = vpop.permute.xlu0 %2447
    %2449 = vrot.lane.b32.xlu0 %v2422, 112
    %v2450 = vpop.permute.xlu0 %2449
    %v2451 = vsel %vm1004, %v2448, %v2450
    %v2452 = vsel %vm1004, %v2446, %v2448
    %v2453 = vsel %vm1004, %v2444, %v2446
    %v2454 = vsel %vm1004, %v2450, %v2444
    %vm2455 = vcmp.eq.s32.totalorder %v109, 1
    %vm2456 = vcmp.eq.s32.totalorder %v110, 1
    %vm2457 = vcmp.eq.s32.totalorder %v111, 1
    %vm2458 = vcmp.eq.s32.totalorder %v112, 1
    %v2459 = vsel %vm2455, %v2453, %v2419
    %v2460 = vsel %vm2456, %v2452, %v2420
    %v2461 = vsel %vm2457, %v2451, %v2421
    %v2462 = vsel %vm2458, %v2454, %v2422
    %v2463 = vmul.f32 %v2419, 0.75
    %v2464 = vmul.f32 %v2420, 0.75
    %v2465 = vmul.f32 %v2421, 0.75
    %v2466 = vmul.f32 %v2422, 0.75
    %v2467 = vmul.f32 %v2439, 0.25
    %v2468 = vmul.f32 %v2440, 0.25
    %v2469 = vmul.f32 %v2441, 0.25
    %v2470 = vmul.f32 %v2442, 0.25
    %v2471 = vadd.f32 %v2463, %v2467
    %v2472 = vadd.f32 %v2464, %v2468
    %v2473 = vadd.f32 %v2465, %v2469
    %v2474 = vadd.f32 %v2466, %v2470
    %v2475 = vmul.f32 %v2459, 0.25
    %v2476 = vmul.f32 %v2460, 0.25
    %v2477 = vmul.f32 %v2461, 0.25
    %v2478 = vmul.f32 %v2462, 0.25
    %v2479 = vadd.f32 %v2463, %v2475
    %v2480 = vadd.f32 %v2464, %v2476
    %v2481 = vadd.f32 %v2465, %v2477
    %v2482 = vadd.f32 %v2466, %v2478
    %2483 = vrot.lane.b32.xlu0 %v2471, 1
    %v2484 = vpop.permute.xlu0 %2483
    %2485 = vrot.lane.b32.xlu0 %v2472, 1
    %v2486 = vpop.permute.xlu0 %2485
    %2487 = vrot.lane.b32.xlu0 %v2473, 1
    %v2488 = vpop.permute.xlu0 %2487
    %2489 = vrot.lane.b32.xlu0 %v2474, 1
    %v2490 = vpop.permute.xlu0 %2489
    %v2491 = vsel %vm632, %v2488, %v2490
    %v2492 = vsel %vm632, %v2486, %v2488
    %v2493 = vsel %vm632, %v2484, %v2486
    %v2494 = vsel %vm632, %v2490, %v2484
    %vm2495 = vcmp.eq.s32.totalorder %v117, 1
    %vm2496 = vcmp.eq.s32.totalorder %v118, 1
    %vm2497 = vcmp.eq.s32.totalorder %v119, 1
    %vm2498 = vcmp.eq.s32.totalorder %v120, 1
    %v2499 = vsel %vm2495, %v2494, %v2471
    %v2500 = vsel %vm2496, %v2493, %v2472
    %v2501 = vsel %vm2497, %v2492, %v2473
    %v2502 = vsel %vm2498, %v2491, %v2474
    %2503 = vrot.lane.b32.xlu0 %v2471, 127
    %v2504 = vpop.permute.xlu0 %2503
    %2505 = vrot.lane.b32.xlu0 %v2472, 127
    %v2506 = vpop.permute.xlu0 %2505
    %2507 = vrot.lane.b32.xlu0 %v2473, 127
    %v2508 = vpop.permute.xlu0 %2507
    %2509 = vrot.lane.b32.xlu0 %v2474, 127
    %v2510 = vpop.permute.xlu0 %2509
    %v2511 = vsel %vm756, %v2508, %v2510
    %v2512 = vsel %vm756, %v2506, %v2508
    %v2513 = vsel %vm756, %v2504, %v2506
    %v2514 = vsel %vm756, %v2510, %v2504
    %vm2515 = vcmp.eq.s32.totalorder %v125, 1
    %vm2516 = vcmp.eq.s32.totalorder %v126, 1
    %vm2517 = vcmp.eq.s32.totalorder %v127, 1
    %vm2518 = vcmp.eq.s32.totalorder %v128, 1
    %v2519 = vsel %vm2515, %v2513, %v2471
    %v2520 = vsel %vm2516, %v2512, %v2472
    %v2521 = vsel %vm2517, %v2511, %v2473
    %v2522 = vsel %vm2518, %v2514, %v2474
    %v2523 = vmul.f32 %v2471, 0.75
    %v2524 = vmul.f32 %v2472, 0.75
    %v2525 = vmul.f32 %v2473, 0.75
    %v2526 = vmul.f32 %v2474, 0.75
    %v2527 = vmul.f32 %v2499, 0.25
    %v2528 = vmul.f32 %v2500, 0.25
    %v2529 = vmul.f32 %v2501, 0.25
    %v2530 = vmul.f32 %v2502, 0.25
    %v2531 = vadd.f32 %v2523, %v2527
    %v2532 = vadd.f32 %v2524, %v2528
    %v2533 = vadd.f32 %v2525, %v2529
    %v2534 = vadd.f32 %v2526, %v2530
    %2535 = vst [vmem:[#allocation5] sm:$0xff] %v2531
    %2536 = vst [vmem:[#allocation5 + $0x8] sm:$0xff] %v2532
    %2537 = vst [vmem:[#allocation5 + $0x10] sm:$0xff] %v2533
    %2538 = vst [vmem:[#allocation5 + $0x18] sm:$0xff] %v2534
    %v2539 = vmul.f32 %v2519, 0.25
    %v2540 = vmul.f32 %v2520, 0.25
    %v2541 = vmul.f32 %v2521, 0.25
    %v2542 = vmul.f32 %v2522, 0.25
    %v2543 = vadd.f32 %v2523, %v2539
    %v2544 = vadd.f32 %v2524, %v2540
    %v2545 = vadd.f32 %v2525, %v2541
    %v2546 = vadd.f32 %v2526, %v2542
    %2547 = vst [vmem:[#allocation5 + $0x20] sm:$0xff] %v2543
    %2548 = vst [vmem:[#allocation5 + $0x28] sm:$0xff] %v2544
    %2549 = vst [vmem:[#allocation5 + $0x30] sm:$0xff] %v2545
    %2550 = vst [vmem:[#allocation5 + $0x38] sm:$0xff] %v2546
    %2551 = vrot.lane.b32.xlu0 %v2479, 1
    %v2552 = vpop.permute.xlu0 %2551
    %2553 = vrot.lane.b32.xlu0 %v2480, 1
    %v2554 = vpop.permute.xlu0 %2553
    %2555 = vrot.lane.b32.xlu0 %v2481, 1
    %v2556 = vpop.permute.xlu0 %2555
    %2557 = vrot.lane.b32.xlu0 %v2482, 1
    %v2558 = vpop.permute.xlu0 %2557
    %v2559 = vsel %vm632, %v2556, %v2558
    %v2560 = vsel %vm632, %v2554, %v2556
    %v2561 = vsel %vm632, %v2552, %v2554
    %v2562 = vsel %vm632, %v2558, %v2552
    %v2563 = vsel %vm2495, %v2562, %v2479
    %v2564 = vsel %vm2496, %v2561, %v2480
    %v2565 = vsel %vm2497, %v2560, %v2481
    %v2566 = vsel %vm2498, %v2559, %v2482
    %2567 = vrot.lane.b32.xlu0 %v2479, 127
    %v2568 = vpop.permute.xlu0 %2567
    %2569 = vrot.lane.b32.xlu0 %v2480, 127
    %v2570 = vpop.permute.xlu0 %2569
    %2571 = vrot.lane.b32.xlu0 %v2481, 127
    %v2572 = vpop.permute.xlu0 %2571
    %2573 = vrot.lane.b32.xlu0 %v2482, 127
    %v2574 = vpop.permute.xlu0 %2573
    %v2575 = vsel %vm756, %v2572, %v2574
    %v2576 = vsel %vm756, %v2570, %v2572
    %v2577 = vsel %vm756, %v2568, %v2570
    %v2578 = vsel %vm756, %v2574, %v2568
    %v2579 = vsel %vm2515, %v2577, %v2479
    %v2580 = vsel %vm2516, %v2576, %v2480
    %v2581 = vsel %vm2517, %v2575, %v2481
    %v2582 = vsel %vm2518, %v2578, %v2482
    %v2583 = vmul.f32 %v2479, 0.75
    %v2584 = vmul.f32 %v2480, 0.75
    %v2585 = vmul.f32 %v2481, 0.75
    %v2586 = vmul.f32 %v2482, 0.75
    %v2587 = vmul.f32 %v2563, 0.25
    %v2588 = vmul.f32 %v2564, 0.25
    %v2589 = vmul.f32 %v2565, 0.25
    %v2590 = vmul.f32 %v2566, 0.25
    %v2591 = vadd.f32 %v2583, %v2587
    %v2592 = vadd.f32 %v2584, %v2588
    %v2593 = vadd.f32 %v2585, %v2589
    %v2594 = vadd.f32 %v2586, %v2590
    %2595 = vst [vmem:[#allocation5 + $0x40] sm:$0xff] %v2591
    %2596 = vst [vmem:[#allocation5 + $0x48] sm:$0xff] %v2592
    %2597 = vst [vmem:[#allocation5 + $0x50] sm:$0xff] %v2593
    %2598 = vst [vmem:[#allocation5 + $0x58] sm:$0xff] %v2594
    %v2599 = vmul.f32 %v2579, 0.25
    %v2600 = vmul.f32 %v2580, 0.25
    %v2601 = vmul.f32 %v2581, 0.25
    %v2602 = vmul.f32 %v2582, 0.25
    %v2603 = vadd.f32 %v2583, %v2599
    %v2604 = vadd.f32 %v2584, %v2600
    %v2605 = vadd.f32 %v2585, %v2601
    %v2606 = vadd.f32 %v2586, %v2602
    %2607 = vst [vmem:[#allocation5 + $0x60] sm:$0xff] %v2603
    %2608 = vst [vmem:[#allocation5 + $0x68] sm:$0xff] %v2604
    %2609 = vst [vmem:[#allocation5 + $0x70] sm:$0xff] %v2605
    %2610 = vst [vmem:[#allocation5 + $0x78] sm:$0xff] %v2606
    // Predicated region
    $region34: #{tpu_custom_call.1} parent=1 // pred_check
      _
    $region35: #{tpu_custom_call.1} parent=1 // pred_check_branch
      %2612 = sbr.rel (0) target = $region37
    $region36: #{tpu_custom_call.1} parent=1 // pred_region
      %s2614 = ssub.s32 2048, 2048
      %2615 = vsyncadd [#allocation4], %s2614
      %s2616 = sshll.u32 [#allocation5], 4
      %s2617 = int_to_ptr.vmem [resolvable:$true] %s2616
      %2622 = dma.vmem_to_hbm [thread:$0]  %s2617, 2048, %s7, [#allocation4], 512, 512, 32
    $region37: #{tpu_custom_call.1} parent=1 // pred_fallthru
      _
    // Predicated region
    $region38: #{tpu_custom_call.1} parent=1 // pred_check
      _
    $region39: #{tpu_custom_call.1} parent=1 // pred_check_branch
      %2624 = sbr.rel (0) target = $region41
    $region40: #{tpu_custom_call.1} parent=1 // pred_region
      %2625 = dma.done [#allocation4], 2048
    $region41: #{tpu_custom_call.1} parent=1 // pred_fallthru
      _
    %2626 = vsyncpa [#allocation3], 1
    %2627 = vsyncpa [#allocation4], 1

</llo_original>
